<compile_context>
chip_gen: v7x
topology: tpu7x:2x2x1
jax: 0.10.0
libtpu: 0.0.40
codegen_flags: <defaults>
</compile_context>

<pallas_src>
import math

import jax
import jax.numpy as jnp
from jax.experimental import pallas as pl
from jax.experimental.pallas import tpu as pltpu

LANE = 128  # channel dims and N are zero-padded to multiples of the TPU lane width


def _round_up(v, m):
    return (v + m - 1) // m * m


def _pad2d(a, rows, cols):
    return jnp.pad(a, ((0, rows - a.shape[0]), (0, cols - a.shape[1])))


def _fuse_gconv_weights(w, w_loop, b, cin_pad, cout_pad, dtype):
    """Zero-pad and fuse (W, W_loop) into a single MXU operand.

    Returns (fused_w, bias, pre):
      pre=True  -> fused_w = [W ; W_loop]   (2*cin_pad, cout_pad); kernel computes
                   concat([adj @ x, x], -1) @ fused_w  (cheaper adj matmul, cin < cout)
      pre=False -> fused_w = [W | W_loop]   (cin_pad, 2*cout_pad); kernel computes
                   adj @ support + loop, with [support | loop] = x @ fused_w
    """
    wp = _pad2d(w, cin_pad, cout_pad)
    wlp = _pad2d(w_loop, cin_pad, cout_pad)
    pre = cin_pad < cout_pad
    fused = jnp.concatenate([wp, wlp], axis=0 if pre else 1)
    bias = jnp.pad(b, (0, cout_pad - b.shape[0])).reshape(1, cout_pad).astype(jnp.float32)
    return fused.astype(dtype), bias, pre


def _gconv_flops(n, cin, cout, pre):
    adj_cols = cin if pre else cout
    return 2 * n * n * adj_cols + 4 * n * cin * cout


def _make_kernel(block_num, activation, conv1_pre, conv2_pre):
    def kernel(x_ref, adj_ref, w1_ref, b1_ref, wb_ref, bb_ref, w2_ref, b2_ref,
               out_ref, hid_ref):
        adj = adj_ref[...]                                 # (Np, Np), resident for all layers

        def act(v):
            return jnp.maximum(v, 0.0) if activation else v

        def gconv_post(h, w, b):
            # adj @ (h @ W) + h @ W_loop + b, with ONE fused channel matmul.
            cout = w.shape[1] // 2
            hc = h.astype(w.dtype)
            both = jnp.dot(hc, w, preferred_element_type=jnp.float32)     # (Np, 2*cout)
            support = both[:, :cout].astype(adj.dtype)
            loop = both[:, cout:]
            agg = jnp.dot(adj, support, preferred_element_type=jnp.float32)
            return agg + loop + b

        def gconv_pre(h, w, b):
            # (adj @ h) @ W + h @ W_loop + b: adj matmul has only cin columns, and the
            # channel matmul is a single fused (Np, 2*cin) @ (2*cin, cout).
            hc = h.astype(adj.dtype)
            ah = jnp.dot(adj, hc, preferred_element_type=jnp.float32)
            cat = jnp.concatenate([ah.astype(w.dtype), hc.astype(w.dtype)], axis=-1)
            return jnp.dot(cat, w, preferred_element_type=jnp.float32) + b

        x = x_ref[0]                                       # (Np, Cin_p)

        # conv1 (+ optional relu)
        h = act(gconv_pre(x, w1_ref[...], b1_ref[...]) if conv1_pre
                else gconv_post(x, w1_ref[...], b1_ref[...]))

        # GResBlock stack (block_num is static -> unrolled; all layers hidden -> hidden).
        for bi in range(block_num):
            h1 = act(gconv_post(h, wb_ref[2 * bi], bb_ref[2 * bi]))
            h2 = act(gconv_post(h1, wb_ref[2 * bi + 1], bb_ref[2 * bi + 1]))
            h = (h + h2) * 0.5

        hid_ref[0] = h.astype(hid_ref.dtype)

        # conv2 (no activation on the output head)
        out = (gconv_pre(h, w2_ref[...], b2_ref[...]) if conv2_pre
               else gconv_post(h, w2_ref[...], b2_ref[...]))
        out_ref[0] = out.astype(out_ref.dtype)

    return kernel


def build_gbottleneck(params, *, activation=True, compute_dtype=jnp.float32):
    """Returns forward(x) -> (x_out, x_hidden); the whole stack is one pallas_call."""
    adj = params["adj"]
    w1, wl1, b1 = params["conv1"]
    w2, wl2, b2 = params["conv2"]
    blocks = params["blocks"]
    block_num = len(blocks)

    N = adj.shape[0]
    in_dim, hidden = w1.shape
    out_dim = w2.shape[1]

    n_pad = _round_up(N, LANE)
    cin_pad = _round_up(in_dim, LANE)
    h_pad = _round_up(hidden, LANE)
    cout_pad = _round_up(out_dim, LANE)

    adj_p = _pad2d(adj, n_pad, n_pad).astype(compute_dtype)
    w1f, b1p, conv1_pre = _fuse_gconv_weights(w1, wl1, b1, cin_pad, h_pad, compute_dtype)
    w2f, b2p, conv2_pre = _fuse_gconv_weights(w2, wl2, b2, h_pad, cout_pad, compute_dtype)

    wb_list, bb_list = [], []
    for blk in blocks:
        for cname in ("conv1", "conv2"):
            w, wl, b = blk[cname]
            wf, bp, pre = _fuse_gconv_weights(w, wl, b, h_pad, h_pad, compute_dtype)
            assert not pre  # hidden -> hidden is always the "post" order
            wb_list.append(wf)
            bb_list.append(bp)
    if block_num > 0:
        wbf = jnp.stack(wb_list, axis=0)                   # (2*blocks, h_pad, 2*h_pad)
        bbf = jnp.stack(bb_list, axis=0)                   # (2*blocks, 1, h_pad)
    else:                                                  # dummy (never read)
        wbf = jnp.zeros((1, h_pad, 2 * h_pad), compute_dtype)
        bbf = jnp.zeros((1, 1, h_pad), jnp.float32)

    kernel = _make_kernel(block_num, activation, conv1_pre, conv2_pre)

    flops_per_b = (_gconv_flops(n_pad, cin_pad, h_pad, conv1_pre)
                   + 2 * block_num * _gconv_flops(n_pad, h_pad, h_pad, False)
                   + _gconv_flops(n_pad, h_pad, cout_pad, conv2_pre))

    itemsize = jnp.dtype(compute_dtype).itemsize
    resident = (n_pad * cin_pad * itemsize                       # x slab
                + n_pad * n_pad * itemsize                       # adj
                + (w1f.size + wbf.size + w2f.size) * itemsize    # fused weights
                + (b1p.size + bbf.size + b2p.size) * 4           # biases (f32)
                + (n_pad * cout_pad + n_pad * h_pad) * 4)        # output slabs (f32)
    vmem_limit = int(min(max(4 * resident, 32 * 1024 * 1024), 64 * 1024 * 1024))

    def forward(x):
        B, n, ci = x.shape
        assert n == N and ci == in_dim, "input shape must match the adjacency / conv1"
        x_p = jnp.pad(x, ((0, 0), (0, n_pad - n), (0, cin_pad - ci))).astype(compute_dtype)

        const2 = lambda i: (0, 0)
        const3 = lambda i: (0, 0, 0)
        in_specs = [
            pl.BlockSpec((1, n_pad, cin_pad), lambda i: (i, 0, 0)),   # x: one batch slab
            pl.BlockSpec((n_pad, n_pad), const2),                     # adj (shared, resident)
            pl.BlockSpec(w1f.shape, const2),
            pl.BlockSpec(b1p.shape, const2),
            pl.BlockSpec(wbf.shape, const3),
            pl.BlockSpec(bbf.shape, const3),
            pl.BlockSpec(w2f.shape, const2),
            pl.BlockSpec(b2p.shape, const2),
        ]
        out_specs = (
            pl.BlockSpec((1, n_pad, cout_pad), lambda i: (i, 0, 0)),
            pl.BlockSpec((1, n_pad, h_pad), lambda i: (i, 0, 0)),
        )
        out_shape = (
            jax.ShapeDtypeStruct((B, n_pad, cout_pad), jnp.float32),
            jax.ShapeDtypeStruct((B, n_pad, h_pad), jnp.float32),
        )

        operands = (x_p, adj_p, w1f, b1p, wbf, bbf, w2f, b2p)
        bytes_accessed = sum(int(a.size) * a.dtype.itemsize for a in operands)
        bytes_accessed += sum(math.prod(s.shape) * 4 for s in out_shape)

        out_p, hid_p = pl.pallas_call(
            kernel,
            out_shape=out_shape,
            grid_spec=pltpu.PrefetchScalarGridSpec(
                num_scalar_prefetch=0,
                grid=(B,),
                in_specs=in_specs,
                out_specs=out_specs,
            ),
            compiler_params=pltpu.CompilerParams(
                dimension_semantics=("parallel",),
                vmem_limit_bytes=vmem_limit,
            ),
            cost_estimate=pl.CostEstimate(
                flops=int(B * flops_per_b),
                transcendentals=0,
                bytes_accessed=int(bytes_accessed),
            ),
        )(*operands)

        x_out = out_p[:, :N, :out_dim].astype(x.dtype)
        x_hidden = hid_p[:, :N, :hidden].astype(x.dtype)
        return x_out, x_hidden

    return forward


# ----------------------- pure-JAX reference (for checking) -----------------------
def _gconv_ref(x, adj, w, wl, b):
    support = jnp.einsum("bnc,co->bno", x, w, precision="highest")
    loop = jnp.einsum("bnc,co->bno", x, wl, precision="highest")
    agg = jnp.einsum("nm,bmo->bno", adj, support, precision="highest")
    return agg + loop + b


def _gbottleneck_ref(x, params, *, activation=True):
    act = (lambda v: jnp.maximum(v, 0.0)) if activation else (lambda v: v)
    adj = params["adj"]
    h = act(_gconv_ref(x, adj, *params["conv1"]))
    for blk in params["blocks"]:
        h1 = act(_gconv_ref(h, adj, *blk["conv1"]))
        h2 = act(_gconv_ref(h1, adj, *blk["conv2"]))
        h = (h + h2) * 0.5
    x_out = _gconv_ref(h, adj, *params["conv2"])
    return x_out, h


# ----------------------------- parameter construction -----------------------------
def init_params(key, *, block_num, in_dim, hidden_dim, out_dim, num_points):
    def gconv_params(key, cin, cout):
        k1, k2 = jax.random.split(key)
        w = jax.random.normal(k1, (cin, cout), jnp.float32) * 0.1
        wl = jax.random.normal(k2, (cin, cout), jnp.float32) * 0.1
        b = jnp.zeros((cout,), jnp.float32)
        return (w, wl, b)

    keys = jax.random.split(key, block_num * 2 + 3)

    # deterministic normalized ring adjacency with self-loops
    idx = jnp.arange(num_points)
    adj = (
        jnp.eye(num_points, dtype=jnp.float32)
        + jnp.eye(num_points, dtype=jnp.float32)[(idx + 1) % num_points]
        + jnp.eye(num_points, dtype=jnp.float32)[(idx - 1) % num_points]
    )
    adj = adj / jnp.sum(adj, axis=1, keepdims=True)

    blocks = []
    for i in range(block_num):
        blocks.append({
            "conv1": gconv_params(keys[2 * i], hidden_dim, hidden_dim),
            "conv2": gconv_params(keys[2 * i + 1], hidden_dim, hidden_dim),
        })
    return {
        "adj": adj,
        "conv1": gconv_params(keys[-2], in_dim, hidden_dim),
        "conv2": gconv_params(keys[-1], hidden_dim, out_dim),
        "blocks": blocks,
    }


if __name__ == "__main__":
    key = jax.random.PRNGKey(0)
    kx, kp = jax.random.split(key)

    B, N = 2, 16                           # batch, num_points (padded to 128 internally)
    # hidden_dim pads to 256 while in_dim/out_dim pad to 128, so conv1 exercises the
    # "(adj @ x) @ W" pre-ordering and conv2 the "adj @ (x @ W)" post-ordering.
    in_dim, hidden_dim, out_dim = 6, 160, 3
    block_num = 2
    activation = True

    x = jax.random.normal(kx, (B, N, in_dim), jnp.float32)
    params = init_params(kp, block_num=block_num, in_dim=in_dim,
                         hidden_dim=hidden_dim, out_dim=out_dim, num_points=N)

    ref_out, ref_hidden = _gbottleneck_ref(x, params, activation=activation)

    # f32 MXU operands: tight check against the pure-JAX reference.
    fwd_f32 = jax.jit(build_gbottleneck(params, activation=activation,
                                        compute_dtype=jnp.float32))
    x_out, x_hidden = fwd_f32(x)
    jax.block_until_ready((x_out, x_hidden))
    assert x_out.shape == (B, N, out_dim)
    assert x_hidden.shape == (B, N, hidden_dim)
    assert jnp.allclose(x_out, ref_out, atol=1e-3, rtol=1e-3)
    assert jnp.allclose(x_hidden, ref_hidden, atol=1e-3, rtol=1e-3)

    # bf16 MXU operands (native MXU dtype; halves adj/weight HBM+VMEM bytes): loose check.
    fwd_bf16 = jax.jit(build_gbottleneck(params, activation=activation,
                                         compute_dtype=jnp.bfloat16))
    b_out, b_hidden = fwd_bf16(x)
    jax.block_until_ready((b_out, b_hidden))
    assert jnp.allclose(b_out, ref_out, atol=1e-1, rtol=1e-1)
    assert jnp.allclose(b_hidden, ref_hidden, atol=1e-1, rtol=1e-1)

    print("KERNEL_OK")
</pallas_src>

<mosaic_0001>
module attributes {stable_mosaic.version = 11 : i64} {
  func.func @kernel(%arg0: i32, %arg1: memref<1x128x128xf32, #tpu.memory_space<vmem>>, %arg2: memref<128x128xf32, #tpu.memory_space<vmem>>, %arg3: memref<256x256xf32, #tpu.memory_space<vmem>>, %arg4: memref<1x256xf32, #tpu.memory_space<vmem>>, %arg5: memref<4x256x512xf32, #tpu.memory_space<vmem>>, %arg6: memref<4x1x256xf32, #tpu.memory_space<vmem>>, %arg7: memref<256x256xf32, #tpu.memory_space<vmem>>, %arg8: memref<1x128xf32, #tpu.memory_space<vmem>>, %arg9: memref<1x128x128xf32, #tpu.memory_space<vmem>>, %arg10: memref<1x128x256xf32, #tpu.memory_space<vmem>>) attributes {dimension_semantics = [#tpu.dimension_semantics<parallel>], iteration_bounds = array<i64: 2>, scalar_prefetch = 0 : i64, scratch_operands = 0 : i64, tpu.core_type = #tpu.core_type<tc>, window_params = [{transform_indices = @transform_0, window_bounds = array<i64: 1, 128, 128>}, {pipeline_mode = #tpu.pipeline_mode<synchronous>, transform_indices = @transform_1, window_bounds = array<i64: 128, 128>}, {pipeline_mode = #tpu.pipeline_mode<synchronous>, transform_indices = @transform_2, window_bounds = array<i64: 256, 256>}, {pipeline_mode = #tpu.pipeline_mode<synchronous>, transform_indices = @transform_3, window_bounds = array<i64: 1, 256>}, {pipeline_mode = #tpu.pipeline_mode<synchronous>, transform_indices = @transform_4, window_bounds = array<i64: 4, 256, 512>}, {pipeline_mode = #tpu.pipeline_mode<synchronous>, transform_indices = @transform_5, window_bounds = array<i64: 4, 1, 256>}, {pipeline_mode = #tpu.pipeline_mode<synchronous>, transform_indices = @transform_6, window_bounds = array<i64: 256, 256>}, {pipeline_mode = #tpu.pipeline_mode<synchronous>, transform_indices = @transform_7, window_bounds = array<i64: 1, 128>}, {transform_indices = @transform_8, window_bounds = array<i64: 1, 128, 128>}, {transform_indices = @transform_9, window_bounds = array<i64: 1, 128, 256>}]} {
    %c0 = arith.constant 0 : index
    %c0_0 = arith.constant 0 : index
    %0 = vector.load %arg2[%c0, %c0_0] : memref<128x128xf32, #tpu.memory_space<vmem>>, vector<128x128xf32>
    %c0_1 = arith.constant 0 : index
    %c0_2 = arith.constant 0 : index
    %c0_3 = arith.constant 0 : index
    %1 = vector.load %arg1[%c0_1, %c0_2, %c0_3] : memref<1x128x128xf32, #tpu.memory_space<vmem>>, vector<1x128x128xf32>
    %2 = vector.shape_cast %1 : vector<1x128x128xf32> to vector<128x128xf32>
    %c0_4 = arith.constant 0 : index
    %c0_5 = arith.constant 0 : index
    %3 = vector.load %arg3[%c0_4, %c0_5] : memref<256x256xf32, #tpu.memory_space<vmem>>, vector<256x256xf32>
    %c0_6 = arith.constant 0 : index
    %c0_7 = arith.constant 0 : index
    %4 = vector.load %arg4[%c0_6, %c0_7] : memref<1x256xf32, #tpu.memory_space<vmem>>, vector<1x256xf32>
    %cst = arith.constant dense<0.000000e+00> : vector<128x128xf32>
    %5 = tpu.matmul %0, %2, %cst {dimension_numbers = #tpu.dot_dimension_numbers<[1], [0], [0], [1], [0, 0, 1, 1], [], []>} : vector<128x128xf32>, vector<128x128xf32>, vector<128x128xf32> -> vector<128x128xf32>
    %6 = tpu.concatenate %5, %2 in 1 : vector<128x128xf32>, vector<128x128xf32> -> vector<128x256xf32>
    %cst_8 = arith.constant dense<0.000000e+00> : vector<128x256xf32>
    %7 = tpu.matmul %6, %3, %cst_8 {dimension_numbers = #tpu.dot_dimension_numbers<[1], [0], [0], [1], [0, 0, 1, 1], [], []>} : vector<128x256xf32>, vector<256x256xf32>, vector<128x256xf32> -> vector<128x256xf32>
    %8 = vector.broadcast %4 : vector<1x256xf32> to vector<128x256xf32>
    %9 = arith.addf %7, %8 : vector<128x256xf32>
    %cst_9 = arith.constant 0.000000e+00 : f32
    %10 = vector.broadcast %cst_9 : f32 to vector<128x256xf32>
    %11 = arith.maximumf %9, %10 : vector<128x256xf32>
    %c0_10 = arith.constant 0 : index
    %c0_11 = arith.constant 0 : index
    %c0_12 = arith.constant 0 : index
    %12 = vector.load %arg5[%c0_10, %c0_11, %c0_12] : memref<4x256x512xf32, #tpu.memory_space<vmem>>, vector<1x256x512xf32>
    %13 = vector.shape_cast %12 : vector<1x256x512xf32> to vector<256x512xf32>
    %c0_13 = arith.constant 0 : index
    %c0_14 = arith.constant 0 : index
    %c0_15 = arith.constant 0 : index
    %14 = vector.load %arg6[%c0_13, %c0_14, %c0_15] : memref<4x1x256xf32, #tpu.memory_space<vmem>>, vector<1x1x256xf32>
    %15 = vector.shape_cast %14 : vector<1x1x256xf32> to vector<1x256xf32>
    %cst_16 = arith.constant dense<0.000000e+00> : vector<128x512xf32>
    %16 = tpu.matmul %11, %13, %cst_16 {dimension_numbers = #tpu.dot_dimension_numbers<[1], [0], [0], [1], [0, 0, 1, 1], [], []>} : vector<128x256xf32>, vector<256x512xf32>, vector<128x512xf32> -> vector<128x512xf32>
    %17 = vector.extract_strided_slice %16 {offsets = [0, 0], sizes = [128, 256], strides = [1, 1]} : vector<128x512xf32> to vector<128x256xf32>
    %18 = vector.extract_strided_slice %16 {offsets = [0, 256], sizes = [128, 256], strides = [1, 1]} : vector<128x512xf32> to vector<128x256xf32>
    %cst_17 = arith.constant dense<0.000000e+00> : vector<128x256xf32>
    %19 = tpu.matmul %0, %17, %cst_17 {dimension_numbers = #tpu.dot_dimension_numbers<[1], [0], [0], [1], [0, 0, 1, 1], [], []>} : vector<128x128xf32>, vector<128x256xf32>, vector<128x256xf32> -> vector<128x256xf32>
    %20 = arith.addf %19, %18 : vector<128x256xf32>
    %21 = vector.broadcast %15 : vector<1x256xf32> to vector<128x256xf32>
    %22 = arith.addf %20, %21 : vector<128x256xf32>
    %cst_18 = arith.constant 0.000000e+00 : f32
    %23 = vector.broadcast %cst_18 : f32 to vector<128x256xf32>
    %24 = arith.maximumf %22, %23 : vector<128x256xf32>
    %c1 = arith.constant 1 : index
    %c0_19 = arith.constant 0 : index
    %c0_20 = arith.constant 0 : index
    %25 = vector.load %arg5[%c1, %c0_19, %c0_20] : memref<4x256x512xf32, #tpu.memory_space<vmem>>, vector<1x256x512xf32>
    %26 = vector.shape_cast %25 : vector<1x256x512xf32> to vector<256x512xf32>
    %c1_21 = arith.constant 1 : index
    %c0_22 = arith.constant 0 : index
    %c0_23 = arith.constant 0 : index
    %27 = vector.load %arg6[%c1_21, %c0_22, %c0_23] : memref<4x1x256xf32, #tpu.memory_space<vmem>>, vector<1x1x256xf32>
    %28 = vector.shape_cast %27 : vector<1x1x256xf32> to vector<1x256xf32>
    %cst_24 = arith.constant dense<0.000000e+00> : vector<128x512xf32>
    %29 = tpu.matmul %24, %26, %cst_24 {dimension_numbers = #tpu.dot_dimension_numbers<[1], [0], [0], [1], [0, 0, 1, 1], [], []>} : vector<128x256xf32>, vector<256x512xf32>, vector<128x512xf32> -> vector<128x512xf32>
    %30 = vector.extract_strided_slice %29 {offsets = [0, 0], sizes = [128, 256], strides = [1, 1]} : vector<128x512xf32> to vector<128x256xf32>
    %31 = vector.extract_strided_slice %29 {offsets = [0, 256], sizes = [128, 256], strides = [1, 1]} : vector<128x512xf32> to vector<128x256xf32>
    %cst_25 = arith.constant dense<0.000000e+00> : vector<128x256xf32>
    %32 = tpu.matmul %0, %30, %cst_25 {dimension_numbers = #tpu.dot_dimension_numbers<[1], [0], [0], [1], [0, 0, 1, 1], [], []>} : vector<128x128xf32>, vector<128x256xf32>, vector<128x256xf32> -> vector<128x256xf32>
    %33 = arith.addf %32, %31 : vector<128x256xf32>
    %34 = vector.broadcast %28 : vector<1x256xf32> to vector<128x256xf32>
    %35 = arith.addf %33, %34 : vector<128x256xf32>
    %cst_26 = arith.constant 0.000000e+00 : f32
    %36 = vector.broadcast %cst_26 : f32 to vector<128x256xf32>
    %37 = arith.maximumf %35, %36 : vector<128x256xf32>
    %38 = arith.addf %11, %37 : vector<128x256xf32>
    %cst_27 = arith.constant 5.000000e-01 : f32
    %39 = vector.broadcast %cst_27 : f32 to vector<128x256xf32>
    %40 = arith.mulf %38, %39 : vector<128x256xf32>
    %c2 = arith.constant 2 : index
    %c0_28 = arith.constant 0 : index
    %c0_29 = arith.constant 0 : index
    %41 = vector.load %arg5[%c2, %c0_28, %c0_29] : memref<4x256x512xf32, #tpu.memory_space<vmem>>, vector<1x256x512xf32>
    %42 = vector.shape_cast %41 : vector<1x256x512xf32> to vector<256x512xf32>
    %c2_30 = arith.constant 2 : index
    %c0_31 = arith.constant 0 : index
    %c0_32 = arith.constant 0 : index
    %43 = vector.load %arg6[%c2_30, %c0_31, %c0_32] : memref<4x1x256xf32, #tpu.memory_space<vmem>>, vector<1x1x256xf32>
    %44 = vector.shape_cast %43 : vector<1x1x256xf32> to vector<1x256xf32>
    %cst_33 = arith.constant dense<0.000000e+00> : vector<128x512xf32>
    %45 = tpu.matmul %40, %42, %cst_33 {dimension_numbers = #tpu.dot_dimension_numbers<[1], [0], [0], [1], [0, 0, 1, 1], [], []>} : vector<128x256xf32>, vector<256x512xf32>, vector<128x512xf32> -> vector<128x512xf32>
    %46 = vector.extract_strided_slice %45 {offsets = [0, 0], sizes = [128, 256], strides = [1, 1]} : vector<128x512xf32> to vector<128x256xf32>
    %47 = vector.extract_strided_slice %45 {offsets = [0, 256], sizes = [128, 256], strides = [1, 1]} : vector<128x512xf32> to vector<128x256xf32>
    %cst_34 = arith.constant dense<0.000000e+00> : vector<128x256xf32>
    %48 = tpu.matmul %0, %46, %cst_34 {dimension_numbers = #tpu.dot_dimension_numbers<[1], [0], [0], [1], [0, 0, 1, 1], [], []>} : vector<128x128xf32>, vector<128x256xf32>, vector<128x256xf32> -> vector<128x256xf32>
    %49 = arith.addf %48, %47 : vector<128x256xf32>
    %50 = vector.broadcast %44 : vector<1x256xf32> to vector<128x256xf32>
    %51 = arith.addf %49, %50 : vector<128x256xf32>
    %cst_35 = arith.constant 0.000000e+00 : f32
    %52 = vector.broadcast %cst_35 : f32 to vector<128x256xf32>
    %53 = arith.maximumf %51, %52 : vector<128x256xf32>
    %c3 = arith.constant 3 : index
    %c0_36 = arith.constant 0 : index
    %c0_37 = arith.constant 0 : index
    %54 = vector.load %arg5[%c3, %c0_36, %c0_37] : memref<4x256x512xf32, #tpu.memory_space<vmem>>, vector<1x256x512xf32>
    %55 = vector.shape_cast %54 : vector<1x256x512xf32> to vector<256x512xf32>
    %c3_38 = arith.constant 3 : index
    %c0_39 = arith.constant 0 : index
    %c0_40 = arith.constant 0 : index
    %56 = vector.load %arg6[%c3_38, %c0_39, %c0_40] : memref<4x1x256xf32, #tpu.memory_space<vmem>>, vector<1x1x256xf32>
    %57 = vector.shape_cast %56 : vector<1x1x256xf32> to vector<1x256xf32>
    %cst_41 = arith.constant dense<0.000000e+00> : vector<128x512xf32>
    %58 = tpu.matmul %53, %55, %cst_41 {dimension_numbers = #tpu.dot_dimension_numbers<[1], [0], [0], [1], [0, 0, 1, 1], [], []>} : vector<128x256xf32>, vector<256x512xf32>, vector<128x512xf32> -> vector<128x512xf32>
    %59 = vector.extract_strided_slice %58 {offsets = [0, 0], sizes = [128, 256], strides = [1, 1]} : vector<128x512xf32> to vector<128x256xf32>
    %60 = vector.extract_strided_slice %58 {offsets = [0, 256], sizes = [128, 256], strides = [1, 1]} : vector<128x512xf32> to vector<128x256xf32>
    %cst_42 = arith.constant dense<0.000000e+00> : vector<128x256xf32>
    %61 = tpu.matmul %0, %59, %cst_42 {dimension_numbers = #tpu.dot_dimension_numbers<[1], [0], [0], [1], [0, 0, 1, 1], [], []>} : vector<128x128xf32>, vector<128x256xf32>, vector<128x256xf32> -> vector<128x256xf32>
    %62 = arith.addf %61, %60 : vector<128x256xf32>
    %63 = vector.broadcast %57 : vector<1x256xf32> to vector<128x256xf32>
    %64 = arith.addf %62, %63 : vector<128x256xf32>
    %cst_43 = arith.constant 0.000000e+00 : f32
    %65 = vector.broadcast %cst_43 : f32 to vector<128x256xf32>
    %66 = arith.maximumf %64, %65 : vector<128x256xf32>
    %67 = arith.addf %40, %66 : vector<128x256xf32>
    %cst_44 = arith.constant 5.000000e-01 : f32
    %68 = vector.broadcast %cst_44 : f32 to vector<128x256xf32>
    %69 = arith.mulf %67, %68 : vector<128x256xf32>
    %c0_45 = arith.constant 0 : index
    %c0_46 = arith.constant 0 : index
    %c0_47 = arith.constant 0 : index
    %70 = vector.load %arg10[%c0_45, %c0_46, %c0_47] : memref<1x128x256xf32, #tpu.memory_space<vmem>>, vector<1x128x256xf32>
    %71 = vector.shape_cast %70 : vector<1x128x256xf32> to vector<128x256xf32>
    %72 = vector.shape_cast %69 : vector<128x256xf32> to vector<1x128x256xf32>
    tpu.vector_store %arg10[%c0_45, %c0_46, %c0_47], %72 {strides = array<i32>} : memref<1x128x256xf32, #tpu.memory_space<vmem>>, vector<1x128x256xf32>,
    %c0_48 = arith.constant 0 : index
    %c0_49 = arith.constant 0 : index
    %73 = vector.load %arg7[%c0_48, %c0_49] : memref<256x256xf32, #tpu.memory_space<vmem>>, vector<256x256xf32>
    %c0_50 = arith.constant 0 : index
    %c0_51 = arith.constant 0 : index
    %74 = vector.load %arg8[%c0_50, %c0_51] : memref<1x128xf32, #tpu.memory_space<vmem>>, vector<1x128xf32>
    %cst_52 = arith.constant dense<0.000000e+00> : vector<128x256xf32>
    %75 = tpu.matmul %69, %73, %cst_52 {dimension_numbers = #tpu.dot_dimension_numbers<[1], [0], [0], [1], [0, 0, 1, 1], [], []>} : vector<128x256xf32>, vector<256x256xf32>, vector<128x256xf32> -> vector<128x256xf32>
    %76 = vector.extract_strided_slice %75 {offsets = [0, 0], sizes = [128, 128], strides = [1, 1]} : vector<128x256xf32> to vector<128x128xf32>
    %77 = vector.extract_strided_slice %75 {offsets = [0, 128], sizes = [128, 128], strides = [1, 1]} : vector<128x256xf32> to vector<128x128xf32>
    %cst_53 = arith.constant dense<0.000000e+00> : vector<128x128xf32>
    %78 = tpu.matmul %0, %76, %cst_53 {dimension_numbers = #tpu.dot_dimension_numbers<[1], [0], [0], [1], [0, 0, 1, 1], [], []>} : vector<128x128xf32>, vector<128x128xf32>, vector<128x128xf32> -> vector<128x128xf32>
    %79 = arith.addf %78, %77 : vector<128x128xf32>
    %80 = vector.broadcast %74 : vector<1x128xf32> to vector<128x128xf32>
    %81 = arith.addf %79, %80 : vector<128x128xf32>
    %c0_54 = arith.constant 0 : index
    %c0_55 = arith.constant 0 : index
    %c0_56 = arith.constant 0 : index
    %82 = vector.load %arg9[%c0_54, %c0_55, %c0_56] : memref<1x128x128xf32, #tpu.memory_space<vmem>>, vector<1x128x128xf32>
    %83 = vector.shape_cast %82 : vector<1x128x128xf32> to vector<128x128xf32>
    %84 = vector.shape_cast %81 : vector<128x128xf32> to vector<1x128x128xf32>
    tpu.vector_store %arg9[%c0_54, %c0_55, %c0_56], %84 {strides = array<i32>} : memref<1x128x128xf32, #tpu.memory_space<vmem>>, vector<1x128x128xf32>,
    return
  }
  func.func @transform_0(%arg0: i32) -> (i32, i32, i32) {
    %c0_i32 = arith.constant 0 : i32
    %c0_i32_0 = arith.constant 0 : i32
    %c0_i32_1 = arith.constant 0 : i32
    return %arg0, %c0_i32, %c0_i32_0 : i32, i32, i32
  }
  func.func @transform_1(%arg0: i32) -> (i32, i32) {
    %c0_i32 = arith.constant 0 : i32
    %c0_i32_0 = arith.constant 0 : i32
    %c0_i32_1 = arith.constant 0 : i32
    return %c0_i32, %c0_i32_0 : i32, i32
  }
  func.func @transform_2(%arg0: i32) -> (i32, i32) {
    %c0_i32 = arith.constant 0 : i32
    %c0_i32_0 = arith.constant 0 : i32
    %c0_i32_1 = arith.constant 0 : i32
    return %c0_i32, %c0_i32_0 : i32, i32
  }
  func.func @transform_3(%arg0: i32) -> (i32, i32) {
    %c0_i32 = arith.constant 0 : i32
    %c0_i32_0 = arith.constant 0 : i32
    %c0_i32_1 = arith.constant 0 : i32
    return %c0_i32, %c0_i32_0 : i32, i32
  }
  func.func @transform_4(%arg0: i32) -> (i32, i32, i32) {
    %c0_i32 = arith.constant 0 : i32
    %c0_i32_0 = arith.constant 0 : i32
    %c0_i32_1 = arith.constant 0 : i32
    %c0_i32_2 = arith.constant 0 : i32
    return %c0_i32, %c0_i32_0, %c0_i32_1 : i32, i32, i32
  }
  func.func @transform_5(%arg0: i32) -> (i32, i32, i32) {
    %c0_i32 = arith.constant 0 : i32
    %c0_i32_0 = arith.constant 0 : i32
    %c0_i32_1 = arith.constant 0 : i32
    %c0_i32_2 = arith.constant 0 : i32
    return %c0_i32, %c0_i32_0, %c0_i32_1 : i32, i32, i32
  }
  func.func @transform_6(%arg0: i32) -> (i32, i32) {
    %c0_i32 = arith.constant 0 : i32
    %c0_i32_0 = arith.constant 0 : i32
    %c0_i32_1 = arith.constant 0 : i32
    return %c0_i32, %c0_i32_0 : i32, i32
  }
  func.func @transform_7(%arg0: i32) -> (i32, i32) {
    %c0_i32 = arith.constant 0 : i32
    %c0_i32_0 = arith.constant 0 : i32
    %c0_i32_1 = arith.constant 0 : i32
    return %c0_i32, %c0_i32_0 : i32, i32
  }
  func.func @transform_8(%arg0: i32) -> (i32, i32, i32) {
    %c0_i32 = arith.constant 0 : i32
    %c0_i32_0 = arith.constant 0 : i32
    %c0_i32_1 = arith.constant 0 : i32
    return %arg0, %c0_i32, %c0_i32_0 : i32, i32, i32
  }
  func.func @transform_9(%arg0: i32) -> (i32, i32, i32) {
    %c0_i32 = arith.constant 0 : i32
    %c0_i32_0 = arith.constant 0 : i32
    %c0_i32_1 = arith.constant 0 : i32
    return %arg0, %c0_i32, %c0_i32_0 : i32, i32, i32
  }
}

</mosaic_0001>

<llo_original>
// kernel: forward.1
$region0: #{forward.1}
  #allocation0 [shape = 'u32[]', space=smem, size = 0x4, offset = 0x4, fixed_abs, tag = 'smem constant byte address 0x4 - core index']
  #allocation1 [shape = 'u32[144,128]{1,0:T(1,128)}', space=vmem, size = 0x12000, scoped, tag = 'internal scratch']
  %s0 = inlined_call_operand.vmem [shape: f32[2,128,128], index: 0, kind: input, shape index: {}]
  %s1 = inlined_call_operand.hbm [shape: f32[128,128], index: 1, kind: input, shape index: {}]
  %s2 = inlined_call_operand.hbm [shape: f32[256,256], index: 2, kind: input, shape index: {}]
  %s3 = inlined_call_operand.vmem [shape: f32[1,256], index: 3, kind: input, shape index: {}]
  %s4 = inlined_call_operand.hbm [shape: f32[4,256,512], index: 4, kind: input, shape index: {}]
  %s5 = inlined_call_operand.vmem [shape: f32[4,1,256], index: 5, kind: input, shape index: {}]
  %s6 = inlined_call_operand.hbm [shape: f32[256,256], index: 6, kind: input, shape index: {}]
  %s7 = inlined_call_operand.vmem [shape: f32[1,128], index: 7, kind: input, shape index: {}]
  %s8 = inlined_call_operand.vmem [shape: f32[2,128,128], index: 8, kind: output, shape index: {0}]
  %s9 = inlined_call_operand.vmem [shape: f32[2,128,256], index: 9, kind: output, shape index: {1}]
  %10 = xla_tuple %s8, %s9
  %s11 = sld [smem:[#allocation0]]
  $region89: #{forward.1} parent=0
    _
  %s13 = ssub.s32 1, %s11
  %s14 = scalar_select 0, %s13, %s11
  $region1: #{forward.1} parent=0
    #allocation2 [shape = 'u8[65536]{0}', space=vmem, size = 0x10000, scoped, tag = 'input window, operand 1, single buffered']
    #allocation3 [shape = 's32[2]{0}', space=sflag, size = 0x8, scoped, tag = 'scoped memory for forward.1']
    #allocation4 [shape = 'u8[262144]{0}', space=vmem, size = 0x40000, scoped, tag = 'input window, operand 2, single buffered']
    #allocation5 [shape = 's32[1]{0}', space=sflag, size = 0x4, scoped, tag = 'scoped memory for forward.1']
    #allocation6 [shape = 'u8[2097152]{0}', space=vmem, size = 0x200000, scoped, tag = 'input window, operand 4, single buffered']
    #allocation7 [shape = 'u8[262144]{0}', space=vmem, size = 0x40000, scoped, tag = 'input window, operand 6, single buffered']
    #allocation8 [shape = 's32[1]{0}', space=sflag, size = 0x4, scoped, tag = 'scoped memory for forward.1']
    %15 = vsyncpa [#allocation3], 0
    %16 = vsyncpa [#allocation5], 0
    %17 = vsyncpa [#allocation8], 0
    loop: start=0, step=1, limit=4
    $region2: #{forward.1} parent=1 // loop_pre_header
      _
    $region3: #{forward.1} parent=1 // loop_header
      %s19 = sphi 0, %s23
      %p20 = scmp.ge.s32.totalorder %s19, 4
      %s29 = sphi 0, %s31
      %s32 = sphi 0, %s29
      %s33 = sphi 0, %s32
      %s49 = sphi 0, %s33
      %s53 = sphi 0, %s53
      %s55 = sphi 0, %s53
      %s56 = sphi 0, %s55
      %s70 = sphi 0, %s56
      %s74 = sphi 0, %s74
      %s76 = sphi 0, %s74
      %s77 = sphi 0, %s76
      %s91 = sphi 0, %s77
      %s95 = sphi 0, %s95
      %s97 = sphi 0, %s95
      %s98 = sphi 0, %s97
      %s112 = sphi 0, %s98
      %s116 = sphi 0, %s116
      %s118 = sphi 0, %s116
      %s119 = sphi 0, %s118
      %s133 = sphi 0, %s119
      %s137 = sphi 0, %s137
      %s139 = sphi 0, %s137
      %s140 = sphi 0, %s139
      %s154 = sphi 0, %s140
      %s158 = sphi 0, %s158
      %s160 = sphi 0, %s158
      %s161 = sphi 0, %s160
      %s175 = sphi 0, %s161
      %s179 = sphi 0, %s179
      %s181 = sphi 0, %s179
      %s182 = sphi 0, %s181
      %s196 = sphi 0, %s182
      %s202 = sphi 0, %s204
      %s205 = sphi 0, %s202
      %s206 = sphi 0, %s205
      %s222 = sphi 0, %s206
      %s228 = sphi 0, %s230
      %s231 = sphi 0, %s228
      %s232 = sphi 0, %s231
      %s248 = sphi 0, %s232
    $region4: #{forward.1} parent=1 // loop_header_branch
      %22 = sbr.rel (%p20) target = $region8
    $region5: #{forward.1} parent=1 // loop_body
      %s24 = ssub.s32 %s19, 1
      %s25 = ssub.s32 %s19, 2
      %s26 = sadd.s32 %s19, 1
      %s27 = ssub.s32 %s19, %s26
      %p28 = scmp.eq.s32.totalorder %s27, 0
      %s30 = sadd.s32 %s29, 1
      %s31 = scalar_select %p28, %s29, %s30
      %p34 = pneg %p28
      %p35 = scmp.eq.s32.totalorder %s19, 1
      %p36 = por %p34, %p35
      %p37 = scmp.ne.s32.totalorder %s29, %s32
      %p38 = scmp.eq.s32.totalorder %s19, 0
      %p39 = por %p37, %p38
      %p40 = scmp.ne.s32.totalorder %s29, %s32
      %p41 = scmp.eq.s32.totalorder %s24, 1
      %p42 = por %p40, %p41
      %p43 = scmp.ne.s32.totalorder %s32, %s33
      %p44 = scmp.eq.s32.totalorder %s24, 0
      %p45 = por %p43, %p44
      %p46 = scmp.ne.s32.totalorder %s32, %s33
      %p47 = scmp.eq.s32.totalorder %s25, 1
      %p48 = por %p46, %p47
      %p50 = scmp.ne.s32.totalorder %s33, %s49
      %p51 = scmp.eq.s32.totalorder %s25, 0
      %p52 = por %p50, %p51
      %s54 = sadd.s32 %s53, 1
      %p57 = scmp.eq.s32.totalorder %s19, 1
      %p58 = scmp.ne.s32.totalorder %s53, %s55
      %p59 = scmp.eq.s32.totalorder %s19, 0
      %p60 = por %p58, %p59
      %p61 = scmp.ne.s32.totalorder %s53, %s55
      %p62 = scmp.eq.s32.totalorder %s24, 1
      %p63 = por %p61, %p62
      %p64 = scmp.ne.s32.totalorder %s55, %s56
      %p65 = scmp.eq.s32.totalorder %s24, 0
      %p66 = por %p64, %p65
      %p67 = scmp.ne.s32.totalorder %s55, %s56
      %p68 = scmp.eq.s32.totalorder %s25, 1
      %p69 = por %p67, %p68
      %p71 = scmp.ne.s32.totalorder %s56, %s70
      %p72 = scmp.eq.s32.totalorder %s25, 0
      %p73 = por %p71, %p72
      %s75 = sadd.s32 %s74, 1
      %p78 = scmp.eq.s32.totalorder %s19, 1
      %p79 = scmp.ne.s32.totalorder %s74, %s76
      %p80 = scmp.eq.s32.totalorder %s19, 0
      %p81 = por %p79, %p80
      %p82 = scmp.ne.s32.totalorder %s74, %s76
      %p83 = scmp.eq.s32.totalorder %s24, 1
      %p84 = por %p82, %p83
      %p85 = scmp.ne.s32.totalorder %s76, %s77
      %p86 = scmp.eq.s32.totalorder %s24, 0
      %p87 = por %p85, %p86
      %p88 = scmp.ne.s32.totalorder %s76, %s77
      %p89 = scmp.eq.s32.totalorder %s25, 1
      %p90 = por %p88, %p89
      %p92 = scmp.ne.s32.totalorder %s77, %s91
      %p93 = scmp.eq.s32.totalorder %s25, 0
      %p94 = por %p92, %p93
      %s96 = sadd.s32 %s95, 1
      %p99 = scmp.eq.s32.totalorder %s19, 1
      %p100 = scmp.ne.s32.totalorder %s95, %s97
      %p101 = scmp.eq.s32.totalorder %s19, 0
      %p102 = por %p100, %p101
      %p103 = scmp.ne.s32.totalorder %s95, %s97
      %p104 = scmp.eq.s32.totalorder %s24, 1
      %p105 = por %p103, %p104
      %p106 = scmp.ne.s32.totalorder %s97, %s98
      %p107 = scmp.eq.s32.totalorder %s24, 0
      %p108 = por %p106, %p107
      %p109 = scmp.ne.s32.totalorder %s97, %s98
      %p110 = scmp.eq.s32.totalorder %s25, 1
      %p111 = por %p109, %p110
      %p113 = scmp.ne.s32.totalorder %s98, %s112
      %p114 = scmp.eq.s32.totalorder %s25, 0
      %p115 = por %p113, %p114
      %s117 = sadd.s32 %s116, 1
      %p120 = scmp.eq.s32.totalorder %s19, 1
      %p121 = scmp.ne.s32.totalorder %s116, %s118
      %p122 = scmp.eq.s32.totalorder %s19, 0
      %p123 = por %p121, %p122
      %p124 = scmp.ne.s32.totalorder %s116, %s118
      %p125 = scmp.eq.s32.totalorder %s24, 1
      %p126 = por %p124, %p125
      %p127 = scmp.ne.s32.totalorder %s118, %s119
      %p128 = scmp.eq.s32.totalorder %s24, 0
      %p129 = por %p127, %p128
      %p130 = scmp.ne.s32.totalorder %s118, %s119
      %p131 = scmp.eq.s32.totalorder %s25, 1
      %p132 = por %p130, %p131
      %p134 = scmp.ne.s32.totalorder %s119, %s133
      %p135 = scmp.eq.s32.totalorder %s25, 0
      %p136 = por %p134, %p135
      %s138 = sadd.s32 %s137, 1
      %p141 = scmp.eq.s32.totalorder %s19, 1
      %p142 = scmp.ne.s32.totalorder %s137, %s139
      %p143 = scmp.eq.s32.totalorder %s19, 0
      %p144 = por %p142, %p143
      %p145 = scmp.ne.s32.totalorder %s137, %s139
      %p146 = scmp.eq.s32.totalorder %s24, 1
      %p147 = por %p145, %p146
      %p148 = scmp.ne.s32.totalorder %s139, %s140
      %p149 = scmp.eq.s32.totalorder %s24, 0
      %p150 = por %p148, %p149
      %p151 = scmp.ne.s32.totalorder %s139, %s140
      %p152 = scmp.eq.s32.totalorder %s25, 1
      %p153 = por %p151, %p152
      %p155 = scmp.ne.s32.totalorder %s140, %s154
      %p156 = scmp.eq.s32.totalorder %s25, 0
      %p157 = por %p155, %p156
      %s159 = sadd.s32 %s158, 1
      %p162 = scmp.eq.s32.totalorder %s19, 1
      %p163 = scmp.ne.s32.totalorder %s158, %s160
      %p164 = scmp.eq.s32.totalorder %s19, 0
      %p165 = por %p163, %p164
      %p166 = scmp.ne.s32.totalorder %s158, %s160
      %p167 = scmp.eq.s32.totalorder %s24, 1
      %p168 = por %p166, %p167
      %p169 = scmp.ne.s32.totalorder %s160, %s161
      %p170 = scmp.eq.s32.totalorder %s24, 0
      %p171 = por %p169, %p170
      %p172 = scmp.ne.s32.totalorder %s160, %s161
      %p173 = scmp.eq.s32.totalorder %s25, 1
      %p174 = por %p172, %p173
      %p176 = scmp.ne.s32.totalorder %s161, %s175
      %p177 = scmp.eq.s32.totalorder %s25, 0
      %p178 = por %p176, %p177
      %s180 = sadd.s32 %s179, 1
      %p183 = scmp.eq.s32.totalorder %s19, 1
      %p184 = scmp.ne.s32.totalorder %s179, %s181
      %p185 = scmp.eq.s32.totalorder %s19, 0
      %p186 = por %p184, %p185
      %p187 = scmp.ne.s32.totalorder %s179, %s181
      %p188 = scmp.eq.s32.totalorder %s24, 1
      %p189 = por %p187, %p188
      %p190 = scmp.ne.s32.totalorder %s181, %s182
      %p191 = scmp.eq.s32.totalorder %s24, 0
      %p192 = por %p190, %p191
      %p193 = scmp.ne.s32.totalorder %s181, %s182
      %p194 = scmp.eq.s32.totalorder %s25, 1
      %p195 = por %p193, %p194
      %p197 = scmp.ne.s32.totalorder %s182, %s196
      %p198 = scmp.eq.s32.totalorder %s25, 0
      %p199 = por %p197, %p198
      %s200 = ssub.s32 %s19, %s26
      %p201 = scmp.eq.s32.totalorder %s200, 0
      %s203 = sadd.s32 %s202, 1
      %s204 = scalar_select %p201, %s202, %s203
      %p207 = pneg %p201
      %p208 = scmp.eq.s32.totalorder %s19, 1
      %p209 = por %p207, %p208
      %p210 = scmp.ne.s32.totalorder %s202, %s205
      %p211 = scmp.eq.s32.totalorder %s19, 0
      %p212 = por %p210, %p211
      %p213 = scmp.ne.s32.totalorder %s202, %s205
      %p214 = scmp.eq.s32.totalorder %s24, 1
      %p215 = por %p213, %p214
      %p216 = scmp.ne.s32.totalorder %s205, %s206
      %p217 = scmp.eq.s32.totalorder %s24, 0
      %p218 = por %p216, %p217
      %p219 = scmp.ne.s32.totalorder %s205, %s206
      %p220 = scmp.eq.s32.totalorder %s25, 1
      %p221 = por %p219, %p220
      %p223 = scmp.ne.s32.totalorder %s206, %s222
      %p224 = scmp.eq.s32.totalorder %s25, 0
      %p225 = por %p223, %p224
      %s226 = ssub.s32 %s19, %s26
      %p227 = scmp.eq.s32.totalorder %s226, 0
      %s229 = sadd.s32 %s228, 1
      %s230 = scalar_select %p227, %s228, %s229
      %p233 = pneg %p227
      %p234 = scmp.eq.s32.totalorder %s19, 1
      %p235 = por %p233, %p234
      %p236 = scmp.ne.s32.totalorder %s228, %s231
      %p237 = scmp.eq.s32.totalorder %s19, 0
      %p238 = por %p236, %p237
      %p239 = scmp.ne.s32.totalorder %s228, %s231
      %p240 = scmp.eq.s32.totalorder %s24, 1
      %p241 = por %p239, %p240
      %p242 = scmp.ne.s32.totalorder %s231, %s232
      %p243 = scmp.eq.s32.totalorder %s24, 0
      %p244 = por %p242, %p243
      %p245 = scmp.ne.s32.totalorder %s231, %s232
      %p246 = scmp.eq.s32.totalorder %s25, 1
      %p247 = por %p245, %p246
      %p249 = scmp.ne.s32.totalorder %s232, %s248
      %p250 = scmp.eq.s32.totalorder %s25, 0
      %p251 = por %p249, %p250
      %p252 = scmp.le.s32.totalorder 1, %s19
      %p253 = scmp.lt.s32.totalorder %s19, 3
      %p254 = pnand %p252, %p253
      %p255 = pneg %p254
      // Predicated region
      $region9: #{forward.1} parent=5 // pred_check
        _
      $region10: #{forward.1} parent=5 // pred_check_branch
        %257 = sbr.rel (%p254) target = $region12
      $region11: #{forward.1} parent=5 // pred_region
        %s258 = ssub.s32 %s19, 1
        // Predicated region
        $region13: #{forward.1} parent=11 // pred_check
          %p259 = pneg %p66
        $region14: #{forward.1} parent=11 // pred_check_branch
          %261 = sbr.rel (%p259) target = $region16
        $region15: #{forward.1} parent=11 // pred_region
          %s263 = ssub.s32 2048, 2048
          %264 = vsyncadd [#allocation3], %s263
          %s265 = sshll.u32 [#allocation2], 4
          %s266 = int_to_ptr.vmem [resolvable:$true] %s265
          %271 = dma.hbm_to_vmem [thread:$0]  %s1, 2048, %s266, [#allocation3], 128, 128, 8
        $region16: #{forward.1} parent=11 // pred_fallthru
          _
        // Predicated region
        $region17: #{forward.1} parent=11 // pred_check
          %p272 = pneg %p87
        $region18: #{forward.1} parent=11 // pred_check_branch
          %274 = sbr.rel (%p272) target = $region20
        $region19: #{forward.1} parent=11 // pred_region
          %s276 = ssub.s32 8192, 8192
          %277 = vsyncadd [#allocation5], %s276
          %s278 = sshll.u32 [#allocation4], 4
          %s279 = int_to_ptr.vmem [resolvable:$true] %s278
          %284 = dma.hbm_to_vmem [thread:$0]  %s2, 8192, %s279, [#allocation5], 256, 256, 16
        $region20: #{forward.1} parent=11 // pred_fallthru
          _
        // Predicated region
        $region21: #{forward.1} parent=11 // pred_check
          %p285 = pneg %p108
        $region22: #{forward.1} parent=11 // pred_check_branch
          %287 = sbr.rel (%p285) target = $region24
        $region23: #{forward.1} parent=11 // pred_region
          _
        $region24: #{forward.1} parent=11 // pred_fallthru
          _
        // Predicated region
        $region25: #{forward.1} parent=11 // pred_check
          %p288 = pneg %p129
        $region26: #{forward.1} parent=11 // pred_check_branch
          %290 = sbr.rel (%p288) target = $region28
        $region27: #{forward.1} parent=11 // pred_region
          %s292 = ssub.s32 65536, 65536
          %293 = vsyncadd [#allocation5], %s292
          %s294 = sshll.u32 [#allocation6], 4
          %s295 = int_to_ptr.vmem [resolvable:$true] %s294
          %300 = dma.hbm_to_vmem [thread:$0]  %s4, 65536, %s295, [#allocation5], 512, 512, 32
        $region28: #{forward.1} parent=11 // pred_fallthru
          _
        // Predicated region
        $region29: #{forward.1} parent=11 // pred_check
          %p301 = pneg %p150
        $region30: #{forward.1} parent=11 // pred_check_branch
          %303 = sbr.rel (%p301) target = $region32
        $region31: #{forward.1} parent=11 // pred_region
          _
        $region32: #{forward.1} parent=11 // pred_fallthru
          _
        // Predicated region
        $region33: #{forward.1} parent=11 // pred_check
          %p304 = pneg %p171
        $region34: #{forward.1} parent=11 // pred_check_branch
          %306 = sbr.rel (%p304) target = $region36
        $region35: #{forward.1} parent=11 // pred_region
          %s308 = ssub.s32 8192, 8192
          %309 = vsyncadd [#allocation8], %s308
          %s310 = sshll.u32 [#allocation7], 4
          %s311 = int_to_ptr.vmem [resolvable:$true] %s310
          %316 = dma.hbm_to_vmem [thread:$0]  %s6, 8192, %s311, [#allocation8], 256, 256, 16
        $region36: #{forward.1} parent=11 // pred_fallthru
          _
        // Predicated region
        $region37: #{forward.1} parent=11 // pred_check
          %p317 = pneg %p192
        $region38: #{forward.1} parent=11 // pred_check_branch
          %319 = sbr.rel (%p317) target = $region40
        $region39: #{forward.1} parent=11 // pred_region
          _
        $region40: #{forward.1} parent=11 // pred_fallthru
          _
      $region12: #{forward.1} parent=5 // pred_fallthru
        _
      %p320 = scmp.lt.s32.totalorder %s19, 2
      // Predicated region
      $region41: #{forward.1} parent=5 // pred_check
        %p321 = pneg %p320
      $region42: #{forward.1} parent=5 // pred_check_branch
        %323 = sbr.rel (%p321) target = $region44
      $region43: #{forward.1} parent=5 // pred_region
        // Predicated region
        $region45: #{forward.1} parent=43 // pred_check
          %p324 = pneg %p39
        $region46: #{forward.1} parent=43 // pred_check_branch
          %326 = sbr.rel (%p324) target = $region48
        $region47: #{forward.1} parent=43 // pred_region
          %p327 = scmp.lt.s32.totalorder %s19, 1
          %s328 = scalar_select %p327, %s19, 1
          %s329 = smul.addr %s328, 16
          %s330 = smul.addr %s329, 8
          %s331 = scalar_lea.vmem %s0, %s330
        $region48: #{forward.1} parent=43 // pred_fallthru
          _
      $region44: #{forward.1} parent=5 // pred_fallthru
        _
      %p332 = scmp.le.s32.totalorder 1, %s19
      %p333 = scmp.lt.s32.totalorder %s19, 3
      %p334 = pnand %p332, %p333
      %p335 = pneg %p334
      // Predicated region
      $region49: #{forward.1} parent=5 // pred_check
        _
      $region50: #{forward.1} parent=5 // pred_check_branch
        %337 = sbr.rel (%p334) target = $region52
      $region51: #{forward.1} parent=5 // pred_region
        %s338 = ssub.s32 %s19, 1
        // Predicated region
        $region53: #{forward.1} parent=51 // pred_check
          %p339 = pneg %p66
        $region54: #{forward.1} parent=51 // pred_check_branch
          %341 = sbr.rel (%p339) target = $region56
        $region55: #{forward.1} parent=51 // pred_region
          %342 = dma.done [#allocation3], 2048
        $region56: #{forward.1} parent=51 // pred_fallthru
          _
        // Predicated region
        $region57: #{forward.1} parent=51 // pred_check
          %p343 = pneg %p87
        $region58: #{forward.1} parent=51 // pred_check_branch
          %345 = sbr.rel (%p343) target = $region60
        $region59: #{forward.1} parent=51 // pred_region
          %346 = dma.done [#allocation5], 8192
        $region60: #{forward.1} parent=51 // pred_fallthru
          _
        // Predicated region
        $region61: #{forward.1} parent=51 // pred_check
          %p347 = pneg %p129
        $region62: #{forward.1} parent=51 // pred_check_branch
          %349 = sbr.rel (%p347) target = $region64
        $region63: #{forward.1} parent=51 // pred_region
          %350 = dma.done [#allocation5], 65536
        $region64: #{forward.1} parent=51 // pred_fallthru
          _
        // Predicated region
        $region65: #{forward.1} parent=51 // pred_check
          %p351 = pneg %p171
        $region66: #{forward.1} parent=51 // pred_check_branch
          %353 = sbr.rel (%p351) target = $region68
        $region67: #{forward.1} parent=51 // pred_region
          %354 = dma.done [#allocation8], 8192
        $region68: #{forward.1} parent=51 // pred_fallthru
          _
        %p355 = scmp.lt.s32.totalorder %s24, 1
        %s356 = scalar_select %p355, %s24, 1
        %s357 = smul.addr %s356, 16
        %s358 = smul.addr %s357, 8
        %s359 = scalar_lea.vmem %s0, %s358
        %p360 = pneg %p45
        %p361 = pneg %p42
        %p362 = pneg %p66
        %p363 = pneg %p63
        %p364 = pneg %p87
        %p365 = pneg %p84
        %p366 = pneg %p108
        %p367 = pneg %p105
        %p368 = pneg %p129
        %p369 = pneg %p126
        %p370 = pneg %p150
        %p371 = pneg %p147
        %p372 = pneg %p171
        %p373 = pneg %p168
        %p374 = pneg %p192
        %p375 = pneg %p189
        %p376 = pneg %p218
        %p377 = pneg %p215
        %p378 = scmp.lt.s32.totalorder %s24, 1
        %s379 = scalar_select %p378, %s24, 1
        %s380 = smul.addr %s379, 16
        %s381 = smul.addr %s380, 8
        %s382 = scalar_lea.vmem %s8, %s381
        %p383 = pneg %p244
        %p384 = pneg %p241
        %p385 = scmp.lt.s32.totalorder %s24, 1
        %s386 = scalar_select %p385, %s24, 1
        %s387 = smul.addr %s386, 32
        %s388 = smul.addr %s387, 8
        %s389 = scalar_lea.vmem %s9, %s388
        %p390 = scmp.lt.s32.totalorder %s24, 1
        %s391 = scalar_select %p390, %s24, 1
        %s392 = smul.addr %s391, 16
        %s393 = smul.addr %s392, 8
        %s394 = scalar_lea.vmem %s0, %s393
        %p395 = scmp.lt.s32.totalorder %s24, 1
        %s396 = scalar_select %p395, %s24, 1
        %s397 = smul.addr %s396, 16
        %s398 = smul.addr %s397, 8
        %s399 = scalar_lea.vmem %s8, %s398
        %p400 = scmp.lt.s32.totalorder %s24, 1
        %s401 = scalar_select %p400, %s24, 1
        %s402 = smul.addr %s401, 32
        %s403 = smul.addr %s402, 8
        %s404 = scalar_lea.vmem %s9, %s403
        %v405 = vld [vmem:[#allocation2] sm:$0xff]
        %v406 = vld [vmem:[#allocation2 + $0x8] sm:$0xff]
        %v407 = vld [vmem:[#allocation2 + $0x10] sm:$0xff]
        %v408 = vld [vmem:[#allocation2 + $0x18] sm:$0xff]
        %v409 = vld [vmem:[#allocation2 + $0x20] sm:$0xff]
        %v410 = vld [vmem:[#allocation2 + $0x28] sm:$0xff]
        %v411 = vld [vmem:[#allocation2 + $0x30] sm:$0xff]
        %v412 = vld [vmem:[#allocation2 + $0x38] sm:$0xff]
        %v413 = vld [vmem:[#allocation2 + $0x40] sm:$0xff]
        %v414 = vld [vmem:[#allocation2 + $0x48] sm:$0xff]
        %v415 = vld [vmem:[#allocation2 + $0x50] sm:$0xff]
        %v416 = vld [vmem:[#allocation2 + $0x58] sm:$0xff]
        %v417 = vld [vmem:[#allocation2 + $0x60] sm:$0xff]
        %v418 = vld [vmem:[#allocation2 + $0x68] sm:$0xff]
        %v419 = vld [vmem:[#allocation2 + $0x70] sm:$0xff]
        %v420 = vld [vmem:[#allocation2 + $0x78] sm:$0xff]
        %v421 = vld [vmem:[%s394] sm:$0xff]
        %v422 = vld [vmem:[%s394 + $0x8] sm:$0xff]
        %v423 = vld [vmem:[%s394 + $0x10] sm:$0xff]
        %v424 = vld [vmem:[%s394 + $0x18] sm:$0xff]
        %v425 = vld [vmem:[%s394 + $0x20] sm:$0xff]
        %v426 = vld [vmem:[%s394 + $0x28] sm:$0xff]
        %v427 = vld [vmem:[%s394 + $0x30] sm:$0xff]
        %v428 = vld [vmem:[%s394 + $0x38] sm:$0xff]
        %v429 = vld [vmem:[%s394 + $0x40] sm:$0xff]
        %v430 = vld [vmem:[%s394 + $0x48] sm:$0xff]
        %v431 = vld [vmem:[%s394 + $0x50] sm:$0xff]
        %v432 = vld [vmem:[%s394 + $0x58] sm:$0xff]
        %v433 = vld [vmem:[%s394 + $0x60] sm:$0xff]
        %v434 = vld [vmem:[%s394 + $0x68] sm:$0xff]
        %v435 = vld [vmem:[%s394 + $0x70] sm:$0xff]
        %v436 = vld [vmem:[%s394 + $0x78] sm:$0xff]
        %v437 = vld [vmem:[#allocation4] sm:$0xff]
        %v438 = vld [vmem:[#allocation4 + $0x8] sm:$0xff]
        %v439 = vld [vmem:[#allocation4 + $0x10] sm:$0xff]
        %v440 = vld [vmem:[#allocation4 + $0x18] sm:$0xff]
        %v441 = vld [vmem:[#allocation4 + $0x20] sm:$0xff]
        %v442 = vld [vmem:[#allocation4 + $0x28] sm:$0xff]
        %v443 = vld [vmem:[#allocation4 + $0x30] sm:$0xff]
        %v444 = vld [vmem:[#allocation4 + $0x38] sm:$0xff]
        %v445 = vld [vmem:[#allocation4 + $0x40] sm:$0xff]
        %v446 = vld [vmem:[#allocation4 + $0x48] sm:$0xff]
        %v447 = vld [vmem:[#allocation4 + $0x50] sm:$0xff]
        %v448 = vld [vmem:[#allocation4 + $0x58] sm:$0xff]
        %v449 = vld [vmem:[#allocation4 + $0x60] sm:$0xff]
        %v450 = vld [vmem:[#allocation4 + $0x68] sm:$0xff]
        %v451 = vld [vmem:[#allocation4 + $0x70] sm:$0xff]
        %v452 = vld [vmem:[#allocation4 + $0x78] sm:$0xff]
        %v453 = vld [vmem:[#allocation4 + $0x80] sm:$0xff]
        %v454 = vld [vmem:[#allocation4 + $0x88] sm:$0xff]
        %v455 = vld [vmem:[#allocation4 + $0x90] sm:$0xff]
        %v456 = vld [vmem:[#allocation4 + $0x98] sm:$0xff]
        %v457 = vld [vmem:[#allocation4 + $0xa0] sm:$0xff]
        %v458 = vld [vmem:[#allocation4 + $0xa8] sm:$0xff]
        %v459 = vld [vmem:[#allocation4 + $0xb0] sm:$0xff]
        %v460 = vld [vmem:[#allocation4 + $0xb8] sm:$0xff]
        %v461 = vld [vmem:[#allocation4 + $0xc0] sm:$0xff]
        %v462 = vld [vmem:[#allocation4 + $0xc8] sm:$0xff]
        %v463 = vld [vmem:[#allocation4 + $0xd0] sm:$0xff]
        %v464 = vld [vmem:[#allocation4 + $0xd8] sm:$0xff]
        %v465 = vld [vmem:[#allocation4 + $0xe0] sm:$0xff]
        %v466 = vld [vmem:[#allocation4 + $0xe8] sm:$0xff]
        %v467 = vld [vmem:[#allocation4 + $0xf0] sm:$0xff]
        %v468 = vld [vmem:[#allocation4 + $0xf8] sm:$0xff]
        %v469 = vld [vmem:[#allocation4 + $0x100] sm:$0xff]
        %v470 = vld [vmem:[#allocation4 + $0x108] sm:$0xff]
        %v471 = vld [vmem:[#allocation4 + $0x110] sm:$0xff]
        %v472 = vld [vmem:[#allocation4 + $0x118] sm:$0xff]
        %v473 = vld [vmem:[#allocation4 + $0x120] sm:$0xff]
        %v474 = vld [vmem:[#allocation4 + $0x128] sm:$0xff]
        %v475 = vld [vmem:[#allocation4 + $0x130] sm:$0xff]
        %v476 = vld [vmem:[#allocation4 + $0x138] sm:$0xff]
        %v477 = vld [vmem:[#allocation4 + $0x140] sm:$0xff]
        %v478 = vld [vmem:[#allocation4 + $0x148] sm:$0xff]
        %v479 = vld [vmem:[#allocation4 + $0x150] sm:$0xff]
        %v480 = vld [vmem:[#allocation4 + $0x158] sm:$0xff]
        %v481 = vld [vmem:[#allocation4 + $0x160] sm:$0xff]
        %v482 = vld [vmem:[#allocation4 + $0x168] sm:$0xff]
        %v483 = vld [vmem:[#allocation4 + $0x170] sm:$0xff]
        %v484 = vld [vmem:[#allocation4 + $0x178] sm:$0xff]
        %v485 = vld [vmem:[#allocation4 + $0x180] sm:$0xff]
        %v486 = vld [vmem:[#allocation4 + $0x188] sm:$0xff]
        %v487 = vld [vmem:[#allocation4 + $0x190] sm:$0xff]
        %v488 = vld [vmem:[#allocation4 + $0x198] sm:$0xff]
        %v489 = vld [vmem:[#allocation4 + $0x1a0] sm:$0xff]
        %v490 = vld [vmem:[#allocation4 + $0x1a8] sm:$0xff]
        %v491 = vld [vmem:[#allocation4 + $0x1b0] sm:$0xff]
        %v492 = vld [vmem:[#allocation4 + $0x1b8] sm:$0xff]
        %v493 = vld [vmem:[#allocation4 + $0x1c0] sm:$0xff]
        %v494 = vld [vmem:[#allocation4 + $0x1c8] sm:$0xff]
        %v495 = vld [vmem:[#allocation4 + $0x1d0] sm:$0xff]
        %v496 = vld [vmem:[#allocation4 + $0x1d8] sm:$0xff]
        %v497 = vld [vmem:[#allocation4 + $0x1e0] sm:$0xff]
        %v498 = vld [vmem:[#allocation4 + $0x1e8] sm:$0xff]
        %v499 = vld [vmem:[#allocation4 + $0x1f0] sm:$0xff]
        %v500 = vld [vmem:[#allocation4 + $0x1f8] sm:$0xff]
        %v501 = vld [vmem:[%s3] sm:$0x3]
        %502 = vmatprep.subr.mxu0 0.0
        %503 = vmatpush1.msra.mxu0 %v421
        %504 = vmatprep.subr.mxu0 0.0
        %505 = vmatpush1.msra.mxu0 %v422
        %506 = vmatprep.subr.mxu0 0.0
        %507 = vmatpush1.msra.mxu0 %v423
        %508 = vmatprep.subr.mxu0 0.0
        %509 = vmatpush1.msra.mxu0 %v424
        %510 = vmatprep.subr.mxu0 0.0
        %511 = vmatpush1.msra.mxu0 %v425
        %512 = vmatprep.subr.mxu0 0.0
        %513 = vmatpush1.msra.mxu0 %v426
        %514 = vmatprep.subr.mxu0 0.0
        %515 = vmatpush1.msra.mxu0 %v427
        %516 = vmatprep.subr.mxu0 0.0
        %517 = vmatpush1.msra.mxu0 %v428
        %518 = vmatprep.subr.mxu0 0.0
        %519 = vmatpush1.msra.mxu0 %v429
        %520 = vmatprep.subr.mxu0 0.0
        %521 = vmatpush1.msra.mxu0 %v430
        %522 = vmatprep.subr.mxu0 0.0
        %523 = vmatpush1.msra.mxu0 %v431
        %524 = vmatprep.subr.mxu0 0.0
        %525 = vmatpush1.msra.mxu0 %v432
        %526 = vmatprep.subr.mxu0 0.0
        %527 = vmatpush1.msra.mxu0 %v433
        %528 = vmatprep.subr.mxu0 0.0
        %529 = vmatpush1.msra.mxu0 %v434
        %530 = vmatprep.subr.mxu0 0.0
        %531 = vmatpush1.msra.mxu0 %v435
        %532 = vmatprep.subr.mxu0 0.0
        %533 = vmatpush1.msra.mxu0 %v436
        %534 = vmatprep.subr.mxu0 0.0
        %535 = vmatpush1.msra.mxu0 0.0
        %536 = vmatprep.subr.mxu0 0.0
        %537 = vmatpush1.msra.mxu0 0.0
        %538 = vmatprep.subr.mxu0 0.0
        %539 = vmatpush1.msra.mxu0 0.0
        %540 = vmatprep.subr.mxu0 0.0
        %541 = vmatpush1.msra.mxu0 0.0
        %542 = vmatprep.subr.mxu0 0.0
        %543 = vmatpush1.msra.mxu0 0.0
        %544 = vmatprep.subr.mxu0 0.0
        %545 = vmatpush1.msra.mxu0 0.0
        %546 = vmatprep.subr.mxu0 0.0
        %547 = vmatpush1.msra.mxu0 0.0
        %548 = vmatprep.subr.mxu0 0.0
        %549 = vmatpush1.msra.mxu0 0.0
        %550 = vmatprep.subr.mxu0 0.0
        %551 = vmatpush1.msra.mxu0 0.0
        %552 = vmatprep.subr.mxu0 0.0
        %553 = vmatpush1.msra.mxu0 0.0
        %554 = vmatprep.subr.mxu0 0.0
        %555 = vmatpush1.msra.mxu0 0.0
        %556 = vmatprep.subr.mxu0 0.0
        %557 = vmatpush1.msra.mxu0 0.0
        %558 = vmatprep.subr.mxu0 0.0
        %559 = vmatpush1.msra.mxu0 0.0
        %560 = vmatprep.subr.mxu0 0.0
        %561 = vmatpush1.msra.mxu0 0.0
        %562 = vmatprep.subr.mxu0 0.0
        %563 = vmatpush1.msra.mxu0 0.0
        %564 = vmatprep.subr.mxu0 0.0
        %565 = vmatpush1.msra.mxu0 0.0
        %566 = vmatprep.mubr.f32.mxu0 0.0
        %567 = vmatmul.mubr.f32.gmra.mrb[0].mxu0 %v405
        %v568 = vpop.f32.mrb[0].mxu0
        %v569 = vadd.f32 0.0, %v568
        %v570 = vpop.f32.mrb[0].mxu0
        %571 = vmatprep.mubr.f32.mxu0 0.0
        %572 = vmatmul.mubr.f32.gmra.mrb[0].mxu0 %v406
        %v573 = vpop.f32.mrb[0].mxu0
        %v574 = vadd.f32 0.0, %v573
        %v575 = vpop.f32.mrb[0].mxu0
        %576 = vmatprep.mubr.f32.mxu0 0.0
        %577 = vmatmul.mubr.f32.gmra.mrb[0].mxu0 %v407
        %v578 = vpop.f32.mrb[0].mxu0
        %v579 = vadd.f32 0.0, %v578
        %v580 = vpop.f32.mrb[0].mxu0
        %581 = vmatprep.mubr.f32.mxu0 0.0
        %582 = vmatmul.mubr.f32.gmra.mrb[0].mxu0 %v408
        %v583 = vpop.f32.mrb[0].mxu0
        %v584 = vadd.f32 0.0, %v583
        %v585 = vpop.f32.mrb[0].mxu0
        %586 = vmatprep.mubr.f32.mxu0 0.0
        %587 = vmatmul.mubr.f32.gmra.mrb[0].mxu0 %v409
        %v588 = vpop.f32.mrb[0].mxu0
        %v589 = vadd.f32 0.0, %v588
        %v590 = vpop.f32.mrb[0].mxu0
        %591 = vmatprep.mubr.f32.mxu0 0.0
        %592 = vmatmul.mubr.f32.gmra.mrb[0].mxu0 %v410
        %v593 = vpop.f32.mrb[0].mxu0
        %v594 = vadd.f32 0.0, %v593
        %v595 = vpop.f32.mrb[0].mxu0
        %596 = vmatprep.mubr.f32.mxu0 0.0
        %597 = vmatmul.mubr.f32.gmra.mrb[0].mxu0 %v411
        %v598 = vpop.f32.mrb[0].mxu0
        %v599 = vadd.f32 0.0, %v598
        %v600 = vpop.f32.mrb[0].mxu0
        %601 = vmatprep.mubr.f32.mxu0 0.0
        %602 = vmatmul.mubr.f32.gmra.mrb[0].mxu0 %v412
        %v603 = vpop.f32.mrb[0].mxu0
        %v604 = vadd.f32 0.0, %v603
        %v605 = vpop.f32.mrb[0].mxu0
        %606 = vmatprep.mubr.f32.mxu0 0.0
        %607 = vmatmul.mubr.f32.gmra.mrb[0].mxu0 %v413
        %v608 = vpop.f32.mrb[0].mxu0
        %v609 = vadd.f32 0.0, %v608
        %v610 = vpop.f32.mrb[0].mxu0
        %611 = vmatprep.mubr.f32.mxu0 0.0
        %612 = vmatmul.mubr.f32.gmra.mrb[0].mxu0 %v414
        %v613 = vpop.f32.mrb[0].mxu0
        %v614 = vadd.f32 0.0, %v613
        %v615 = vpop.f32.mrb[0].mxu0
        %616 = vmatprep.mubr.f32.mxu0 0.0
        %617 = vmatmul.mubr.f32.gmra.mrb[0].mxu0 %v415
        %v618 = vpop.f32.mrb[0].mxu0
        %v619 = vadd.f32 0.0, %v618
        %v620 = vpop.f32.mrb[0].mxu0
        %621 = vmatprep.mubr.f32.mxu0 0.0
        %622 = vmatmul.mubr.f32.gmra.mrb[0].mxu0 %v416
        %v623 = vpop.f32.mrb[0].mxu0
        %v624 = vadd.f32 0.0, %v623
        %v625 = vpop.f32.mrb[0].mxu0
        %626 = vmatprep.mubr.f32.mxu0 0.0
        %627 = vmatmul.mubr.f32.gmra.mrb[0].mxu0 %v417
        %v628 = vpop.f32.mrb[0].mxu0
        %v629 = vadd.f32 0.0, %v628
        %v630 = vpop.f32.mrb[0].mxu0
        %631 = vmatprep.mubr.f32.mxu0 0.0
        %632 = vmatmul.mubr.f32.gmra.mrb[0].mxu0 %v418
        %v633 = vpop.f32.mrb[0].mxu0
        %v634 = vadd.f32 0.0, %v633
        %v635 = vpop.f32.mrb[0].mxu0
        %636 = vmatprep.mubr.f32.mxu0 0.0
        %637 = vmatmul.mubr.f32.gmra.mrb[0].mxu0 %v419
        %v638 = vpop.f32.mrb[0].mxu0
        %v639 = vadd.f32 0.0, %v638
        %v640 = vpop.f32.mrb[0].mxu0
        %641 = vmatprep.mubr.f32.mxu0 0.0
        %642 = vmatmul.mubr.f32.gmra.mrb[0].mxu0 %v420
        %v643 = vpop.f32.mrb[0].mxu0
        %v644 = vadd.f32 0.0, %v643
        %v645 = vpop.f32.mrb[0].mxu0
        %646 = vdwg.mxu0
        %v648 = vlaneseq
        %v649 = vshrl.u32 %v648, 7
        %v650 = vsub.s32 0, %v649
        %v651 = vrot.slane %v501, %v650
        %v652 = vlaneseq
        %v653 = vshrl.u32 %v652, 7
        %v654 = vsub.s32 1, %v653
        %v655 = vrot.slane %v501, %v654
        %658 = vmatprep.subr.mxu0 %v438
        %659 = vmatpush1.msra.mxu0 %v437
        %660 = vmatprep.subr.mxu0 %v440
        %661 = vmatpush1.msra.mxu0 %v439
        %662 = vmatprep.subr.mxu0 %v442
        %663 = vmatpush1.msra.mxu0 %v441
        %664 = vmatprep.subr.mxu0 %v444
        %665 = vmatpush1.msra.mxu0 %v443
        %666 = vmatprep.subr.mxu0 %v446
        %667 = vmatpush1.msra.mxu0 %v445
        %668 = vmatprep.subr.mxu0 %v448
        %669 = vmatpush1.msra.mxu0 %v447
        %670 = vmatprep.subr.mxu0 %v450
        %671 = vmatpush1.msra.mxu0 %v449
        %672 = vmatprep.subr.mxu0 %v452
        %673 = vmatpush1.msra.mxu0 %v451
        %674 = vmatprep.subr.mxu0 %v454
        %675 = vmatpush1.msra.mxu0 %v453
        %676 = vmatprep.subr.mxu0 %v456
        %677 = vmatpush1.msra.mxu0 %v455
        %678 = vmatprep.subr.mxu0 %v458
        %679 = vmatpush1.msra.mxu0 %v457
        %680 = vmatprep.subr.mxu0 %v460
        %681 = vmatpush1.msra.mxu0 %v459
        %682 = vmatprep.subr.mxu0 %v462
        %683 = vmatpush1.msra.mxu0 %v461
        %684 = vmatprep.subr.mxu0 %v464
        %685 = vmatpush1.msra.mxu0 %v463
        %686 = vmatprep.subr.mxu0 %v466
        %687 = vmatpush1.msra.mxu0 %v465
        %688 = vmatprep.subr.mxu0 %v468
        %689 = vmatpush1.msra.mxu0 %v467
        %690 = vmatprep.subr.mxu0 %v470
        %691 = vmatpush1.msra.mxu0 %v469
        %692 = vmatprep.subr.mxu0 %v472
        %693 = vmatpush1.msra.mxu0 %v471
        %694 = vmatprep.subr.mxu0 %v474
        %695 = vmatpush1.msra.mxu0 %v473
        %696 = vmatprep.subr.mxu0 %v476
        %697 = vmatpush1.msra.mxu0 %v475
        %698 = vmatprep.subr.mxu0 %v478
        %699 = vmatpush1.msra.mxu0 %v477
        %700 = vmatprep.subr.mxu0 %v480
        %701 = vmatpush1.msra.mxu0 %v479
        %702 = vmatprep.subr.mxu0 %v482
        %703 = vmatpush1.msra.mxu0 %v481
        %704 = vmatprep.subr.mxu0 %v484
        %705 = vmatpush1.msra.mxu0 %v483
        %706 = vmatprep.subr.mxu0 %v486
        %707 = vmatpush1.msra.mxu0 %v485
        %708 = vmatprep.subr.mxu0 %v488
        %709 = vmatpush1.msra.mxu0 %v487
        %710 = vmatprep.subr.mxu0 %v490
        %711 = vmatpush1.msra.mxu0 %v489
        %712 = vmatprep.subr.mxu0 %v492
        %713 = vmatpush1.msra.mxu0 %v491
        %714 = vmatprep.subr.mxu0 %v494
        %715 = vmatpush1.msra.mxu0 %v493
        %716 = vmatprep.subr.mxu0 %v496
        %717 = vmatpush1.msra.mxu0 %v495
        %718 = vmatprep.subr.mxu0 %v498
        %719 = vmatpush1.msra.mxu0 %v497
        %720 = vmatprep.subr.mxu0 %v500
        %721 = vmatpush1.msra.mxu0 %v499
        %722 = vmatprep.mubr.f32.mxu0 %v421
        %723 = vmatmul.mubr.f32.gmra.mrb[0].mxu0 %v569
        %v724 = vpop.f32.mrb[0].mxu0
        %v725 = vadd.f32 %v651, %v724
        %v726 = vpop.f32.mrb[0].mxu0
        %v727 = vadd.f32 %v655, %v726
        %728 = vmatprep.mubr.f32.mxu0 %v422
        %729 = vmatmul.mubr.f32.gmra.mrb[0].mxu0 %v574
        %v730 = vpop.f32.mrb[0].mxu0
        %v731 = vadd.f32 %v651, %v730
        %v732 = vpop.f32.mrb[0].mxu0
        %v733 = vadd.f32 %v655, %v732
        %734 = vmatprep.mubr.f32.mxu0 %v423
        %735 = vmatmul.mubr.f32.gmra.mrb[0].mxu0 %v579
        %v736 = vpop.f32.mrb[0].mxu0
        %v737 = vadd.f32 %v651, %v736
        %v738 = vpop.f32.mrb[0].mxu0
        %v739 = vadd.f32 %v655, %v738
        %740 = vmatprep.mubr.f32.mxu0 %v424
        %741 = vmatmul.mubr.f32.gmra.mrb[0].mxu0 %v584
        %v742 = vpop.f32.mrb[0].mxu0
        %v743 = vadd.f32 %v651, %v742
        %v744 = vpop.f32.mrb[0].mxu0
        %v745 = vadd.f32 %v655, %v744
        %746 = vmatprep.mubr.f32.mxu0 %v425
        %747 = vmatmul.mubr.f32.gmra.mrb[0].mxu0 %v589
        %v748 = vpop.f32.mrb[0].mxu0
        %v749 = vadd.f32 %v651, %v748
        %v750 = vpop.f32.mrb[0].mxu0
        %v751 = vadd.f32 %v655, %v750
        %752 = vmatprep.mubr.f32.mxu0 %v426
        %753 = vmatmul.mubr.f32.gmra.mrb[0].mxu0 %v594
        %v754 = vpop.f32.mrb[0].mxu0
        %v755 = vadd.f32 %v651, %v754
        %v756 = vpop.f32.mrb[0].mxu0
        %v757 = vadd.f32 %v655, %v756
        %758 = vmatprep.mubr.f32.mxu0 %v427
        %759 = vmatmul.mubr.f32.gmra.mrb[0].mxu0 %v599
        %v760 = vpop.f32.mrb[0].mxu0
        %v761 = vadd.f32 %v651, %v760
        %v762 = vpop.f32.mrb[0].mxu0
        %v763 = vadd.f32 %v655, %v762
        %764 = vmatprep.mubr.f32.mxu0 %v428
        %765 = vmatmul.mubr.f32.gmra.mrb[0].mxu0 %v604
        %v766 = vpop.f32.mrb[0].mxu0
        %v767 = vadd.f32 %v651, %v766
        %v768 = vpop.f32.mrb[0].mxu0
        %v769 = vadd.f32 %v655, %v768
        %770 = vmatprep.mubr.f32.mxu0 %v429
        %771 = vmatmul.mubr.f32.gmra.mrb[0].mxu0 %v609
        %v772 = vpop.f32.mrb[0].mxu0
        %v773 = vadd.f32 %v651, %v772
        %v774 = vpop.f32.mrb[0].mxu0
        %v775 = vadd.f32 %v655, %v774
        %776 = vmatprep.mubr.f32.mxu0 %v430
        %777 = vmatmul.mubr.f32.gmra.mrb[0].mxu0 %v614
        %v778 = vpop.f32.mrb[0].mxu0
        %v779 = vadd.f32 %v651, %v778
        %v780 = vpop.f32.mrb[0].mxu0
        %v781 = vadd.f32 %v655, %v780
        %782 = vmatprep.mubr.f32.mxu0 %v431
        %783 = vmatmul.mubr.f32.gmra.mrb[0].mxu0 %v619
        %v784 = vpop.f32.mrb[0].mxu0
        %v785 = vadd.f32 %v651, %v784
        %v786 = vpop.f32.mrb[0].mxu0
        %v787 = vadd.f32 %v655, %v786
        %788 = vmatprep.mubr.f32.mxu0 %v432
        %789 = vmatmul.mubr.f32.gmra.mrb[0].mxu0 %v624
        %v790 = vpop.f32.mrb[0].mxu0
        %v791 = vadd.f32 %v651, %v790
        %v792 = vpop.f32.mrb[0].mxu0
        %v793 = vadd.f32 %v655, %v792
        %794 = vmatprep.mubr.f32.mxu0 %v433
        %795 = vmatmul.mubr.f32.gmra.mrb[0].mxu0 %v629
        %v796 = vpop.f32.mrb[0].mxu0
        %v797 = vadd.f32 %v651, %v796
        %v798 = vpop.f32.mrb[0].mxu0
        %v799 = vadd.f32 %v655, %v798
        %800 = vmatprep.mubr.f32.mxu0 %v434
        %801 = vmatmul.mubr.f32.gmra.mrb[0].mxu0 %v634
        %v802 = vpop.f32.mrb[0].mxu0
        %v803 = vadd.f32 %v651, %v802
        %v804 = vpop.f32.mrb[0].mxu0
        %v805 = vadd.f32 %v655, %v804
        %806 = vmatprep.mubr.f32.mxu0 %v435
        %807 = vmatmul.mubr.f32.gmra.mrb[0].mxu0 %v639
        %v808 = vpop.f32.mrb[0].mxu0
        %v809 = vadd.f32 %v651, %v808
        %v810 = vpop.f32.mrb[0].mxu0
        %v811 = vadd.f32 %v655, %v810
        %812 = vmatprep.mubr.f32.mxu0 %v436
        %813 = vmatmul.mubr.f32.gmra.mrb[0].mxu0 %v644
        %v814 = vpop.f32.mrb[0].mxu0
        %v815 = vadd.f32 %v651, %v814
        %v816 = vpop.f32.mrb[0].mxu0
        %v817 = vadd.f32 %v655, %v816
        %818 = vdwg.mxu0
        %v819 = vmax.f32 %v725, 0.0
        %v820 = vmax.f32 %v727, 0.0
        %v821 = vmax.f32 %v731, 0.0
        %v822 = vmax.f32 %v733, 0.0
        %v823 = vmax.f32 %v737, 0.0
        %v824 = vmax.f32 %v739, 0.0
        %v825 = vmax.f32 %v743, 0.0
        %v826 = vmax.f32 %v745, 0.0
        %v827 = vmax.f32 %v749, 0.0
        %v828 = vmax.f32 %v751, 0.0
        %v829 = vmax.f32 %v755, 0.0
        %v830 = vmax.f32 %v757, 0.0
        %v831 = vmax.f32 %v761, 0.0
        %v832 = vmax.f32 %v763, 0.0
        %v833 = vmax.f32 %v767, 0.0
        %v834 = vmax.f32 %v769, 0.0
        %v835 = vmax.f32 %v773, 0.0
        %v836 = vmax.f32 %v775, 0.0
        %v837 = vmax.f32 %v779, 0.0
        %v838 = vmax.f32 %v781, 0.0
        %v839 = vmax.f32 %v785, 0.0
        %v840 = vmax.f32 %v787, 0.0
        %v841 = vmax.f32 %v791, 0.0
        %v842 = vmax.f32 %v793, 0.0
        %v843 = vmax.f32 %v797, 0.0
        %v844 = vmax.f32 %v799, 0.0
        %v845 = vmax.f32 %v803, 0.0
        %v846 = vmax.f32 %v805, 0.0
        %v847 = vmax.f32 %v809, 0.0
        %v848 = vmax.f32 %v811, 0.0
        %v849 = vmax.f32 %v815, 0.0
        %v850 = vmax.f32 %v817, 0.0
        %v851 = vld [vmem:[#allocation6] sm:$0xff]
        %v852 = vld [vmem:[#allocation6 + $0x8] sm:$0xff]
        %v853 = vld [vmem:[#allocation6 + $0x10] sm:$0xff]
        %v854 = vld [vmem:[#allocation6 + $0x18] sm:$0xff]
        %v855 = vld [vmem:[#allocation6 + $0x20] sm:$0xff]
        %v856 = vld [vmem:[#allocation6 + $0x28] sm:$0xff]
        %v857 = vld [vmem:[#allocation6 + $0x30] sm:$0xff]
        %v858 = vld [vmem:[#allocation6 + $0x38] sm:$0xff]
        %v859 = vld [vmem:[#allocation6 + $0x40] sm:$0xff]
        %v860 = vld [vmem:[#allocation6 + $0x48] sm:$0xff]
        %v861 = vld [vmem:[#allocation6 + $0x50] sm:$0xff]
        %v862 = vld [vmem:[#allocation6 + $0x58] sm:$0xff]
        %v863 = vld [vmem:[#allocation6 + $0x60] sm:$0xff]
        %v864 = vld [vmem:[#allocation6 + $0x68] sm:$0xff]
        %v865 = vld [vmem:[#allocation6 + $0x70] sm:$0xff]
        %v866 = vld [vmem:[#allocation6 + $0x78] sm:$0xff]
        %v867 = vld [vmem:[#allocation6 + $0x80] sm:$0xff]
        %v868 = vld [vmem:[#allocation6 + $0x88] sm:$0xff]
        %v869 = vld [vmem:[#allocation6 + $0x90] sm:$0xff]
        %v870 = vld [vmem:[#allocation6 + $0x98] sm:$0xff]
        %v871 = vld [vmem:[#allocation6 + $0xa0] sm:$0xff]
        %v872 = vld [vmem:[#allocation6 + $0xa8] sm:$0xff]
        %v873 = vld [vmem:[#allocation6 + $0xb0] sm:$0xff]
        %v874 = vld [vmem:[#allocation6 + $0xb8] sm:$0xff]
        %v875 = vld [vmem:[#allocation6 + $0xc0] sm:$0xff]
        %v876 = vld [vmem:[#allocation6 + $0xc8] sm:$0xff]
        %v877 = vld [vmem:[#allocation6 + $0xd0] sm:$0xff]
        %v878 = vld [vmem:[#allocation6 + $0xd8] sm:$0xff]
        %v879 = vld [vmem:[#allocation6 + $0xe0] sm:$0xff]
        %v880 = vld [vmem:[#allocation6 + $0xe8] sm:$0xff]
        %v881 = vld [vmem:[#allocation6 + $0xf0] sm:$0xff]
        %v882 = vld [vmem:[#allocation6 + $0xf8] sm:$0xff]
        %v883 = vld [vmem:[#allocation6 + $0x100] sm:$0xff]
        %v884 = vld [vmem:[#allocation6 + $0x108] sm:$0xff]
        %v885 = vld [vmem:[#allocation6 + $0x110] sm:$0xff]
        %v886 = vld [vmem:[#allocation6 + $0x118] sm:$0xff]
        %v887 = vld [vmem:[#allocation6 + $0x120] sm:$0xff]
        %v888 = vld [vmem:[#allocation6 + $0x128] sm:$0xff]
        %v889 = vld [vmem:[#allocation6 + $0x130] sm:$0xff]
        %v890 = vld [vmem:[#allocation6 + $0x138] sm:$0xff]
        %v891 = vld [vmem:[#allocation6 + $0x140] sm:$0xff]
        %v892 = vld [vmem:[#allocation6 + $0x148] sm:$0xff]
        %v893 = vld [vmem:[#allocation6 + $0x150] sm:$0xff]
        %v894 = vld [vmem:[#allocation6 + $0x158] sm:$0xff]
        %v895 = vld [vmem:[#allocation6 + $0x160] sm:$0xff]
        %v896 = vld [vmem:[#allocation6 + $0x168] sm:$0xff]
        %v897 = vld [vmem:[#allocation6 + $0x170] sm:$0xff]
        %v898 = vld [vmem:[#allocation6 + $0x178] sm:$0xff]
        %v899 = vld [vmem:[#allocation6 + $0x180] sm:$0xff]
        %v900 = vld [vmem:[#allocation6 + $0x188] sm:$0xff]
        %v901 = vld [vmem:[#allocation6 + $0x190] sm:$0xff]
        %v902 = vld [vmem:[#allocation6 + $0x198] sm:$0xff]
        %v903 = vld [vmem:[#allocation6 + $0x1a0] sm:$0xff]
        %v904 = vld [vmem:[#allocation6 + $0x1a8] sm:$0xff]
        %v905 = vld [vmem:[#allocation6 + $0x1b0] sm:$0xff]
        %v906 = vld [vmem:[#allocation6 + $0x1b8] sm:$0xff]
        %v907 = vld [vmem:[#allocation6 + $0x1c0] sm:$0xff]
        %v908 = vld [vmem:[#allocation6 + $0x1c8] sm:$0xff]
        %v909 = vld [vmem:[#allocation6 + $0x1d0] sm:$0xff]
        %v910 = vld [vmem:[#allocation6 + $0x1d8] sm:$0xff]
        %v911 = vld [vmem:[#allocation6 + $0x1e0] sm:$0xff]
        %v912 = vld [vmem:[#allocation6 + $0x1e8] sm:$0xff]
        %v913 = vld [vmem:[#allocation6 + $0x1f0] sm:$0xff]
        %v914 = vld [vmem:[#allocation6 + $0x1f8] sm:$0xff]
        %v915 = vld [vmem:[#allocation6 + $0x200] sm:$0xff]
        %v916 = vld [vmem:[#allocation6 + $0x208] sm:$0xff]
        %v917 = vld [vmem:[#allocation6 + $0x210] sm:$0xff]
        %v918 = vld [vmem:[#allocation6 + $0x218] sm:$0xff]
        %v919 = vld [vmem:[#allocation6 + $0x220] sm:$0xff]
        %v920 = vld [vmem:[#allocation6 + $0x228] sm:$0xff]
        %v921 = vld [vmem:[#allocation6 + $0x230] sm:$0xff]
        %v922 = vld [vmem:[#allocation6 + $0x238] sm:$0xff]
        %v923 = vld [vmem:[#allocation6 + $0x240] sm:$0xff]
        %v924 = vld [vmem:[#allocation6 + $0x248] sm:$0xff]
        %v925 = vld [vmem:[#allocation6 + $0x250] sm:$0xff]
        %v926 = vld [vmem:[#allocation6 + $0x258] sm:$0xff]
        %v927 = vld [vmem:[#allocation6 + $0x260] sm:$0xff]
        %v928 = vld [vmem:[#allocation6 + $0x268] sm:$0xff]
        %v929 = vld [vmem:[#allocation6 + $0x270] sm:$0xff]
        %v930 = vld [vmem:[#allocation6 + $0x278] sm:$0xff]
        %v931 = vld [vmem:[#allocation6 + $0x280] sm:$0xff]
        %v932 = vld [vmem:[#allocation6 + $0x288] sm:$0xff]
        %v933 = vld [vmem:[#allocation6 + $0x290] sm:$0xff]
        %v934 = vld [vmem:[#allocation6 + $0x298] sm:$0xff]
        %v935 = vld [vmem:[#allocation6 + $0x2a0] sm:$0xff]
        %v936 = vld [vmem:[#allocation6 + $0x2a8] sm:$0xff]
        %v937 = vld [vmem:[#allocation6 + $0x2b0] sm:$0xff]
        %v938 = vld [vmem:[#allocation6 + $0x2b8] sm:$0xff]
        %v939 = vld [vmem:[#allocation6 + $0x2c0] sm:$0xff]
        %v940 = vld [vmem:[#allocation6 + $0x2c8] sm:$0xff]
        %v941 = vld [vmem:[#allocation6 + $0x2d0] sm:$0xff]
        %v942 = vld [vmem:[#allocation6 + $0x2d8] sm:$0xff]
        %v943 = vld [vmem:[#allocation6 + $0x2e0] sm:$0xff]
        %v944 = vld [vmem:[#allocation6 + $0x2e8] sm:$0xff]
        %v945 = vld [vmem:[#allocation6 + $0x2f0] sm:$0xff]
        %v946 = vld [vmem:[#allocation6 + $0x2f8] sm:$0xff]
        %v947 = vld [vmem:[#allocation6 + $0x300] sm:$0xff]
        %v948 = vld [vmem:[#allocation6 + $0x308] sm:$0xff]
        %v949 = vld [vmem:[#allocation6 + $0x310] sm:$0xff]
        %v950 = vld [vmem:[#allocation6 + $0x318] sm:$0xff]
        %v951 = vld [vmem:[#allocation6 + $0x320] sm:$0xff]
        %v952 = vld [vmem:[#allocation6 + $0x328] sm:$0xff]
        %v953 = vld [vmem:[#allocation6 + $0x330] sm:$0xff]
        %v954 = vld [vmem:[#allocation6 + $0x338] sm:$0xff]
        %v955 = vld [vmem:[#allocation6 + $0x340] sm:$0xff]
        %v956 = vld [vmem:[#allocation6 + $0x348] sm:$0xff]
        %v957 = vld [vmem:[#allocation6 + $0x350] sm:$0xff]
        %v958 = vld [vmem:[#allocation6 + $0x358] sm:$0xff]
        %v959 = vld [vmem:[#allocation6 + $0x360] sm:$0xff]
        %v960 = vld [vmem:[#allocation6 + $0x368] sm:$0xff]
        %v961 = vld [vmem:[#allocation6 + $0x370] sm:$0xff]
        %v962 = vld [vmem:[#allocation6 + $0x378] sm:$0xff]
        %v963 = vld [vmem:[#allocation6 + $0x380] sm:$0xff]
        %v964 = vld [vmem:[#allocation6 + $0x388] sm:$0xff]
        %v965 = vld [vmem:[#allocation6 + $0x390] sm:$0xff]
        %v966 = vld [vmem:[#allocation6 + $0x398] sm:$0xff]
        %v967 = vld [vmem:[#allocation6 + $0x3a0] sm:$0xff]
        %v968 = vld [vmem:[#allocation6 + $0x3a8] sm:$0xff]
        %v969 = vld [vmem:[#allocation6 + $0x3b0] sm:$0xff]
        %v970 = vld [vmem:[#allocation6 + $0x3b8] sm:$0xff]
        %v971 = vld [vmem:[#allocation6 + $0x3c0] sm:$0xff]
        %v972 = vld [vmem:[#allocation6 + $0x3c8] sm:$0xff]
        %v973 = vld [vmem:[#allocation6 + $0x3d0] sm:$0xff]
        %v974 = vld [vmem:[#allocation6 + $0x3d8] sm:$0xff]
        %v975 = vld [vmem:[#allocation6 + $0x3e0] sm:$0xff]
        %v976 = vld [vmem:[#allocation6 + $0x3e8] sm:$0xff]
        %v977 = vld [vmem:[#allocation6 + $0x3f0] sm:$0xff]
        %v978 = vld [vmem:[#allocation6 + $0x3f8] sm:$0xff]
        %v979 = vld [vmem:[%s5] sm:$0x3]
        %980 = vmatprep.subr.mxu0 %v852
        %981 = vmatpush1.msra.mxu0 %v851
        %982 = vmatprep.subr.mxu0 %v856
        %983 = vmatpush1.msra.mxu0 %v855
        %984 = vmatprep.subr.mxu0 %v860
        %985 = vmatpush1.msra.mxu0 %v859
        %986 = vmatprep.subr.mxu0 %v864
        %987 = vmatpush1.msra.mxu0 %v863
        %988 = vmatprep.subr.mxu0 %v868
        %989 = vmatpush1.msra.mxu0 %v867
        %990 = vmatprep.subr.mxu0 %v872
        %991 = vmatpush1.msra.mxu0 %v871
        %992 = vmatprep.subr.mxu0 %v876
        %993 = vmatpush1.msra.mxu0 %v875
        %994 = vmatprep.subr.mxu0 %v880
        %995 = vmatpush1.msra.mxu0 %v879
        %996 = vmatprep.subr.mxu0 %v884
        %997 = vmatpush1.msra.mxu0 %v883
        %998 = vmatprep.subr.mxu0 %v888
        %999 = vmatpush1.msra.mxu0 %v887
        %1000 = vmatprep.subr.mxu0 %v892
        %1001 = vmatpush1.msra.mxu0 %v891
        %1002 = vmatprep.subr.mxu0 %v896
        %1003 = vmatpush1.msra.mxu0 %v895
        %1004 = vmatprep.subr.mxu0 %v900
        %1005 = vmatpush1.msra.mxu0 %v899
        %1006 = vmatprep.subr.mxu0 %v904
        %1007 = vmatpush1.msra.mxu0 %v903
        %1008 = vmatprep.subr.mxu0 %v908
        %1009 = vmatpush1.msra.mxu0 %v907
        %1010 = vmatprep.subr.mxu0 %v912
        %1011 = vmatpush1.msra.mxu0 %v911
        %1012 = vmatprep.subr.mxu0 %v916
        %1013 = vmatpush1.msra.mxu0 %v915
        %1014 = vmatprep.subr.mxu0 %v920
        %1015 = vmatpush1.msra.mxu0 %v919
        %1016 = vmatprep.subr.mxu0 %v924
        %1017 = vmatpush1.msra.mxu0 %v923
        %1018 = vmatprep.subr.mxu0 %v928
        %1019 = vmatpush1.msra.mxu0 %v927
        %1020 = vmatprep.subr.mxu0 %v932
        %1021 = vmatpush1.msra.mxu0 %v931
        %1022 = vmatprep.subr.mxu0 %v936
        %1023 = vmatpush1.msra.mxu0 %v935
        %1024 = vmatprep.subr.mxu0 %v940
        %1025 = vmatpush1.msra.mxu0 %v939
        %1026 = vmatprep.subr.mxu0 %v944
        %1027 = vmatpush1.msra.mxu0 %v943
        %1028 = vmatprep.subr.mxu0 %v948
        %1029 = vmatpush1.msra.mxu0 %v947
        %1030 = vmatprep.subr.mxu0 %v952
        %1031 = vmatpush1.msra.mxu0 %v951
        %1032 = vmatprep.subr.mxu0 %v956
        %1033 = vmatpush1.msra.mxu0 %v955
        %1034 = vmatprep.subr.mxu0 %v960
        %1035 = vmatpush1.msra.mxu0 %v959
        %1036 = vmatprep.subr.mxu0 %v964
        %1037 = vmatpush1.msra.mxu0 %v963
        %1038 = vmatprep.subr.mxu0 %v968
        %1039 = vmatpush1.msra.mxu0 %v967
        %1040 = vmatprep.subr.mxu0 %v972
        %1041 = vmatpush1.msra.mxu0 %v971
        %1042 = vmatprep.subr.mxu0 %v976
        %1043 = vmatpush1.msra.mxu0 %v975
        %1044 = vmatprep.mubr.f32.mxu0 %v820
        %1045 = vmatmul.mubr.f32.gmra.mrb[0].mxu0 %v819
        %v1046 = vpop.f32.mrb[0].mxu0
        %v1047 = vadd.f32 0.0, %v1046
        %v1048 = vpop.f32.mrb[0].mxu0
        %v1049 = vadd.f32 0.0, %v1048
        %1050 = vmatprep.mubr.f32.mxu0 %v822
        %1051 = vmatmul.mubr.f32.gmra.mrb[0].mxu0 %v821
        %v1052 = vpop.f32.mrb[0].mxu0
        %v1053 = vadd.f32 0.0, %v1052
        %v1054 = vpop.f32.mrb[0].mxu0
        %v1055 = vadd.f32 0.0, %v1054
        %1056 = vmatprep.mubr.f32.mxu0 %v824
        %1057 = vmatmul.mubr.f32.gmra.mrb[0].mxu0 %v823
        %v1058 = vpop.f32.mrb[0].mxu0
        %v1059 = vadd.f32 0.0, %v1058
        %v1060 = vpop.f32.mrb[0].mxu0
        %v1061 = vadd.f32 0.0, %v1060
        %1062 = vmatprep.mubr.f32.mxu0 %v826
        %1063 = vmatmul.mubr.f32.gmra.mrb[0].mxu0 %v825
        %v1064 = vpop.f32.mrb[0].mxu0
        %v1065 = vadd.f32 0.0, %v1064
        %v1066 = vpop.f32.mrb[0].mxu0
        %v1067 = vadd.f32 0.0, %v1066
        %1068 = vmatprep.mubr.f32.mxu0 %v828
        %1069 = vmatmul.mubr.f32.gmra.mrb[0].mxu0 %v827
        %v1070 = vpop.f32.mrb[0].mxu0
        %v1071 = vadd.f32 0.0, %v1070
        %v1072 = vpop.f32.mrb[0].mxu0
        %v1073 = vadd.f32 0.0, %v1072
        %1074 = vmatprep.mubr.f32.mxu0 %v830
        %1075 = vmatmul.mubr.f32.gmra.mrb[0].mxu0 %v829
        %v1076 = vpop.f32.mrb[0].mxu0
        %v1077 = vadd.f32 0.0, %v1076
        %v1078 = vpop.f32.mrb[0].mxu0
        %v1079 = vadd.f32 0.0, %v1078
        %1080 = vmatprep.mubr.f32.mxu0 %v832
        %1081 = vmatmul.mubr.f32.gmra.mrb[0].mxu0 %v831
        %v1082 = vpop.f32.mrb[0].mxu0
        %v1083 = vadd.f32 0.0, %v1082
        %v1084 = vpop.f32.mrb[0].mxu0
        %v1085 = vadd.f32 0.0, %v1084
        %1086 = vmatprep.mubr.f32.mxu0 %v834
        %1087 = vmatmul.mubr.f32.gmra.mrb[0].mxu0 %v833
        %v1088 = vpop.f32.mrb[0].mxu0
        %v1089 = vadd.f32 0.0, %v1088
        %v1090 = vpop.f32.mrb[0].mxu0
        %v1091 = vadd.f32 0.0, %v1090
        %1092 = vmatprep.mubr.f32.mxu0 %v836
        %1093 = vmatmul.mubr.f32.gmra.mrb[0].mxu0 %v835
        %v1094 = vpop.f32.mrb[0].mxu0
        %v1095 = vadd.f32 0.0, %v1094
        %v1096 = vpop.f32.mrb[0].mxu0
        %v1097 = vadd.f32 0.0, %v1096
        %1098 = vmatprep.mubr.f32.mxu0 %v838
        %1099 = vmatmul.mubr.f32.gmra.mrb[0].mxu0 %v837
        %v1100 = vpop.f32.mrb[0].mxu0
        %v1101 = vadd.f32 0.0, %v1100
        %v1102 = vpop.f32.mrb[0].mxu0
        %v1103 = vadd.f32 0.0, %v1102
        %1104 = vmatprep.mubr.f32.mxu0 %v840
        %1105 = vmatmul.mubr.f32.gmra.mrb[0].mxu0 %v839
        %v1106 = vpop.f32.mrb[0].mxu0
        %v1107 = vadd.f32 0.0, %v1106
        %v1108 = vpop.f32.mrb[0].mxu0
        %v1109 = vadd.f32 0.0, %v1108
        %1110 = vmatprep.mubr.f32.mxu0 %v842
        %1111 = vmatmul.mubr.f32.gmra.mrb[0].mxu0 %v841
        %v1112 = vpop.f32.mrb[0].mxu0
        %v1113 = vadd.f32 0.0, %v1112
        %v1114 = vpop.f32.mrb[0].mxu0
        %v1115 = vadd.f32 0.0, %v1114
        %1116 = vmatprep.mubr.f32.mxu0 %v844
        %1117 = vmatmul.mubr.f32.gmra.mrb[0].mxu0 %v843
        %v1118 = vpop.f32.mrb[0].mxu0
        %v1119 = vadd.f32 0.0, %v1118
        %v1120 = vpop.f32.mrb[0].mxu0
        %v1121 = vadd.f32 0.0, %v1120
        %1122 = vmatprep.mubr.f32.mxu0 %v846
        %1123 = vmatmul.mubr.f32.gmra.mrb[0].mxu0 %v845
        %v1124 = vpop.f32.mrb[0].mxu0
        %v1125 = vadd.f32 0.0, %v1124
        %v1126 = vpop.f32.mrb[0].mxu0
        %v1127 = vadd.f32 0.0, %v1126
        %1128 = vmatprep.mubr.f32.mxu0 %v848
        %1129 = vmatmul.mubr.f32.gmra.mrb[0].mxu0 %v847
        %v1130 = vpop.f32.mrb[0].mxu0
        %v1131 = vadd.f32 0.0, %v1130
        %v1132 = vpop.f32.mrb[0].mxu0
        %v1133 = vadd.f32 0.0, %v1132
        %1134 = vmatprep.mubr.f32.mxu0 %v850
        %1135 = vmatmul.mubr.f32.gmra.mrb[0].mxu0 %v849
        %v1136 = vpop.f32.mrb[0].mxu0
        %v1137 = vadd.f32 0.0, %v1136
        %v1138 = vpop.f32.mrb[0].mxu0
        %v1139 = vadd.f32 0.0, %v1138
        %1140 = vdwg.mxu0
        %1141 = vmatprep.subr.mxu0 %v854
        %1142 = vmatpush1.msra.mxu0 %v853
        %1143 = vmatprep.subr.mxu0 %v858
        %1144 = vmatpush1.msra.mxu0 %v857
        %1145 = vmatprep.subr.mxu0 %v862
        %1146 = vmatpush1.msra.mxu0 %v861
        %1147 = vmatprep.subr.mxu0 %v866
        %1148 = vmatpush1.msra.mxu0 %v865
        %1149 = vmatprep.subr.mxu0 %v870
        %1150 = vmatpush1.msra.mxu0 %v869
        %1151 = vmatprep.subr.mxu0 %v874
        %1152 = vmatpush1.msra.mxu0 %v873
        %1153 = vmatprep.subr.mxu0 %v878
        %1154 = vmatpush1.msra.mxu0 %v877
        %1155 = vmatprep.subr.mxu0 %v882
        %1156 = vmatpush1.msra.mxu0 %v881
        %1157 = vmatprep.subr.mxu0 %v886
        %1158 = vmatpush1.msra.mxu0 %v885
        %1159 = vmatprep.subr.mxu0 %v890
        %1160 = vmatpush1.msra.mxu0 %v889
        %1161 = vmatprep.subr.mxu0 %v894
        %1162 = vmatpush1.msra.mxu0 %v893
        %1163 = vmatprep.subr.mxu0 %v898
        %1164 = vmatpush1.msra.mxu0 %v897
        %1165 = vmatprep.subr.mxu0 %v902
        %1166 = vmatpush1.msra.mxu0 %v901
        %1167 = vmatprep.subr.mxu0 %v906
        %1168 = vmatpush1.msra.mxu0 %v905
        %1169 = vmatprep.subr.mxu0 %v910
        %1170 = vmatpush1.msra.mxu0 %v909
        %1171 = vmatprep.subr.mxu0 %v914
        %1172 = vmatpush1.msra.mxu0 %v913
        %1173 = vmatprep.subr.mxu0 %v918
        %1174 = vmatpush1.msra.mxu0 %v917
        %1175 = vmatprep.subr.mxu0 %v922
        %1176 = vmatpush1.msra.mxu0 %v921
        %1177 = vmatprep.subr.mxu0 %v926
        %1178 = vmatpush1.msra.mxu0 %v925
        %1179 = vmatprep.subr.mxu0 %v930
        %1180 = vmatpush1.msra.mxu0 %v929
        %1181 = vmatprep.subr.mxu0 %v934
        %1182 = vmatpush1.msra.mxu0 %v933
        %1183 = vmatprep.subr.mxu0 %v938
        %1184 = vmatpush1.msra.mxu0 %v937
        %1185 = vmatprep.subr.mxu0 %v942
        %1186 = vmatpush1.msra.mxu0 %v941
        %1187 = vmatprep.subr.mxu0 %v946
        %1188 = vmatpush1.msra.mxu0 %v945
        %1189 = vmatprep.subr.mxu0 %v950
        %1190 = vmatpush1.msra.mxu0 %v949
        %1191 = vmatprep.subr.mxu0 %v954
        %1192 = vmatpush1.msra.mxu0 %v953
        %1193 = vmatprep.subr.mxu0 %v958
        %1194 = vmatpush1.msra.mxu0 %v957
        %1195 = vmatprep.subr.mxu0 %v962
        %1196 = vmatpush1.msra.mxu0 %v961
        %1197 = vmatprep.subr.mxu0 %v966
        %1198 = vmatpush1.msra.mxu0 %v965
        %1199 = vmatprep.subr.mxu0 %v970
        %1200 = vmatpush1.msra.mxu0 %v969
        %1201 = vmatprep.subr.mxu0 %v974
        %1202 = vmatpush1.msra.mxu0 %v973
        %1203 = vmatprep.subr.mxu0 %v978
        %1204 = vmatpush1.msra.mxu0 %v977
        %1205 = vmatprep.mubr.f32.mxu0 %v820
        %1206 = vmatmul.mubr.f32.gmra.mrb[0].mxu0 %v819
        %v1207 = vpop.f32.mrb[0].mxu0
        %v1208 = vadd.f32 0.0, %v1207
        %v1209 = vpop.f32.mrb[0].mxu0
        %v1210 = vadd.f32 0.0, %v1209
        %1211 = vmatprep.mubr.f32.mxu0 %v822
        %1212 = vmatmul.mubr.f32.gmra.mrb[0].mxu0 %v821
        %v1213 = vpop.f32.mrb[0].mxu0
        %v1214 = vadd.f32 0.0, %v1213
        %v1215 = vpop.f32.mrb[0].mxu0
        %v1216 = vadd.f32 0.0, %v1215
        %1217 = vmatprep.mubr.f32.mxu0 %v824
        %1218 = vmatmul.mubr.f32.gmra.mrb[0].mxu0 %v823
        %v1219 = vpop.f32.mrb[0].mxu0
        %v1220 = vadd.f32 0.0, %v1219
        %v1221 = vpop.f32.mrb[0].mxu0
        %v1222 = vadd.f32 0.0, %v1221
        %1223 = vmatprep.mubr.f32.mxu0 %v826
        %1224 = vmatmul.mubr.f32.gmra.mrb[0].mxu0 %v825
        %v1225 = vpop.f32.mrb[0].mxu0
        %v1226 = vadd.f32 0.0, %v1225
        %v1227 = vpop.f32.mrb[0].mxu0
        %v1228 = vadd.f32 0.0, %v1227
        %1229 = vmatprep.mubr.f32.mxu0 %v828
        %1230 = vmatmul.mubr.f32.gmra.mrb[0].mxu0 %v827
        %v1231 = vpop.f32.mrb[0].mxu0
        %v1232 = vadd.f32 0.0, %v1231
        %v1233 = vpop.f32.mrb[0].mxu0
        %v1234 = vadd.f32 0.0, %v1233
        %1235 = vmatprep.mubr.f32.mxu0 %v830
        %1236 = vmatmul.mubr.f32.gmra.mrb[0].mxu0 %v829
        %v1237 = vpop.f32.mrb[0].mxu0
        %v1238 = vadd.f32 0.0, %v1237
        %v1239 = vpop.f32.mrb[0].mxu0
        %v1240 = vadd.f32 0.0, %v1239
        %1241 = vmatprep.mubr.f32.mxu0 %v832
        %1242 = vmatmul.mubr.f32.gmra.mrb[0].mxu0 %v831
        %v1243 = vpop.f32.mrb[0].mxu0
        %v1244 = vadd.f32 0.0, %v1243
        %v1245 = vpop.f32.mrb[0].mxu0
        %v1246 = vadd.f32 0.0, %v1245
        %1247 = vmatprep.mubr.f32.mxu0 %v834
        %1248 = vmatmul.mubr.f32.gmra.mrb[0].mxu0 %v833
        %v1249 = vpop.f32.mrb[0].mxu0
        %v1250 = vadd.f32 0.0, %v1249
        %v1251 = vpop.f32.mrb[0].mxu0
        %v1252 = vadd.f32 0.0, %v1251
        %1253 = vmatprep.mubr.f32.mxu0 %v836
        %1254 = vmatmul.mubr.f32.gmra.mrb[0].mxu0 %v835
        %v1255 = vpop.f32.mrb[0].mxu0
        %v1256 = vadd.f32 0.0, %v1255
        %v1257 = vpop.f32.mrb[0].mxu0
        %v1258 = vadd.f32 0.0, %v1257
        %1259 = vmatprep.mubr.f32.mxu0 %v838
        %1260 = vmatmul.mubr.f32.gmra.mrb[0].mxu0 %v837
        %v1261 = vpop.f32.mrb[0].mxu0
        %v1262 = vadd.f32 0.0, %v1261
        %v1263 = vpop.f32.mrb[0].mxu0
        %v1264 = vadd.f32 0.0, %v1263
        %1265 = vmatprep.mubr.f32.mxu0 %v840
        %1266 = vmatmul.mubr.f32.gmra.mrb[0].mxu0 %v839
        %v1267 = vpop.f32.mrb[0].mxu0
        %v1268 = vadd.f32 0.0, %v1267
        %v1269 = vpop.f32.mrb[0].mxu0
        %v1270 = vadd.f32 0.0, %v1269
        %1271 = vmatprep.mubr.f32.mxu0 %v842
        %1272 = vmatmul.mubr.f32.gmra.mrb[0].mxu0 %v841
        %v1273 = vpop.f32.mrb[0].mxu0
        %v1274 = vadd.f32 0.0, %v1273
        %v1275 = vpop.f32.mrb[0].mxu0
        %v1276 = vadd.f32 0.0, %v1275
        %1277 = vmatprep.mubr.f32.mxu0 %v844
        %1278 = vmatmul.mubr.f32.gmra.mrb[0].mxu0 %v843
        %v1279 = vpop.f32.mrb[0].mxu0
        %v1280 = vadd.f32 0.0, %v1279
        %v1281 = vpop.f32.mrb[0].mxu0
        %v1282 = vadd.f32 0.0, %v1281
        %1283 = vmatprep.mubr.f32.mxu0 %v846
        %1284 = vmatmul.mubr.f32.gmra.mrb[0].mxu0 %v845
        %v1285 = vpop.f32.mrb[0].mxu0
        %v1286 = vadd.f32 0.0, %v1285
        %v1287 = vpop.f32.mrb[0].mxu0
        %v1288 = vadd.f32 0.0, %v1287
        %1289 = vmatprep.mubr.f32.mxu0 %v848
        %1290 = vmatmul.mubr.f32.gmra.mrb[0].mxu0 %v847
        %v1291 = vpop.f32.mrb[0].mxu0
        %v1292 = vadd.f32 0.0, %v1291
        %v1293 = vpop.f32.mrb[0].mxu0
        %v1294 = vadd.f32 0.0, %v1293
        %1295 = vmatprep.mubr.f32.mxu0 %v850
        %1296 = vmatmul.mubr.f32.gmra.mrb[0].mxu0 %v849
        %v1297 = vpop.f32.mrb[0].mxu0
        %v1298 = vadd.f32 0.0, %v1297
        %v1299 = vpop.f32.mrb[0].mxu0
        %v1300 = vadd.f32 0.0, %v1299
        %1301 = vdwg.mxu0
        %1302 = vmatprep.subr.mxu0 %v1049
        %1303 = vmatpush1.msra.mxu0 %v1047
        %1304 = vmatprep.subr.mxu0 %v1055
        %1305 = vmatpush1.msra.mxu0 %v1053
        %1306 = vmatprep.subr.mxu0 %v1061
        %1307 = vmatpush1.msra.mxu0 %v1059
        %1308 = vmatprep.subr.mxu0 %v1067
        %1309 = vmatpush1.msra.mxu0 %v1065
        %1310 = vmatprep.subr.mxu0 %v1073
        %1311 = vmatpush1.msra.mxu0 %v1071
        %1312 = vmatprep.subr.mxu0 %v1079
        %1313 = vmatpush1.msra.mxu0 %v1077
        %1314 = vmatprep.subr.mxu0 %v1085
        %1315 = vmatpush1.msra.mxu0 %v1083
        %1316 = vmatprep.subr.mxu0 %v1091
        %1317 = vmatpush1.msra.mxu0 %v1089
        %1318 = vmatprep.subr.mxu0 %v1097
        %1319 = vmatpush1.msra.mxu0 %v1095
        %1320 = vmatprep.subr.mxu0 %v1103
        %1321 = vmatpush1.msra.mxu0 %v1101
        %1322 = vmatprep.subr.mxu0 %v1109
        %1323 = vmatpush1.msra.mxu0 %v1107
        %1324 = vmatprep.subr.mxu0 %v1115
        %1325 = vmatpush1.msra.mxu0 %v1113
        %1326 = vmatprep.subr.mxu0 %v1121
        %1327 = vmatpush1.msra.mxu0 %v1119
        %1328 = vmatprep.subr.mxu0 %v1127
        %1329 = vmatpush1.msra.mxu0 %v1125
        %1330 = vmatprep.subr.mxu0 %v1133
        %1331 = vmatpush1.msra.mxu0 %v1131
        %1332 = vmatprep.subr.mxu0 %v1139
        %1333 = vmatpush1.msra.mxu0 %v1137
        %1334 = vmatprep.subr.mxu0 0.0
        %1335 = vmatpush1.msra.mxu0 0.0
        %1336 = vmatprep.subr.mxu0 0.0
        %1337 = vmatpush1.msra.mxu0 0.0
        %1338 = vmatprep.subr.mxu0 0.0
        %1339 = vmatpush1.msra.mxu0 0.0
        %1340 = vmatprep.subr.mxu0 0.0
        %1341 = vmatpush1.msra.mxu0 0.0
        %1342 = vmatprep.subr.mxu0 0.0
        %1343 = vmatpush1.msra.mxu0 0.0
        %1344 = vmatprep.subr.mxu0 0.0
        %1345 = vmatpush1.msra.mxu0 0.0
        %1346 = vmatprep.subr.mxu0 0.0
        %1347 = vmatpush1.msra.mxu0 0.0
        %1348 = vmatprep.subr.mxu0 0.0
        %1349 = vmatpush1.msra.mxu0 0.0
        %1350 = vmatprep.subr.mxu0 0.0
        %1351 = vmatpush1.msra.mxu0 0.0
        %1352 = vmatprep.subr.mxu0 0.0
        %1353 = vmatpush1.msra.mxu0 0.0
        %1354 = vmatprep.subr.mxu0 0.0
        %1355 = vmatpush1.msra.mxu0 0.0
        %1356 = vmatprep.subr.mxu0 0.0
        %1357 = vmatpush1.msra.mxu0 0.0
        %1358 = vmatprep.subr.mxu0 0.0
        %1359 = vmatpush1.msra.mxu0 0.0
        %1360 = vmatprep.subr.mxu0 0.0
        %1361 = vmatpush1.msra.mxu0 0.0
        %1362 = vmatprep.subr.mxu0 0.0
        %1363 = vmatpush1.msra.mxu0 0.0
        %1364 = vmatprep.subr.mxu0 0.0
        %1365 = vmatpush1.msra.mxu0 0.0
        %1366 = vmatprep.mubr.f32.mxu0 0.0
        %1367 = vmatmul.mubr.f32.gmra.mrb[0].mxu0 %v405
        %v1368 = vpop.f32.mrb[0].mxu0
        %v1369 = vadd.f32 %v1208, %v1368
        %v1370 = vpop.f32.mrb[0].mxu0
        %v1371 = vadd.f32 %v1210, %v1370
        %1372 = vmatprep.mubr.f32.mxu0 0.0
        %1373 = vmatmul.mubr.f32.gmra.mrb[0].mxu0 %v406
        %v1374 = vpop.f32.mrb[0].mxu0
        %v1375 = vadd.f32 %v1214, %v1374
        %v1376 = vpop.f32.mrb[0].mxu0
        %v1377 = vadd.f32 %v1216, %v1376
        %1378 = vmatprep.mubr.f32.mxu0 0.0
        %1379 = vmatmul.mubr.f32.gmra.mrb[0].mxu0 %v407
        %v1380 = vpop.f32.mrb[0].mxu0
        %v1381 = vadd.f32 %v1220, %v1380
        %v1382 = vpop.f32.mrb[0].mxu0
        %v1383 = vadd.f32 %v1222, %v1382
        %1384 = vmatprep.mubr.f32.mxu0 0.0
        %1385 = vmatmul.mubr.f32.gmra.mrb[0].mxu0 %v408
        %v1386 = vpop.f32.mrb[0].mxu0
        %v1387 = vadd.f32 %v1226, %v1386
        %v1388 = vpop.f32.mrb[0].mxu0
        %v1389 = vadd.f32 %v1228, %v1388
        %1390 = vmatprep.mubr.f32.mxu0 0.0
        %1391 = vmatmul.mubr.f32.gmra.mrb[0].mxu0 %v409
        %v1392 = vpop.f32.mrb[0].mxu0
        %v1393 = vadd.f32 %v1232, %v1392
        %v1394 = vpop.f32.mrb[0].mxu0
        %v1395 = vadd.f32 %v1234, %v1394
        %1396 = vmatprep.mubr.f32.mxu0 0.0
        %1397 = vmatmul.mubr.f32.gmra.mrb[0].mxu0 %v410
        %v1398 = vpop.f32.mrb[0].mxu0
        %v1399 = vadd.f32 %v1238, %v1398
        %v1400 = vpop.f32.mrb[0].mxu0
        %v1401 = vadd.f32 %v1240, %v1400
        %1402 = vmatprep.mubr.f32.mxu0 0.0
        %1403 = vmatmul.mubr.f32.gmra.mrb[0].mxu0 %v411
        %v1404 = vpop.f32.mrb[0].mxu0
        %v1405 = vadd.f32 %v1244, %v1404
        %v1406 = vpop.f32.mrb[0].mxu0
        %v1407 = vadd.f32 %v1246, %v1406
        %1408 = vmatprep.mubr.f32.mxu0 0.0
        %1409 = vmatmul.mubr.f32.gmra.mrb[0].mxu0 %v412
        %v1410 = vpop.f32.mrb[0].mxu0
        %v1411 = vadd.f32 %v1250, %v1410
        %v1412 = vpop.f32.mrb[0].mxu0
        %v1413 = vadd.f32 %v1252, %v1412
        %1414 = vmatprep.mubr.f32.mxu0 0.0
        %1415 = vmatmul.mubr.f32.gmra.mrb[0].mxu0 %v413
        %v1416 = vpop.f32.mrb[0].mxu0
        %v1417 = vadd.f32 %v1256, %v1416
        %v1418 = vpop.f32.mrb[0].mxu0
        %v1419 = vadd.f32 %v1258, %v1418
        %1420 = vmatprep.mubr.f32.mxu0 0.0
        %1421 = vmatmul.mubr.f32.gmra.mrb[0].mxu0 %v414
        %v1422 = vpop.f32.mrb[0].mxu0
        %v1423 = vadd.f32 %v1262, %v1422
        %v1424 = vpop.f32.mrb[0].mxu0
        %v1425 = vadd.f32 %v1264, %v1424
        %1426 = vmatprep.mubr.f32.mxu0 0.0
        %1427 = vmatmul.mubr.f32.gmra.mrb[0].mxu0 %v415
        %v1428 = vpop.f32.mrb[0].mxu0
        %v1429 = vadd.f32 %v1268, %v1428
        %v1430 = vpop.f32.mrb[0].mxu0
        %v1431 = vadd.f32 %v1270, %v1430
        %1432 = vmatprep.mubr.f32.mxu0 0.0
        %1433 = vmatmul.mubr.f32.gmra.mrb[0].mxu0 %v416
        %v1434 = vpop.f32.mrb[0].mxu0
        %v1435 = vadd.f32 %v1274, %v1434
        %v1436 = vpop.f32.mrb[0].mxu0
        %v1437 = vadd.f32 %v1276, %v1436
        %1438 = vmatprep.mubr.f32.mxu0 0.0
        %1439 = vmatmul.mubr.f32.gmra.mrb[0].mxu0 %v417
        %v1440 = vpop.f32.mrb[0].mxu0
        %v1441 = vadd.f32 %v1280, %v1440
        %v1442 = vpop.f32.mrb[0].mxu0
        %v1443 = vadd.f32 %v1282, %v1442
        %1444 = vmatprep.mubr.f32.mxu0 0.0
        %1445 = vmatmul.mubr.f32.gmra.mrb[0].mxu0 %v418
        %v1446 = vpop.f32.mrb[0].mxu0
        %v1447 = vadd.f32 %v1286, %v1446
        %v1448 = vpop.f32.mrb[0].mxu0
        %v1449 = vadd.f32 %v1288, %v1448
        %1450 = vmatprep.mubr.f32.mxu0 0.0
        %1451 = vmatmul.mubr.f32.gmra.mrb[0].mxu0 %v419
        %v1452 = vpop.f32.mrb[0].mxu0
        %v1453 = vadd.f32 %v1292, %v1452
        %v1454 = vpop.f32.mrb[0].mxu0
        %v1455 = vadd.f32 %v1294, %v1454
        %1456 = vmatprep.mubr.f32.mxu0 0.0
        %1457 = vmatmul.mubr.f32.gmra.mrb[0].mxu0 %v420
        %v1458 = vpop.f32.mrb[0].mxu0
        %v1459 = vadd.f32 %v1298, %v1458
        %v1460 = vpop.f32.mrb[0].mxu0
        %v1461 = vadd.f32 %v1300, %v1460
        %1462 = vdwg.mxu0
        %v1464 = vlaneseq
        %v1465 = vshrl.u32 %v1464, 7
        %v1466 = vsub.s32 0, %v1465
        %v1467 = vrot.slane %v979, %v1466
        %v1468 = vlaneseq
        %v1469 = vshrl.u32 %v1468, 7
        %v1470 = vsub.s32 1, %v1469
        %v1471 = vrot.slane %v979, %v1470
        %v1474 = vadd.f32 %v1369, %v1467
        %v1475 = vadd.f32 %v1371, %v1471
        %v1476 = vadd.f32 %v1375, %v1467
        %v1477 = vadd.f32 %v1377, %v1471
        %v1478 = vadd.f32 %v1381, %v1467
        %v1479 = vadd.f32 %v1383, %v1471
        %v1480 = vadd.f32 %v1387, %v1467
        %v1481 = vadd.f32 %v1389, %v1471
        %v1482 = vadd.f32 %v1393, %v1467
        %v1483 = vadd.f32 %v1395, %v1471
        %v1484 = vadd.f32 %v1399, %v1467
        %v1485 = vadd.f32 %v1401, %v1471
        %v1486 = vadd.f32 %v1405, %v1467
        %v1487 = vadd.f32 %v1407, %v1471
        %v1488 = vadd.f32 %v1411, %v1467
        %v1489 = vadd.f32 %v1413, %v1471
        %v1490 = vadd.f32 %v1417, %v1467
        %v1491 = vadd.f32 %v1419, %v1471
        %v1492 = vadd.f32 %v1423, %v1467
        %v1493 = vadd.f32 %v1425, %v1471
        %v1494 = vadd.f32 %v1429, %v1467
        %v1495 = vadd.f32 %v1431, %v1471
        %v1496 = vadd.f32 %v1435, %v1467
        %v1497 = vadd.f32 %v1437, %v1471
        %v1498 = vadd.f32 %v1441, %v1467
        %v1499 = vadd.f32 %v1443, %v1471
        %v1500 = vadd.f32 %v1447, %v1467
        %v1501 = vadd.f32 %v1449, %v1471
        %v1502 = vadd.f32 %v1453, %v1467
        %v1503 = vadd.f32 %v1455, %v1471
        %v1504 = vadd.f32 %v1459, %v1467
        %v1505 = vadd.f32 %v1461, %v1471
        %v1506 = vmax.f32 %v1474, 0.0
        %v1507 = vmax.f32 %v1475, 0.0
        %v1508 = vmax.f32 %v1476, 0.0
        %v1509 = vmax.f32 %v1477, 0.0
        %v1510 = vmax.f32 %v1478, 0.0
        %v1511 = vmax.f32 %v1479, 0.0
        %v1512 = vmax.f32 %v1480, 0.0
        %v1513 = vmax.f32 %v1481, 0.0
        %v1514 = vmax.f32 %v1482, 0.0
        %v1515 = vmax.f32 %v1483, 0.0
        %v1516 = vmax.f32 %v1484, 0.0
        %v1517 = vmax.f32 %v1485, 0.0
        %v1518 = vmax.f32 %v1486, 0.0
        %v1519 = vmax.f32 %v1487, 0.0
        %v1520 = vmax.f32 %v1488, 0.0
        %v1521 = vmax.f32 %v1489, 0.0
        %v1522 = vmax.f32 %v1490, 0.0
        %v1523 = vmax.f32 %v1491, 0.0
        %v1524 = vmax.f32 %v1492, 0.0
        %v1525 = vmax.f32 %v1493, 0.0
        %v1526 = vmax.f32 %v1494, 0.0
        %v1527 = vmax.f32 %v1495, 0.0
        %v1528 = vmax.f32 %v1496, 0.0
        %v1529 = vmax.f32 %v1497, 0.0
        %v1530 = vmax.f32 %v1498, 0.0
        %v1531 = vmax.f32 %v1499, 0.0
        %v1532 = vmax.f32 %v1500, 0.0
        %v1533 = vmax.f32 %v1501, 0.0
        %v1534 = vmax.f32 %v1502, 0.0
        %v1535 = vmax.f32 %v1503, 0.0
        %v1536 = vmax.f32 %v1504, 0.0
        %v1537 = vmax.f32 %v1505, 0.0
        %s1538 = scalar_lea.vmem [#allocation6], 1024
        %v1539 = vld [vmem:[%s1538] sm:$0xff]
        %v1540 = vld [vmem:[%s1538 + $0x8] sm:$0xff]
        %v1541 = vld [vmem:[%s1538 + $0x10] sm:$0xff]
        %v1542 = vld [vmem:[%s1538 + $0x18] sm:$0xff]
        %v1543 = vld [vmem:[%s1538 + $0x20] sm:$0xff]
        %v1544 = vld [vmem:[%s1538 + $0x28] sm:$0xff]
        %v1545 = vld [vmem:[%s1538 + $0x30] sm:$0xff]
        %v1546 = vld [vmem:[%s1538 + $0x38] sm:$0xff]
        %v1547 = vld [vmem:[%s1538 + $0x40] sm:$0xff]
        %v1548 = vld [vmem:[%s1538 + $0x48] sm:$0xff]
        %v1549 = vld [vmem:[%s1538 + $0x50] sm:$0xff]
        %v1550 = vld [vmem:[%s1538 + $0x58] sm:$0xff]
        %v1551 = vld [vmem:[%s1538 + $0x60] sm:$0xff]
        %v1552 = vld [vmem:[%s1538 + $0x68] sm:$0xff]
        %v1553 = vld [vmem:[%s1538 + $0x70] sm:$0xff]
        %v1554 = vld [vmem:[%s1538 + $0x78] sm:$0xff]
        %v1555 = vld [vmem:[%s1538 + $0x80] sm:$0xff]
        %v1556 = vld [vmem:[%s1538 + $0x88] sm:$0xff]
        %v1557 = vld [vmem:[%s1538 + $0x90] sm:$0xff]
        %v1558 = vld [vmem:[%s1538 + $0x98] sm:$0xff]
        %v1559 = vld [vmem:[%s1538 + $0xa0] sm:$0xff]
        %v1560 = vld [vmem:[%s1538 + $0xa8] sm:$0xff]
        %v1561 = vld [vmem:[%s1538 + $0xb0] sm:$0xff]
        %v1562 = vld [vmem:[%s1538 + $0xb8] sm:$0xff]
        %v1563 = vld [vmem:[%s1538 + $0xc0] sm:$0xff]
        %v1564 = vld [vmem:[%s1538 + $0xc8] sm:$0xff]
        %v1565 = vld [vmem:[%s1538 + $0xd0] sm:$0xff]
        %v1566 = vld [vmem:[%s1538 + $0xd8] sm:$0xff]
        %v1567 = vld [vmem:[%s1538 + $0xe0] sm:$0xff]
        %v1568 = vld [vmem:[%s1538 + $0xe8] sm:$0xff]
        %v1569 = vld [vmem:[%s1538 + $0xf0] sm:$0xff]
        %v1570 = vld [vmem:[%s1538 + $0xf8] sm:$0xff]
        %v1571 = vld [vmem:[%s1538 + $0x100] sm:$0xff]
        %v1572 = vld [vmem:[%s1538 + $0x108] sm:$0xff]
        %v1573 = vld [vmem:[%s1538 + $0x110] sm:$0xff]
        %v1574 = vld [vmem:[%s1538 + $0x118] sm:$0xff]
        %v1575 = vld [vmem:[%s1538 + $0x120] sm:$0xff]
        %v1576 = vld [vmem:[%s1538 + $0x128] sm:$0xff]
        %v1577 = vld [vmem:[%s1538 + $0x130] sm:$0xff]
        %v1578 = vld [vmem:[%s1538 + $0x138] sm:$0xff]
        %v1579 = vld [vmem:[%s1538 + $0x140] sm:$0xff]
        %v1580 = vld [vmem:[%s1538 + $0x148] sm:$0xff]
        %v1581 = vld [vmem:[%s1538 + $0x150] sm:$0xff]
        %v1582 = vld [vmem:[%s1538 + $0x158] sm:$0xff]
        %v1583 = vld [vmem:[%s1538 + $0x160] sm:$0xff]
        %v1584 = vld [vmem:[%s1538 + $0x168] sm:$0xff]
        %v1585 = vld [vmem:[%s1538 + $0x170] sm:$0xff]
        %v1586 = vld [vmem:[%s1538 + $0x178] sm:$0xff]
        %v1587 = vld [vmem:[%s1538 + $0x180] sm:$0xff]
        %v1588 = vld [vmem:[%s1538 + $0x188] sm:$0xff]
        %v1589 = vld [vmem:[%s1538 + $0x190] sm:$0xff]
        %v1590 = vld [vmem:[%s1538 + $0x198] sm:$0xff]
        %v1591 = vld [vmem:[%s1538 + $0x1a0] sm:$0xff]
        %v1592 = vld [vmem:[%s1538 + $0x1a8] sm:$0xff]
        %v1593 = vld [vmem:[%s1538 + $0x1b0] sm:$0xff]
        %v1594 = vld [vmem:[%s1538 + $0x1b8] sm:$0xff]
        %v1595 = vld [vmem:[%s1538 + $0x1c0] sm:$0xff]
        %v1596 = vld [vmem:[%s1538 + $0x1c8] sm:$0xff]
        %v1597 = vld [vmem:[%s1538 + $0x1d0] sm:$0xff]
        %v1598 = vld [vmem:[%s1538 + $0x1d8] sm:$0xff]
        %v1599 = vld [vmem:[%s1538 + $0x1e0] sm:$0xff]
        %v1600 = vld [vmem:[%s1538 + $0x1e8] sm:$0xff]
        %v1601 = vld [vmem:[%s1538 + $0x1f0] sm:$0xff]
        %v1602 = vld [vmem:[%s1538 + $0x1f8] sm:$0xff]
        %v1603 = vld [vmem:[%s1538 + $0x200] sm:$0xff]
        %v1604 = vld [vmem:[%s1538 + $0x208] sm:$0xff]
        %v1605 = vld [vmem:[%s1538 + $0x210] sm:$0xff]
        %v1606 = vld [vmem:[%s1538 + $0x218] sm:$0xff]
        %v1607 = vld [vmem:[%s1538 + $0x220] sm:$0xff]
        %v1608 = vld [vmem:[%s1538 + $0x228] sm:$0xff]
        %v1609 = vld [vmem:[%s1538 + $0x230] sm:$0xff]
        %v1610 = vld [vmem:[%s1538 + $0x238] sm:$0xff]
        %v1611 = vld [vmem:[%s1538 + $0x240] sm:$0xff]
        %v1612 = vld [vmem:[%s1538 + $0x248] sm:$0xff]
        %v1613 = vld [vmem:[%s1538 + $0x250] sm:$0xff]
        %v1614 = vld [vmem:[%s1538 + $0x258] sm:$0xff]
        %v1615 = vld [vmem:[%s1538 + $0x260] sm:$0xff]
        %v1616 = vld [vmem:[%s1538 + $0x268] sm:$0xff]
        %v1617 = vld [vmem:[%s1538 + $0x270] sm:$0xff]
        %v1618 = vld [vmem:[%s1538 + $0x278] sm:$0xff]
        %v1619 = vld [vmem:[%s1538 + $0x280] sm:$0xff]
        %v1620 = vld [vmem:[%s1538 + $0x288] sm:$0xff]
        %v1621 = vld [vmem:[%s1538 + $0x290] sm:$0xff]
        %v1622 = vld [vmem:[%s1538 + $0x298] sm:$0xff]
        %v1623 = vld [vmem:[%s1538 + $0x2a0] sm:$0xff]
        %v1624 = vld [vmem:[%s1538 + $0x2a8] sm:$0xff]
        %v1625 = vld [vmem:[%s1538 + $0x2b0] sm:$0xff]
        %v1626 = vld [vmem:[%s1538 + $0x2b8] sm:$0xff]
        %v1627 = vld [vmem:[%s1538 + $0x2c0] sm:$0xff]
        %v1628 = vld [vmem:[%s1538 + $0x2c8] sm:$0xff]
        %v1629 = vld [vmem:[%s1538 + $0x2d0] sm:$0xff]
        %v1630 = vld [vmem:[%s1538 + $0x2d8] sm:$0xff]
        %v1631 = vld [vmem:[%s1538 + $0x2e0] sm:$0xff]
        %v1632 = vld [vmem:[%s1538 + $0x2e8] sm:$0xff]
        %v1633 = vld [vmem:[%s1538 + $0x2f0] sm:$0xff]
        %v1634 = vld [vmem:[%s1538 + $0x2f8] sm:$0xff]
        %v1635 = vld [vmem:[%s1538 + $0x300] sm:$0xff]
        %v1636 = vld [vmem:[%s1538 + $0x308] sm:$0xff]
        %v1637 = vld [vmem:[%s1538 + $0x310] sm:$0xff]
        %v1638 = vld [vmem:[%s1538 + $0x318] sm:$0xff]
        %v1639 = vld [vmem:[%s1538 + $0x320] sm:$0xff]
        %v1640 = vld [vmem:[%s1538 + $0x328] sm:$0xff]
        %v1641 = vld [vmem:[%s1538 + $0x330] sm:$0xff]
        %v1642 = vld [vmem:[%s1538 + $0x338] sm:$0xff]
        %v1643 = vld [vmem:[%s1538 + $0x340] sm:$0xff]
        %v1644 = vld [vmem:[%s1538 + $0x348] sm:$0xff]
        %v1645 = vld [vmem:[%s1538 + $0x350] sm:$0xff]
        %v1646 = vld [vmem:[%s1538 + $0x358] sm:$0xff]
        %v1647 = vld [vmem:[%s1538 + $0x360] sm:$0xff]
        %v1648 = vld [vmem:[%s1538 + $0x368] sm:$0xff]
        %v1649 = vld [vmem:[%s1538 + $0x370] sm:$0xff]
        %v1650 = vld [vmem:[%s1538 + $0x378] sm:$0xff]
        %v1651 = vld [vmem:[%s1538 + $0x380] sm:$0xff]
        %v1652 = vld [vmem:[%s1538 + $0x388] sm:$0xff]
        %v1653 = vld [vmem:[%s1538 + $0x390] sm:$0xff]
        %v1654 = vld [vmem:[%s1538 + $0x398] sm:$0xff]
        %v1655 = vld [vmem:[%s1538 + $0x3a0] sm:$0xff]
        %v1656 = vld [vmem:[%s1538 + $0x3a8] sm:$0xff]
        %v1657 = vld [vmem:[%s1538 + $0x3b0] sm:$0xff]
        %v1658 = vld [vmem:[%s1538 + $0x3b8] sm:$0xff]
        %v1659 = vld [vmem:[%s1538 + $0x3c0] sm:$0xff]
        %v1660 = vld [vmem:[%s1538 + $0x3c8] sm:$0xff]
        %v1661 = vld [vmem:[%s1538 + $0x3d0] sm:$0xff]
        %v1662 = vld [vmem:[%s1538 + $0x3d8] sm:$0xff]
        %v1663 = vld [vmem:[%s1538 + $0x3e0] sm:$0xff]
        %v1664 = vld [vmem:[%s1538 + $0x3e8] sm:$0xff]
        %v1665 = vld [vmem:[%s1538 + $0x3f0] sm:$0xff]
        %v1666 = vld [vmem:[%s1538 + $0x3f8] sm:$0xff]
        %s1667 = scalar_lea.vmem %s5, 2
        %v1668 = vld [vmem:[%s1667] sm:$0x3]
        %1669 = vmatprep.subr.mxu0 %v1540
        %1670 = vmatpush1.msra.mxu0 %v1539
        %1671 = vmatprep.subr.mxu0 %v1544
        %1672 = vmatpush1.msra.mxu0 %v1543
        %1673 = vmatprep.subr.mxu0 %v1548
        %1674 = vmatpush1.msra.mxu0 %v1547
        %1675 = vmatprep.subr.mxu0 %v1552
        %1676 = vmatpush1.msra.mxu0 %v1551
        %1677 = vmatprep.subr.mxu0 %v1556
        %1678 = vmatpush1.msra.mxu0 %v1555
        %1679 = vmatprep.subr.mxu0 %v1560
        %1680 = vmatpush1.msra.mxu0 %v1559
        %1681 = vmatprep.subr.mxu0 %v1564
        %1682 = vmatpush1.msra.mxu0 %v1563
        %1683 = vmatprep.subr.mxu0 %v1568
        %1684 = vmatpush1.msra.mxu0 %v1567
        %1685 = vmatprep.subr.mxu0 %v1572
        %1686 = vmatpush1.msra.mxu0 %v1571
        %1687 = vmatprep.subr.mxu0 %v1576
        %1688 = vmatpush1.msra.mxu0 %v1575
        %1689 = vmatprep.subr.mxu0 %v1580
        %1690 = vmatpush1.msra.mxu0 %v1579
        %1691 = vmatprep.subr.mxu0 %v1584
        %1692 = vmatpush1.msra.mxu0 %v1583
        %1693 = vmatprep.subr.mxu0 %v1588
        %1694 = vmatpush1.msra.mxu0 %v1587
        %1695 = vmatprep.subr.mxu0 %v1592
        %1696 = vmatpush1.msra.mxu0 %v1591
        %1697 = vmatprep.subr.mxu0 %v1596
        %1698 = vmatpush1.msra.mxu0 %v1595
        %1699 = vmatprep.subr.mxu0 %v1600
        %1700 = vmatpush1.msra.mxu0 %v1599
        %1701 = vmatprep.subr.mxu0 %v1604
        %1702 = vmatpush1.msra.mxu0 %v1603
        %1703 = vmatprep.subr.mxu0 %v1608
        %1704 = vmatpush1.msra.mxu0 %v1607
        %1705 = vmatprep.subr.mxu0 %v1612
        %1706 = vmatpush1.msra.mxu0 %v1611
        %1707 = vmatprep.subr.mxu0 %v1616
        %1708 = vmatpush1.msra.mxu0 %v1615
        %1709 = vmatprep.subr.mxu0 %v1620
        %1710 = vmatpush1.msra.mxu0 %v1619
        %1711 = vmatprep.subr.mxu0 %v1624
        %1712 = vmatpush1.msra.mxu0 %v1623
        %1713 = vmatprep.subr.mxu0 %v1628
        %1714 = vmatpush1.msra.mxu0 %v1627
        %1715 = vmatprep.subr.mxu0 %v1632
        %1716 = vmatpush1.msra.mxu0 %v1631
        %1717 = vmatprep.subr.mxu0 %v1636
        %1718 = vmatpush1.msra.mxu0 %v1635
        %1719 = vmatprep.subr.mxu0 %v1640
        %1720 = vmatpush1.msra.mxu0 %v1639
        %1721 = vmatprep.subr.mxu0 %v1644
        %1722 = vmatpush1.msra.mxu0 %v1643
        %1723 = vmatprep.subr.mxu0 %v1648
        %1724 = vmatpush1.msra.mxu0 %v1647
        %1725 = vmatprep.subr.mxu0 %v1652
        %1726 = vmatpush1.msra.mxu0 %v1651
        %1727 = vmatprep.subr.mxu0 %v1656
        %1728 = vmatpush1.msra.mxu0 %v1655
        %1729 = vmatprep.subr.mxu0 %v1660
        %1730 = vmatpush1.msra.mxu0 %v1659
        %1731 = vmatprep.subr.mxu0 %v1664
        %1732 = vmatpush1.msra.mxu0 %v1663
        %1733 = vmatprep.mubr.f32.mxu0 %v1507
        %1734 = vmatmul.mubr.f32.gmra.mrb[0].mxu0 %v1506
        %v1735 = vpop.f32.mrb[0].mxu0
        %v1736 = vadd.f32 0.0, %v1735
        %v1737 = vpop.f32.mrb[0].mxu0
        %v1738 = vadd.f32 0.0, %v1737
        %1739 = vmatprep.mubr.f32.mxu0 %v1509
        %1740 = vmatmul.mubr.f32.gmra.mrb[0].mxu0 %v1508
        %v1741 = vpop.f32.mrb[0].mxu0
        %v1742 = vadd.f32 0.0, %v1741
        %v1743 = vpop.f32.mrb[0].mxu0
        %v1744 = vadd.f32 0.0, %v1743
        %1745 = vmatprep.mubr.f32.mxu0 %v1511
        %1746 = vmatmul.mubr.f32.gmra.mrb[0].mxu0 %v1510
        %v1747 = vpop.f32.mrb[0].mxu0
        %v1748 = vadd.f32 0.0, %v1747
        %v1749 = vpop.f32.mrb[0].mxu0
        %v1750 = vadd.f32 0.0, %v1749
        %1751 = vmatprep.mubr.f32.mxu0 %v1513
        %1752 = vmatmul.mubr.f32.gmra.mrb[0].mxu0 %v1512
        %v1753 = vpop.f32.mrb[0].mxu0
        %v1754 = vadd.f32 0.0, %v1753
        %v1755 = vpop.f32.mrb[0].mxu0
        %v1756 = vadd.f32 0.0, %v1755
        %1757 = vmatprep.mubr.f32.mxu0 %v1515
        %1758 = vmatmul.mubr.f32.gmra.mrb[0].mxu0 %v1514
        %v1759 = vpop.f32.mrb[0].mxu0
        %v1760 = vadd.f32 0.0, %v1759
        %v1761 = vpop.f32.mrb[0].mxu0
        %v1762 = vadd.f32 0.0, %v1761
        %1763 = vmatprep.mubr.f32.mxu0 %v1517
        %1764 = vmatmul.mubr.f32.gmra.mrb[0].mxu0 %v1516
        %v1765 = vpop.f32.mrb[0].mxu0
        %v1766 = vadd.f32 0.0, %v1765
        %v1767 = vpop.f32.mrb[0].mxu0
        %v1768 = vadd.f32 0.0, %v1767
        %1769 = vmatprep.mubr.f32.mxu0 %v1519
        %1770 = vmatmul.mubr.f32.gmra.mrb[0].mxu0 %v1518
        %v1771 = vpop.f32.mrb[0].mxu0
        %v1772 = vadd.f32 0.0, %v1771
        %v1773 = vpop.f32.mrb[0].mxu0
        %v1774 = vadd.f32 0.0, %v1773
        %1775 = vmatprep.mubr.f32.mxu0 %v1521
        %1776 = vmatmul.mubr.f32.gmra.mrb[0].mxu0 %v1520
        %v1777 = vpop.f32.mrb[0].mxu0
        %v1778 = vadd.f32 0.0, %v1777
        %v1779 = vpop.f32.mrb[0].mxu0
        %v1780 = vadd.f32 0.0, %v1779
        %1781 = vmatprep.mubr.f32.mxu0 %v1523
        %1782 = vmatmul.mubr.f32.gmra.mrb[0].mxu0 %v1522
        %v1783 = vpop.f32.mrb[0].mxu0
        %v1784 = vadd.f32 0.0, %v1783
        %v1785 = vpop.f32.mrb[0].mxu0
        %v1786 = vadd.f32 0.0, %v1785
        %1787 = vmatprep.mubr.f32.mxu0 %v1525
        %1788 = vmatmul.mubr.f32.gmra.mrb[0].mxu0 %v1524
        %v1789 = vpop.f32.mrb[0].mxu0
        %v1790 = vadd.f32 0.0, %v1789
        %v1791 = vpop.f32.mrb[0].mxu0
        %v1792 = vadd.f32 0.0, %v1791
        %1793 = vmatprep.mubr.f32.mxu0 %v1527
        %1794 = vmatmul.mubr.f32.gmra.mrb[0].mxu0 %v1526
        %v1795 = vpop.f32.mrb[0].mxu0
        %v1796 = vadd.f32 0.0, %v1795
        %v1797 = vpop.f32.mrb[0].mxu0
        %v1798 = vadd.f32 0.0, %v1797
        %1799 = vmatprep.mubr.f32.mxu0 %v1529
        %1800 = vmatmul.mubr.f32.gmra.mrb[0].mxu0 %v1528
        %v1801 = vpop.f32.mrb[0].mxu0
        %v1802 = vadd.f32 0.0, %v1801
        %v1803 = vpop.f32.mrb[0].mxu0
        %v1804 = vadd.f32 0.0, %v1803
        %1805 = vmatprep.mubr.f32.mxu0 %v1531
        %1806 = vmatmul.mubr.f32.gmra.mrb[0].mxu0 %v1530
        %v1807 = vpop.f32.mrb[0].mxu0
        %v1808 = vadd.f32 0.0, %v1807
        %v1809 = vpop.f32.mrb[0].mxu0
        %v1810 = vadd.f32 0.0, %v1809
        %1811 = vmatprep.mubr.f32.mxu0 %v1533
        %1812 = vmatmul.mubr.f32.gmra.mrb[0].mxu0 %v1532
        %v1813 = vpop.f32.mrb[0].mxu0
        %v1814 = vadd.f32 0.0, %v1813
        %v1815 = vpop.f32.mrb[0].mxu0
        %v1816 = vadd.f32 0.0, %v1815
        %1817 = vmatprep.mubr.f32.mxu0 %v1535
        %1818 = vmatmul.mubr.f32.gmra.mrb[0].mxu0 %v1534
        %v1819 = vpop.f32.mrb[0].mxu0
        %v1820 = vadd.f32 0.0, %v1819
        %v1821 = vpop.f32.mrb[0].mxu0
        %v1822 = vadd.f32 0.0, %v1821
        %1823 = vmatprep.mubr.f32.mxu0 %v1537
        %1824 = vmatmul.mubr.f32.gmra.mrb[0].mxu0 %v1536
        %v1825 = vpop.f32.mrb[0].mxu0
        %v1826 = vadd.f32 0.0, %v1825
        %v1827 = vpop.f32.mrb[0].mxu0
        %v1828 = vadd.f32 0.0, %v1827
        %1829 = vdwg.mxu0
        %1830 = vmatprep.subr.mxu0 %v1542
        %1831 = vmatpush1.msra.mxu0 %v1541
        %1832 = vmatprep.subr.mxu0 %v1546
        %1833 = vmatpush1.msra.mxu0 %v1545
        %1834 = vmatprep.subr.mxu0 %v1550
        %1835 = vmatpush1.msra.mxu0 %v1549
        %1836 = vmatprep.subr.mxu0 %v1554
        %1837 = vmatpush1.msra.mxu0 %v1553
        %1838 = vmatprep.subr.mxu0 %v1558
        %1839 = vmatpush1.msra.mxu0 %v1557
        %1840 = vmatprep.subr.mxu0 %v1562
        %1841 = vmatpush1.msra.mxu0 %v1561
        %1842 = vmatprep.subr.mxu0 %v1566
        %1843 = vmatpush1.msra.mxu0 %v1565
        %1844 = vmatprep.subr.mxu0 %v1570
        %1845 = vmatpush1.msra.mxu0 %v1569
        %1846 = vmatprep.subr.mxu0 %v1574
        %1847 = vmatpush1.msra.mxu0 %v1573
        %1848 = vmatprep.subr.mxu0 %v1578
        %1849 = vmatpush1.msra.mxu0 %v1577
        %1850 = vmatprep.subr.mxu0 %v1582
        %1851 = vmatpush1.msra.mxu0 %v1581
        %1852 = vmatprep.subr.mxu0 %v1586
        %1853 = vmatpush1.msra.mxu0 %v1585
        %1854 = vmatprep.subr.mxu0 %v1590
        %1855 = vmatpush1.msra.mxu0 %v1589
        %1856 = vmatprep.subr.mxu0 %v1594
        %1857 = vmatpush1.msra.mxu0 %v1593
        %1858 = vmatprep.subr.mxu0 %v1598
        %1859 = vmatpush1.msra.mxu0 %v1597
        %1860 = vmatprep.subr.mxu0 %v1602
        %1861 = vmatpush1.msra.mxu0 %v1601
        %1862 = vmatprep.subr.mxu0 %v1606
        %1863 = vmatpush1.msra.mxu0 %v1605
        %1864 = vmatprep.subr.mxu0 %v1610
        %1865 = vmatpush1.msra.mxu0 %v1609
        %1866 = vmatprep.subr.mxu0 %v1614
        %1867 = vmatpush1.msra.mxu0 %v1613
        %1868 = vmatprep.subr.mxu0 %v1618
        %1869 = vmatpush1.msra.mxu0 %v1617
        %1870 = vmatprep.subr.mxu0 %v1622
        %1871 = vmatpush1.msra.mxu0 %v1621
        %1872 = vmatprep.subr.mxu0 %v1626
        %1873 = vmatpush1.msra.mxu0 %v1625
        %1874 = vmatprep.subr.mxu0 %v1630
        %1875 = vmatpush1.msra.mxu0 %v1629
        %1876 = vmatprep.subr.mxu0 %v1634
        %1877 = vmatpush1.msra.mxu0 %v1633
        %1878 = vmatprep.subr.mxu0 %v1638
        %1879 = vmatpush1.msra.mxu0 %v1637
        %1880 = vmatprep.subr.mxu0 %v1642
        %1881 = vmatpush1.msra.mxu0 %v1641
        %1882 = vmatprep.subr.mxu0 %v1646
        %1883 = vmatpush1.msra.mxu0 %v1645
        %1884 = vmatprep.subr.mxu0 %v1650
        %1885 = vmatpush1.msra.mxu0 %v1649
        %1886 = vmatprep.subr.mxu0 %v1654
        %1887 = vmatpush1.msra.mxu0 %v1653
        %1888 = vmatprep.subr.mxu0 %v1658
        %1889 = vmatpush1.msra.mxu0 %v1657
        %1890 = vmatprep.subr.mxu0 %v1662
        %1891 = vmatpush1.msra.mxu0 %v1661
        %1892 = vmatprep.subr.mxu0 %v1666
        %1893 = vmatpush1.msra.mxu0 %v1665
        %1894 = vmatprep.mubr.f32.mxu0 %v1507
        %1895 = vmatmul.mubr.f32.gmra.mrb[0].mxu0 %v1506
        %v1896 = vpop.f32.mrb[0].mxu0
        %v1897 = vadd.f32 0.0, %v1896
        %v1898 = vpop.f32.mrb[0].mxu0
        %v1899 = vadd.f32 0.0, %v1898
        %1900 = vmatprep.mubr.f32.mxu0 %v1509
        %1901 = vmatmul.mubr.f32.gmra.mrb[0].mxu0 %v1508
        %v1902 = vpop.f32.mrb[0].mxu0
        %v1903 = vadd.f32 0.0, %v1902
        %v1904 = vpop.f32.mrb[0].mxu0
        %v1905 = vadd.f32 0.0, %v1904
        %1906 = vmatprep.mubr.f32.mxu0 %v1511
        %1907 = vmatmul.mubr.f32.gmra.mrb[0].mxu0 %v1510
        %v1908 = vpop.f32.mrb[0].mxu0
        %v1909 = vadd.f32 0.0, %v1908
        %v1910 = vpop.f32.mrb[0].mxu0
        %v1911 = vadd.f32 0.0, %v1910
        %1912 = vmatprep.mubr.f32.mxu0 %v1513
        %1913 = vmatmul.mubr.f32.gmra.mrb[0].mxu0 %v1512
        %v1914 = vpop.f32.mrb[0].mxu0
        %v1915 = vadd.f32 0.0, %v1914
        %v1916 = vpop.f32.mrb[0].mxu0
        %v1917 = vadd.f32 0.0, %v1916
        %1918 = vmatprep.mubr.f32.mxu0 %v1515
        %1919 = vmatmul.mubr.f32.gmra.mrb[0].mxu0 %v1514
        %v1920 = vpop.f32.mrb[0].mxu0
        %v1921 = vadd.f32 0.0, %v1920
        %v1922 = vpop.f32.mrb[0].mxu0
        %v1923 = vadd.f32 0.0, %v1922
        %1924 = vmatprep.mubr.f32.mxu0 %v1517
        %1925 = vmatmul.mubr.f32.gmra.mrb[0].mxu0 %v1516
        %v1926 = vpop.f32.mrb[0].mxu0
        %v1927 = vadd.f32 0.0, %v1926
        %v1928 = vpop.f32.mrb[0].mxu0
        %v1929 = vadd.f32 0.0, %v1928
        %1930 = vmatprep.mubr.f32.mxu0 %v1519
        %1931 = vmatmul.mubr.f32.gmra.mrb[0].mxu0 %v1518
        %v1932 = vpop.f32.mrb[0].mxu0
        %v1933 = vadd.f32 0.0, %v1932
        %v1934 = vpop.f32.mrb[0].mxu0
        %v1935 = vadd.f32 0.0, %v1934
        %1936 = vmatprep.mubr.f32.mxu0 %v1521
        %1937 = vmatmul.mubr.f32.gmra.mrb[0].mxu0 %v1520
        %v1938 = vpop.f32.mrb[0].mxu0
        %v1939 = vadd.f32 0.0, %v1938
        %v1940 = vpop.f32.mrb[0].mxu0
        %v1941 = vadd.f32 0.0, %v1940
        %1942 = vmatprep.mubr.f32.mxu0 %v1523
        %1943 = vmatmul.mubr.f32.gmra.mrb[0].mxu0 %v1522
        %v1944 = vpop.f32.mrb[0].mxu0
        %v1945 = vadd.f32 0.0, %v1944
        %v1946 = vpop.f32.mrb[0].mxu0
        %v1947 = vadd.f32 0.0, %v1946
        %1948 = vmatprep.mubr.f32.mxu0 %v1525
        %1949 = vmatmul.mubr.f32.gmra.mrb[0].mxu0 %v1524
        %v1950 = vpop.f32.mrb[0].mxu0
        %v1951 = vadd.f32 0.0, %v1950
        %v1952 = vpop.f32.mrb[0].mxu0
        %v1953 = vadd.f32 0.0, %v1952
        %1954 = vmatprep.mubr.f32.mxu0 %v1527
        %1955 = vmatmul.mubr.f32.gmra.mrb[0].mxu0 %v1526
        %v1956 = vpop.f32.mrb[0].mxu0
        %v1957 = vadd.f32 0.0, %v1956
        %v1958 = vpop.f32.mrb[0].mxu0
        %v1959 = vadd.f32 0.0, %v1958
        %1960 = vmatprep.mubr.f32.mxu0 %v1529
        %1961 = vmatmul.mubr.f32.gmra.mrb[0].mxu0 %v1528
        %v1962 = vpop.f32.mrb[0].mxu0
        %v1963 = vadd.f32 0.0, %v1962
        %v1964 = vpop.f32.mrb[0].mxu0
        %v1965 = vadd.f32 0.0, %v1964
        %1966 = vmatprep.mubr.f32.mxu0 %v1531
        %1967 = vmatmul.mubr.f32.gmra.mrb[0].mxu0 %v1530
        %v1968 = vpop.f32.mrb[0].mxu0
        %v1969 = vadd.f32 0.0, %v1968
        %v1970 = vpop.f32.mrb[0].mxu0
        %v1971 = vadd.f32 0.0, %v1970
        %1972 = vmatprep.mubr.f32.mxu0 %v1533
        %1973 = vmatmul.mubr.f32.gmra.mrb[0].mxu0 %v1532
        %v1974 = vpop.f32.mrb[0].mxu0
        %v1975 = vadd.f32 0.0, %v1974
        %v1976 = vpop.f32.mrb[0].mxu0
        %v1977 = vadd.f32 0.0, %v1976
        %1978 = vmatprep.mubr.f32.mxu0 %v1535
        %1979 = vmatmul.mubr.f32.gmra.mrb[0].mxu0 %v1534
        %v1980 = vpop.f32.mrb[0].mxu0
        %v1981 = vadd.f32 0.0, %v1980
        %v1982 = vpop.f32.mrb[0].mxu0
        %v1983 = vadd.f32 0.0, %v1982
        %1984 = vmatprep.mubr.f32.mxu0 %v1537
        %1985 = vmatmul.mubr.f32.gmra.mrb[0].mxu0 %v1536
        %v1986 = vpop.f32.mrb[0].mxu0
        %v1987 = vadd.f32 0.0, %v1986
        %v1988 = vpop.f32.mrb[0].mxu0
        %v1989 = vadd.f32 0.0, %v1988
        %1990 = vdwg.mxu0
        %1991 = vmatprep.subr.mxu0 %v1738
        %1992 = vmatpush1.msra.mxu0 %v1736
        %1993 = vmatprep.subr.mxu0 %v1744
        %1994 = vmatpush1.msra.mxu0 %v1742
        %1995 = vmatprep.subr.mxu0 %v1750
        %1996 = vmatpush1.msra.mxu0 %v1748
        %1997 = vmatprep.subr.mxu0 %v1756
        %1998 = vmatpush1.msra.mxu0 %v1754
        %1999 = vmatprep.subr.mxu0 %v1762
        %2000 = vmatpush1.msra.mxu0 %v1760
        %2001 = vmatprep.subr.mxu0 %v1768
        %2002 = vmatpush1.msra.mxu0 %v1766
        %2003 = vmatprep.subr.mxu0 %v1774
        %2004 = vmatpush1.msra.mxu0 %v1772
        %2005 = vmatprep.subr.mxu0 %v1780
        %2006 = vmatpush1.msra.mxu0 %v1778
        %2007 = vmatprep.subr.mxu0 %v1786
        %2008 = vmatpush1.msra.mxu0 %v1784
        %2009 = vmatprep.subr.mxu0 %v1792
        %2010 = vmatpush1.msra.mxu0 %v1790
        %2011 = vmatprep.subr.mxu0 %v1798
        %2012 = vmatpush1.msra.mxu0 %v1796
        %2013 = vmatprep.subr.mxu0 %v1804
        %2014 = vmatpush1.msra.mxu0 %v1802
        %2015 = vmatprep.subr.mxu0 %v1810
        %2016 = vmatpush1.msra.mxu0 %v1808
        %2017 = vmatprep.subr.mxu0 %v1816
        %2018 = vmatpush1.msra.mxu0 %v1814
        %2019 = vmatprep.subr.mxu0 %v1822
        %2020 = vmatpush1.msra.mxu0 %v1820
        %2021 = vmatprep.subr.mxu0 %v1828
        %2022 = vmatpush1.msra.mxu0 %v1826
        %2023 = vmatprep.subr.mxu0 0.0
        %2024 = vmatpush1.msra.mxu0 0.0
        %2025 = vmatprep.subr.mxu0 0.0
        %2026 = vmatpush1.msra.mxu0 0.0
        %2027 = vmatprep.subr.mxu0 0.0
        %2028 = vmatpush1.msra.mxu0 0.0
        %2029 = vmatprep.subr.mxu0 0.0
        %2030 = vmatpush1.msra.mxu0 0.0
        %2031 = vmatprep.subr.mxu0 0.0
        %2032 = vmatpush1.msra.mxu0 0.0
        %2033 = vmatprep.subr.mxu0 0.0
        %2034 = vmatpush1.msra.mxu0 0.0
        %2035 = vmatprep.subr.mxu0 0.0
        %2036 = vmatpush1.msra.mxu0 0.0
        %2037 = vmatprep.subr.mxu0 0.0
        %2038 = vmatpush1.msra.mxu0 0.0
        %2039 = vmatprep.subr.mxu0 0.0
        %2040 = vmatpush1.msra.mxu0 0.0
        %2041 = vmatprep.subr.mxu0 0.0
        %2042 = vmatpush1.msra.mxu0 0.0
        %2043 = vmatprep.subr.mxu0 0.0
        %2044 = vmatpush1.msra.mxu0 0.0
        %2045 = vmatprep.subr.mxu0 0.0
        %2046 = vmatpush1.msra.mxu0 0.0
        %2047 = vmatprep.subr.mxu0 0.0
        %2048 = vmatpush1.msra.mxu0 0.0
        %2049 = vmatprep.subr.mxu0 0.0
        %2050 = vmatpush1.msra.mxu0 0.0
        %2051 = vmatprep.subr.mxu0 0.0
        %2052 = vmatpush1.msra.mxu0 0.0
        %2053 = vmatprep.subr.mxu0 0.0
        %2054 = vmatpush1.msra.mxu0 0.0
        %2055 = vmatprep.mubr.f32.mxu0 0.0
        %2056 = vmatmul.mubr.f32.gmra.mrb[0].mxu0 %v405
        %v2057 = vpop.f32.mrb[0].mxu0
        %v2058 = vadd.f32 %v1897, %v2057
        %v2059 = vpop.f32.mrb[0].mxu0
        %v2060 = vadd.f32 %v1899, %v2059
        %2061 = vmatprep.mubr.f32.mxu0 0.0
        %2062 = vmatmul.mubr.f32.gmra.mrb[0].mxu0 %v406
        %v2063 = vpop.f32.mrb[0].mxu0
        %v2064 = vadd.f32 %v1903, %v2063
        %v2065 = vpop.f32.mrb[0].mxu0
        %v2066 = vadd.f32 %v1905, %v2065
        %2067 = vmatprep.mubr.f32.mxu0 0.0
        %2068 = vmatmul.mubr.f32.gmra.mrb[0].mxu0 %v407
        %v2069 = vpop.f32.mrb[0].mxu0
        %v2070 = vadd.f32 %v1909, %v2069
        %v2071 = vpop.f32.mrb[0].mxu0
        %v2072 = vadd.f32 %v1911, %v2071
        %2073 = vmatprep.mubr.f32.mxu0 0.0
        %2074 = vmatmul.mubr.f32.gmra.mrb[0].mxu0 %v408
        %v2075 = vpop.f32.mrb[0].mxu0
        %v2076 = vadd.f32 %v1915, %v2075
        %v2077 = vpop.f32.mrb[0].mxu0
        %v2078 = vadd.f32 %v1917, %v2077
        %2079 = vmatprep.mubr.f32.mxu0 0.0
        %2080 = vmatmul.mubr.f32.gmra.mrb[0].mxu0 %v409
        %v2081 = vpop.f32.mrb[0].mxu0
        %v2082 = vadd.f32 %v1921, %v2081
        %v2083 = vpop.f32.mrb[0].mxu0
        %v2084 = vadd.f32 %v1923, %v2083
        %2085 = vmatprep.mubr.f32.mxu0 0.0
        %2086 = vmatmul.mubr.f32.gmra.mrb[0].mxu0 %v410
        %v2087 = vpop.f32.mrb[0].mxu0
        %v2088 = vadd.f32 %v1927, %v2087
        %v2089 = vpop.f32.mrb[0].mxu0
        %v2090 = vadd.f32 %v1929, %v2089
        %2091 = vmatprep.mubr.f32.mxu0 0.0
        %2092 = vmatmul.mubr.f32.gmra.mrb[0].mxu0 %v411
        %v2093 = vpop.f32.mrb[0].mxu0
        %v2094 = vadd.f32 %v1933, %v2093
        %v2095 = vpop.f32.mrb[0].mxu0
        %v2096 = vadd.f32 %v1935, %v2095
        %2097 = vmatprep.mubr.f32.mxu0 0.0
        %2098 = vmatmul.mubr.f32.gmra.mrb[0].mxu0 %v412
        %v2099 = vpop.f32.mrb[0].mxu0
        %v2100 = vadd.f32 %v1939, %v2099
        %v2101 = vpop.f32.mrb[0].mxu0
        %v2102 = vadd.f32 %v1941, %v2101
        %2103 = vmatprep.mubr.f32.mxu0 0.0
        %2104 = vmatmul.mubr.f32.gmra.mrb[0].mxu0 %v413
        %v2105 = vpop.f32.mrb[0].mxu0
        %v2106 = vadd.f32 %v1945, %v2105
        %v2107 = vpop.f32.mrb[0].mxu0
        %v2108 = vadd.f32 %v1947, %v2107
        %2109 = vmatprep.mubr.f32.mxu0 0.0
        %2110 = vmatmul.mubr.f32.gmra.mrb[0].mxu0 %v414
        %v2111 = vpop.f32.mrb[0].mxu0
        %v2112 = vadd.f32 %v1951, %v2111
        %v2113 = vpop.f32.mrb[0].mxu0
        %v2114 = vadd.f32 %v1953, %v2113
        %2115 = vmatprep.mubr.f32.mxu0 0.0
        %2116 = vmatmul.mubr.f32.gmra.mrb[0].mxu0 %v415
        %v2117 = vpop.f32.mrb[0].mxu0
        %v2118 = vadd.f32 %v1957, %v2117
        %v2119 = vpop.f32.mrb[0].mxu0
        %v2120 = vadd.f32 %v1959, %v2119
        %2121 = vmatprep.mubr.f32.mxu0 0.0
        %2122 = vmatmul.mubr.f32.gmra.mrb[0].mxu0 %v416
        %v2123 = vpop.f32.mrb[0].mxu0
        %v2124 = vadd.f32 %v1963, %v2123
        %v2125 = vpop.f32.mrb[0].mxu0
        %v2126 = vadd.f32 %v1965, %v2125
        %2127 = vmatprep.mubr.f32.mxu0 0.0
        %2128 = vmatmul.mubr.f32.gmra.mrb[0].mxu0 %v417
        %v2129 = vpop.f32.mrb[0].mxu0
        %v2130 = vadd.f32 %v1969, %v2129
        %v2131 = vpop.f32.mrb[0].mxu0
        %v2132 = vadd.f32 %v1971, %v2131
        %2133 = vmatprep.mubr.f32.mxu0 0.0
        %2134 = vmatmul.mubr.f32.gmra.mrb[0].mxu0 %v418
        %v2135 = vpop.f32.mrb[0].mxu0
        %v2136 = vadd.f32 %v1975, %v2135
        %v2137 = vpop.f32.mrb[0].mxu0
        %v2138 = vadd.f32 %v1977, %v2137
        %2139 = vmatprep.mubr.f32.mxu0 0.0
        %2140 = vmatmul.mubr.f32.gmra.mrb[0].mxu0 %v419
        %v2141 = vpop.f32.mrb[0].mxu0
        %v2142 = vadd.f32 %v1981, %v2141
        %v2143 = vpop.f32.mrb[0].mxu0
        %v2144 = vadd.f32 %v1983, %v2143
        %2145 = vmatprep.mubr.f32.mxu0 0.0
        %2146 = vmatmul.mubr.f32.gmra.mrb[0].mxu0 %v420
        %v2147 = vpop.f32.mrb[0].mxu0
        %v2148 = vadd.f32 %v1987, %v2147
        %v2149 = vpop.f32.mrb[0].mxu0
        %v2150 = vadd.f32 %v1989, %v2149
        %2151 = vdwg.mxu0
        %v2153 = vlaneseq
        %v2154 = vshrl.u32 %v2153, 7
        %v2155 = vsub.s32 0, %v2154
        %v2156 = vrot.slane %v1668, %v2155
        %v2157 = vlaneseq
        %v2158 = vshrl.u32 %v2157, 7
        %v2159 = vsub.s32 1, %v2158
        %v2160 = vrot.slane %v1668, %v2159
        %v2163 = vadd.f32 %v2058, %v2156
        %v2164 = vadd.f32 %v2060, %v2160
        %v2165 = vadd.f32 %v2064, %v2156
        %v2166 = vadd.f32 %v2066, %v2160
        %v2167 = vadd.f32 %v2070, %v2156
        %v2168 = vadd.f32 %v2072, %v2160
        %v2169 = vadd.f32 %v2076, %v2156
        %v2170 = vadd.f32 %v2078, %v2160
        %v2171 = vadd.f32 %v2082, %v2156
        %v2172 = vadd.f32 %v2084, %v2160
        %v2173 = vadd.f32 %v2088, %v2156
        %v2174 = vadd.f32 %v2090, %v2160
        %v2175 = vadd.f32 %v2094, %v2156
        %v2176 = vadd.f32 %v2096, %v2160
        %v2177 = vadd.f32 %v2100, %v2156
        %v2178 = vadd.f32 %v2102, %v2160
        %v2179 = vadd.f32 %v2106, %v2156
        %v2180 = vadd.f32 %v2108, %v2160
        %v2181 = vadd.f32 %v2112, %v2156
        %v2182 = vadd.f32 %v2114, %v2160
        %v2183 = vadd.f32 %v2118, %v2156
        %v2184 = vadd.f32 %v2120, %v2160
        %v2185 = vadd.f32 %v2124, %v2156
        %v2186 = vadd.f32 %v2126, %v2160
        %v2187 = vadd.f32 %v2130, %v2156
        %v2188 = vadd.f32 %v2132, %v2160
        %v2189 = vadd.f32 %v2136, %v2156
        %v2190 = vadd.f32 %v2138, %v2160
        %v2191 = vadd.f32 %v2142, %v2156
        %v2192 = vadd.f32 %v2144, %v2160
        %v2193 = vadd.f32 %v2148, %v2156
        %v2194 = vadd.f32 %v2150, %v2160
        %v2195 = vmax.f32 %v2163, 0.0
        %v2196 = vmax.f32 %v2164, 0.0
        %v2197 = vmax.f32 %v2165, 0.0
        %v2198 = vmax.f32 %v2166, 0.0
        %v2199 = vmax.f32 %v2167, 0.0
        %v2200 = vmax.f32 %v2168, 0.0
        %v2201 = vmax.f32 %v2169, 0.0
        %v2202 = vmax.f32 %v2170, 0.0
        %v2203 = vmax.f32 %v2171, 0.0
        %v2204 = vmax.f32 %v2172, 0.0
        %v2205 = vmax.f32 %v2173, 0.0
        %v2206 = vmax.f32 %v2174, 0.0
        %v2207 = vmax.f32 %v2175, 0.0
        %v2208 = vmax.f32 %v2176, 0.0
        %v2209 = vmax.f32 %v2177, 0.0
        %v2210 = vmax.f32 %v2178, 0.0
        %v2211 = vmax.f32 %v2179, 0.0
        %v2212 = vmax.f32 %v2180, 0.0
        %v2213 = vmax.f32 %v2181, 0.0
        %v2214 = vmax.f32 %v2182, 0.0
        %v2215 = vmax.f32 %v2183, 0.0
        %v2216 = vmax.f32 %v2184, 0.0
        %v2217 = vmax.f32 %v2185, 0.0
        %v2218 = vmax.f32 %v2186, 0.0
        %v2219 = vmax.f32 %v2187, 0.0
        %v2220 = vmax.f32 %v2188, 0.0
        %v2221 = vmax.f32 %v2189, 0.0
        %v2222 = vmax.f32 %v2190, 0.0
        %v2223 = vmax.f32 %v2191, 0.0
        %v2224 = vmax.f32 %v2192, 0.0
        %v2225 = vmax.f32 %v2193, 0.0
        %v2226 = vmax.f32 %v2194, 0.0
        %v2227 = vadd.f32 %v819, %v2195
        %v2228 = vadd.f32 %v820, %v2196
        %v2229 = vadd.f32 %v821, %v2197
        %v2230 = vadd.f32 %v822, %v2198
        %v2231 = vadd.f32 %v823, %v2199
        %v2232 = vadd.f32 %v824, %v2200
        %v2233 = vadd.f32 %v825, %v2201
        %v2234 = vadd.f32 %v826, %v2202
        %v2235 = vadd.f32 %v827, %v2203
        %v2236 = vadd.f32 %v828, %v2204
        %v2237 = vadd.f32 %v829, %v2205
        %v2238 = vadd.f32 %v830, %v2206
        %v2239 = vadd.f32 %v831, %v2207
        %v2240 = vadd.f32 %v832, %v2208
        %v2241 = vadd.f32 %v833, %v2209
        %v2242 = vadd.f32 %v834, %v2210
        %v2243 = vadd.f32 %v835, %v2211
        %v2244 = vadd.f32 %v836, %v2212
        %v2245 = vadd.f32 %v837, %v2213
        %v2246 = vadd.f32 %v838, %v2214
        %v2247 = vadd.f32 %v839, %v2215
        %v2248 = vadd.f32 %v840, %v2216
        %v2249 = vadd.f32 %v841, %v2217
        %v2250 = vadd.f32 %v842, %v2218
        %v2251 = vadd.f32 %v843, %v2219
        %v2252 = vadd.f32 %v844, %v2220
        %v2253 = vadd.f32 %v845, %v2221
        %v2254 = vadd.f32 %v846, %v2222
        %v2255 = vadd.f32 %v847, %v2223
        %v2256 = vadd.f32 %v848, %v2224
        %v2257 = vadd.f32 %v849, %v2225
        %v2258 = vadd.f32 %v850, %v2226
        %v2259 = vmul.f32 %v2227, 0.5
        %v2260 = vmul.f32 %v2228, 0.5
        %v2261 = vmul.f32 %v2229, 0.5
        %v2262 = vmul.f32 %v2230, 0.5
        %v2263 = vmul.f32 %v2231, 0.5
        %v2264 = vmul.f32 %v2232, 0.5
        %v2265 = vmul.f32 %v2233, 0.5
        %v2266 = vmul.f32 %v2234, 0.5
        %v2267 = vmul.f32 %v2235, 0.5
        %v2268 = vmul.f32 %v2236, 0.5
        %v2269 = vmul.f32 %v2237, 0.5
        %v2270 = vmul.f32 %v2238, 0.5
        %v2271 = vmul.f32 %v2239, 0.5
        %v2272 = vmul.f32 %v2240, 0.5
        %v2273 = vmul.f32 %v2241, 0.5
        %v2274 = vmul.f32 %v2242, 0.5
        %v2275 = vmul.f32 %v2243, 0.5
        %v2276 = vmul.f32 %v2244, 0.5
        %v2277 = vmul.f32 %v2245, 0.5
        %v2278 = vmul.f32 %v2246, 0.5
        %v2279 = vmul.f32 %v2247, 0.5
        %v2280 = vmul.f32 %v2248, 0.5
        %v2281 = vmul.f32 %v2249, 0.5
        %v2282 = vmul.f32 %v2250, 0.5
        %v2283 = vmul.f32 %v2251, 0.5
        %v2284 = vmul.f32 %v2252, 0.5
        %v2285 = vmul.f32 %v2253, 0.5
        %v2286 = vmul.f32 %v2254, 0.5
        %v2287 = vmul.f32 %v2255, 0.5
        %v2288 = vmul.f32 %v2256, 0.5
        %v2289 = vmul.f32 %v2257, 0.5
        %v2290 = vmul.f32 %v2258, 0.5
        %s2291 = scalar_lea.vmem [#allocation6], 2048
        %v2292 = vld [vmem:[%s2291] sm:$0xff]
        %v2293 = vld [vmem:[%s2291 + $0x8] sm:$0xff]
        %v2294 = vld [vmem:[%s2291 + $0x10] sm:$0xff]
        %v2295 = vld [vmem:[%s2291 + $0x18] sm:$0xff]
        %v2296 = vld [vmem:[%s2291 + $0x20] sm:$0xff]
        %v2297 = vld [vmem:[%s2291 + $0x28] sm:$0xff]
        %v2298 = vld [vmem:[%s2291 + $0x30] sm:$0xff]
        %v2299 = vld [vmem:[%s2291 + $0x38] sm:$0xff]
        %v2300 = vld [vmem:[%s2291 + $0x40] sm:$0xff]
        %v2301 = vld [vmem:[%s2291 + $0x48] sm:$0xff]
        %v2302 = vld [vmem:[%s2291 + $0x50] sm:$0xff]
        %v2303 = vld [vmem:[%s2291 + $0x58] sm:$0xff]
        %v2304 = vld [vmem:[%s2291 + $0x60] sm:$0xff]
        %v2305 = vld [vmem:[%s2291 + $0x68] sm:$0xff]
        %v2306 = vld [vmem:[%s2291 + $0x70] sm:$0xff]
        %v2307 = vld [vmem:[%s2291 + $0x78] sm:$0xff]
        %v2308 = vld [vmem:[%s2291 + $0x80] sm:$0xff]
        %v2309 = vld [vmem:[%s2291 + $0x88] sm:$0xff]
        %v2310 = vld [vmem:[%s2291 + $0x90] sm:$0xff]
        %v2311 = vld [vmem:[%s2291 + $0x98] sm:$0xff]
        %v2312 = vld [vmem:[%s2291 + $0xa0] sm:$0xff]
        %v2313 = vld [vmem:[%s2291 + $0xa8] sm:$0xff]
        %v2314 = vld [vmem:[%s2291 + $0xb0] sm:$0xff]
        %v2315 = vld [vmem:[%s2291 + $0xb8] sm:$0xff]
        %v2316 = vld [vmem:[%s2291 + $0xc0] sm:$0xff]
        %v2317 = vld [vmem:[%s2291 + $0xc8] sm:$0xff]
        %v2318 = vld [vmem:[%s2291 + $0xd0] sm:$0xff]
        %v2319 = vld [vmem:[%s2291 + $0xd8] sm:$0xff]
        %v2320 = vld [vmem:[%s2291 + $0xe0] sm:$0xff]
        %v2321 = vld [vmem:[%s2291 + $0xe8] sm:$0xff]
        %v2322 = vld [vmem:[%s2291 + $0xf0] sm:$0xff]
        %v2323 = vld [vmem:[%s2291 + $0xf8] sm:$0xff]
        %v2324 = vld [vmem:[%s2291 + $0x100] sm:$0xff]
        %v2325 = vld [vmem:[%s2291 + $0x108] sm:$0xff]
        %v2326 = vld [vmem:[%s2291 + $0x110] sm:$0xff]
        %v2327 = vld [vmem:[%s2291 + $0x118] sm:$0xff]
        %v2328 = vld [vmem:[%s2291 + $0x120] sm:$0xff]
        %v2329 = vld [vmem:[%s2291 + $0x128] sm:$0xff]
        %v2330 = vld [vmem:[%s2291 + $0x130] sm:$0xff]
        %v2331 = vld [vmem:[%s2291 + $0x138] sm:$0xff]
        %v2332 = vld [vmem:[%s2291 + $0x140] sm:$0xff]
        %v2333 = vld [vmem:[%s2291 + $0x148] sm:$0xff]
        %v2334 = vld [vmem:[%s2291 + $0x150] sm:$0xff]
        %v2335 = vld [vmem:[%s2291 + $0x158] sm:$0xff]
        %v2336 = vld [vmem:[%s2291 + $0x160] sm:$0xff]
        %v2337 = vld [vmem:[%s2291 + $0x168] sm:$0xff]
        %v2338 = vld [vmem:[%s2291 + $0x170] sm:$0xff]
        %v2339 = vld [vmem:[%s2291 + $0x178] sm:$0xff]
        %v2340 = vld [vmem:[%s2291 + $0x180] sm:$0xff]
        %v2341 = vld [vmem:[%s2291 + $0x188] sm:$0xff]
        %v2342 = vld [vmem:[%s2291 + $0x190] sm:$0xff]
        %v2343 = vld [vmem:[%s2291 + $0x198] sm:$0xff]
        %v2344 = vld [vmem:[%s2291 + $0x1a0] sm:$0xff]
        %v2345 = vld [vmem:[%s2291 + $0x1a8] sm:$0xff]
        %v2346 = vld [vmem:[%s2291 + $0x1b0] sm:$0xff]
        %v2347 = vld [vmem:[%s2291 + $0x1b8] sm:$0xff]
        %v2348 = vld [vmem:[%s2291 + $0x1c0] sm:$0xff]
        %v2349 = vld [vmem:[%s2291 + $0x1c8] sm:$0xff]
        %v2350 = vld [vmem:[%s2291 + $0x1d0] sm:$0xff]
        %v2351 = vld [vmem:[%s2291 + $0x1d8] sm:$0xff]
        %v2352 = vld [vmem:[%s2291 + $0x1e0] sm:$0xff]
        %v2353 = vld [vmem:[%s2291 + $0x1e8] sm:$0xff]
        %v2354 = vld [vmem:[%s2291 + $0x1f0] sm:$0xff]
        %v2355 = vld [vmem:[%s2291 + $0x1f8] sm:$0xff]
        %v2356 = vld [vmem:[%s2291 + $0x200] sm:$0xff]
        %v2357 = vld [vmem:[%s2291 + $0x208] sm:$0xff]
        %v2358 = vld [vmem:[%s2291 + $0x210] sm:$0xff]
        %v2359 = vld [vmem:[%s2291 + $0x218] sm:$0xff]
        %v2360 = vld [vmem:[%s2291 + $0x220] sm:$0xff]
        %v2361 = vld [vmem:[%s2291 + $0x228] sm:$0xff]
        %v2362 = vld [vmem:[%s2291 + $0x230] sm:$0xff]
        %v2363 = vld [vmem:[%s2291 + $0x238] sm:$0xff]
        %v2364 = vld [vmem:[%s2291 + $0x240] sm:$0xff]
        %v2365 = vld [vmem:[%s2291 + $0x248] sm:$0xff]
        %v2366 = vld [vmem:[%s2291 + $0x250] sm:$0xff]
        %v2367 = vld [vmem:[%s2291 + $0x258] sm:$0xff]
        %v2368 = vld [vmem:[%s2291 + $0x260] sm:$0xff]
        %v2369 = vld [vmem:[%s2291 + $0x268] sm:$0xff]
        %v2370 = vld [vmem:[%s2291 + $0x270] sm:$0xff]
        %v2371 = vld [vmem:[%s2291 + $0x278] sm:$0xff]
        %v2372 = vld [vmem:[%s2291 + $0x280] sm:$0xff]
        %v2373 = vld [vmem:[%s2291 + $0x288] sm:$0xff]
        %v2374 = vld [vmem:[%s2291 + $0x290] sm:$0xff]
        %v2375 = vld [vmem:[%s2291 + $0x298] sm:$0xff]
        %v2376 = vld [vmem:[%s2291 + $0x2a0] sm:$0xff]
        %v2377 = vld [vmem:[%s2291 + $0x2a8] sm:$0xff]
        %v2378 = vld [vmem:[%s2291 + $0x2b0] sm:$0xff]
        %v2379 = vld [vmem:[%s2291 + $0x2b8] sm:$0xff]
        %v2380 = vld [vmem:[%s2291 + $0x2c0] sm:$0xff]
        %v2381 = vld [vmem:[%s2291 + $0x2c8] sm:$0xff]
        %v2382 = vld [vmem:[%s2291 + $0x2d0] sm:$0xff]
        %v2383 = vld [vmem:[%s2291 + $0x2d8] sm:$0xff]
        %v2384 = vld [vmem:[%s2291 + $0x2e0] sm:$0xff]
        %v2385 = vld [vmem:[%s2291 + $0x2e8] sm:$0xff]
        %v2386 = vld [vmem:[%s2291 + $0x2f0] sm:$0xff]
        %v2387 = vld [vmem:[%s2291 + $0x2f8] sm:$0xff]
        %v2388 = vld [vmem:[%s2291 + $0x300] sm:$0xff]
        %v2389 = vld [vmem:[%s2291 + $0x308] sm:$0xff]
        %v2390 = vld [vmem:[%s2291 + $0x310] sm:$0xff]
        %v2391 = vld [vmem:[%s2291 + $0x318] sm:$0xff]
        %v2392 = vld [vmem:[%s2291 + $0x320] sm:$0xff]
        %v2393 = vld [vmem:[%s2291 + $0x328] sm:$0xff]
        %v2394 = vld [vmem:[%s2291 + $0x330] sm:$0xff]
        %v2395 = vld [vmem:[%s2291 + $0x338] sm:$0xff]
        %v2396 = vld [vmem:[%s2291 + $0x340] sm:$0xff]
        %v2397 = vld [vmem:[%s2291 + $0x348] sm:$0xff]
        %v2398 = vld [vmem:[%s2291 + $0x350] sm:$0xff]
        %v2399 = vld [vmem:[%s2291 + $0x358] sm:$0xff]
        %v2400 = vld [vmem:[%s2291 + $0x360] sm:$0xff]
        %v2401 = vld [vmem:[%s2291 + $0x368] sm:$0xff]
        %v2402 = vld [vmem:[%s2291 + $0x370] sm:$0xff]
        %v2403 = vld [vmem:[%s2291 + $0x378] sm:$0xff]
        %v2404 = vld [vmem:[%s2291 + $0x380] sm:$0xff]
        %v2405 = vld [vmem:[%s2291 + $0x388] sm:$0xff]
        %v2406 = vld [vmem:[%s2291 + $0x390] sm:$0xff]
        %v2407 = vld [vmem:[%s2291 + $0x398] sm:$0xff]
        %v2408 = vld [vmem:[%s2291 + $0x3a0] sm:$0xff]
        %v2409 = vld [vmem:[%s2291 + $0x3a8] sm:$0xff]
        %v2410 = vld [vmem:[%s2291 + $0x3b0] sm:$0xff]
        %v2411 = vld [vmem:[%s2291 + $0x3b8] sm:$0xff]
        %v2412 = vld [vmem:[%s2291 + $0x3c0] sm:$0xff]
        %v2413 = vld [vmem:[%s2291 + $0x3c8] sm:$0xff]
        %v2414 = vld [vmem:[%s2291 + $0x3d0] sm:$0xff]
        %v2415 = vld [vmem:[%s2291 + $0x3d8] sm:$0xff]
        %v2416 = vld [vmem:[%s2291 + $0x3e0] sm:$0xff]
        %v2417 = vld [vmem:[%s2291 + $0x3e8] sm:$0xff]
        %v2418 = vld [vmem:[%s2291 + $0x3f0] sm:$0xff]
        %v2419 = vld [vmem:[%s2291 + $0x3f8] sm:$0xff]
        %s2420 = scalar_lea.vmem %s5, 4
        %v2421 = vld [vmem:[%s2420] sm:$0x3]
        %2422 = vmatprep.subr.mxu0 %v2293
        %2423 = vmatpush1.msra.mxu0 %v2292
        %2424 = vmatprep.subr.mxu0 %v2297
        %2425 = vmatpush1.msra.mxu0 %v2296
        %2426 = vmatprep.subr.mxu0 %v2301
        %2427 = vmatpush1.msra.mxu0 %v2300
        %2428 = vmatprep.subr.mxu0 %v2305
        %2429 = vmatpush1.msra.mxu0 %v2304
        %2430 = vmatprep.subr.mxu0 %v2309
        %2431 = vmatpush1.msra.mxu0 %v2308
        %2432 = vmatprep.subr.mxu0 %v2313
        %2433 = vmatpush1.msra.mxu0 %v2312
        %2434 = vmatprep.subr.mxu0 %v2317
        %2435 = vmatpush1.msra.mxu0 %v2316
        %2436 = vmatprep.subr.mxu0 %v2321
        %2437 = vmatpush1.msra.mxu0 %v2320
        %2438 = vmatprep.subr.mxu0 %v2325
        %2439 = vmatpush1.msra.mxu0 %v2324
        %2440 = vmatprep.subr.mxu0 %v2329
        %2441 = vmatpush1.msra.mxu0 %v2328
        %2442 = vmatprep.subr.mxu0 %v2333
        %2443 = vmatpush1.msra.mxu0 %v2332
        %2444 = vmatprep.subr.mxu0 %v2337
        %2445 = vmatpush1.msra.mxu0 %v2336
        %2446 = vmatprep.subr.mxu0 %v2341
        %2447 = vmatpush1.msra.mxu0 %v2340
        %2448 = vmatprep.subr.mxu0 %v2345
        %2449 = vmatpush1.msra.mxu0 %v2344
        %2450 = vmatprep.subr.mxu0 %v2349
        %2451 = vmatpush1.msra.mxu0 %v2348
        %2452 = vmatprep.subr.mxu0 %v2353
        %2453 = vmatpush1.msra.mxu0 %v2352
        %2454 = vmatprep.subr.mxu0 %v2357
        %2455 = vmatpush1.msra.mxu0 %v2356
        %2456 = vmatprep.subr.mxu0 %v2361
        %2457 = vmatpush1.msra.mxu0 %v2360
        %2458 = vmatprep.subr.mxu0 %v2365
        %2459 = vmatpush1.msra.mxu0 %v2364
        %2460 = vmatprep.subr.mxu0 %v2369
        %2461 = vmatpush1.msra.mxu0 %v2368
        %2462 = vmatprep.subr.mxu0 %v2373
        %2463 = vmatpush1.msra.mxu0 %v2372
        %2464 = vmatprep.subr.mxu0 %v2377
        %2465 = vmatpush1.msra.mxu0 %v2376
        %2466 = vmatprep.subr.mxu0 %v2381
        %2467 = vmatpush1.msra.mxu0 %v2380
        %2468 = vmatprep.subr.mxu0 %v2385
        %2469 = vmatpush1.msra.mxu0 %v2384
        %2470 = vmatprep.subr.mxu0 %v2389
        %2471 = vmatpush1.msra.mxu0 %v2388
        %2472 = vmatprep.subr.mxu0 %v2393
        %2473 = vmatpush1.msra.mxu0 %v2392
        %2474 = vmatprep.subr.mxu0 %v2397
        %2475 = vmatpush1.msra.mxu0 %v2396
        %2476 = vmatprep.subr.mxu0 %v2401
        %2477 = vmatpush1.msra.mxu0 %v2400
        %2478 = vmatprep.subr.mxu0 %v2405
        %2479 = vmatpush1.msra.mxu0 %v2404
        %2480 = vmatprep.subr.mxu0 %v2409
        %2481 = vmatpush1.msra.mxu0 %v2408
        %2482 = vmatprep.subr.mxu0 %v2413
        %2483 = vmatpush1.msra.mxu0 %v2412
        %2484 = vmatprep.subr.mxu0 %v2417
        %2485 = vmatpush1.msra.mxu0 %v2416
        %2486 = vmatprep.mubr.f32.mxu0 %v2260
        %2487 = vmatmul.mubr.f32.gmra.mrb[0].mxu0 %v2259
        %v2488 = vpop.f32.mrb[0].mxu0
        %v2489 = vadd.f32 0.0, %v2488
        %v2490 = vpop.f32.mrb[0].mxu0
        %v2491 = vadd.f32 0.0, %v2490
        %2492 = vmatprep.mubr.f32.mxu0 %v2262
        %2493 = vmatmul.mubr.f32.gmra.mrb[0].mxu0 %v2261
        %v2494 = vpop.f32.mrb[0].mxu0
        %v2495 = vadd.f32 0.0, %v2494
        %v2496 = vpop.f32.mrb[0].mxu0
        %v2497 = vadd.f32 0.0, %v2496
        %2498 = vmatprep.mubr.f32.mxu0 %v2264
        %2499 = vmatmul.mubr.f32.gmra.mrb[0].mxu0 %v2263
        %v2500 = vpop.f32.mrb[0].mxu0
        %v2501 = vadd.f32 0.0, %v2500
        %v2502 = vpop.f32.mrb[0].mxu0
        %v2503 = vadd.f32 0.0, %v2502
        %2504 = vmatprep.mubr.f32.mxu0 %v2266
        %2505 = vmatmul.mubr.f32.gmra.mrb[0].mxu0 %v2265
        %v2506 = vpop.f32.mrb[0].mxu0
        %v2507 = vadd.f32 0.0, %v2506
        %v2508 = vpop.f32.mrb[0].mxu0
        %v2509 = vadd.f32 0.0, %v2508
        %2510 = vmatprep.mubr.f32.mxu0 %v2268
        %2511 = vmatmul.mubr.f32.gmra.mrb[0].mxu0 %v2267
        %v2512 = vpop.f32.mrb[0].mxu0
        %v2513 = vadd.f32 0.0, %v2512
        %v2514 = vpop.f32.mrb[0].mxu0
        %v2515 = vadd.f32 0.0, %v2514
        %2516 = vmatprep.mubr.f32.mxu0 %v2270
        %2517 = vmatmul.mubr.f32.gmra.mrb[0].mxu0 %v2269
        %v2518 = vpop.f32.mrb[0].mxu0
        %v2519 = vadd.f32 0.0, %v2518
        %v2520 = vpop.f32.mrb[0].mxu0
        %v2521 = vadd.f32 0.0, %v2520
        %2522 = vmatprep.mubr.f32.mxu0 %v2272
        %2523 = vmatmul.mubr.f32.gmra.mrb[0].mxu0 %v2271
        %v2524 = vpop.f32.mrb[0].mxu0
        %v2525 = vadd.f32 0.0, %v2524
        %v2526 = vpop.f32.mrb[0].mxu0
        %v2527 = vadd.f32 0.0, %v2526
        %2528 = vmatprep.mubr.f32.mxu0 %v2274
        %2529 = vmatmul.mubr.f32.gmra.mrb[0].mxu0 %v2273
        %v2530 = vpop.f32.mrb[0].mxu0
        %v2531 = vadd.f32 0.0, %v2530
        %v2532 = vpop.f32.mrb[0].mxu0
        %v2533 = vadd.f32 0.0, %v2532
        %2534 = vmatprep.mubr.f32.mxu0 %v2276
        %2535 = vmatmul.mubr.f32.gmra.mrb[0].mxu0 %v2275
        %v2536 = vpop.f32.mrb[0].mxu0
        %v2537 = vadd.f32 0.0, %v2536
        %v2538 = vpop.f32.mrb[0].mxu0
        %v2539 = vadd.f32 0.0, %v2538
        %2540 = vmatprep.mubr.f32.mxu0 %v2278
        %2541 = vmatmul.mubr.f32.gmra.mrb[0].mxu0 %v2277
        %v2542 = vpop.f32.mrb[0].mxu0
        %v2543 = vadd.f32 0.0, %v2542
        %v2544 = vpop.f32.mrb[0].mxu0
        %v2545 = vadd.f32 0.0, %v2544
        %2546 = vmatprep.mubr.f32.mxu0 %v2280
        %2547 = vmatmul.mubr.f32.gmra.mrb[0].mxu0 %v2279
        %v2548 = vpop.f32.mrb[0].mxu0
        %v2549 = vadd.f32 0.0, %v2548
        %v2550 = vpop.f32.mrb[0].mxu0
        %v2551 = vadd.f32 0.0, %v2550
        %2552 = vmatprep.mubr.f32.mxu0 %v2282
        %2553 = vmatmul.mubr.f32.gmra.mrb[0].mxu0 %v2281
        %v2554 = vpop.f32.mrb[0].mxu0
        %v2555 = vadd.f32 0.0, %v2554
        %v2556 = vpop.f32.mrb[0].mxu0
        %v2557 = vadd.f32 0.0, %v2556
        %2558 = vmatprep.mubr.f32.mxu0 %v2284
        %2559 = vmatmul.mubr.f32.gmra.mrb[0].mxu0 %v2283
        %v2560 = vpop.f32.mrb[0].mxu0
        %v2561 = vadd.f32 0.0, %v2560
        %v2562 = vpop.f32.mrb[0].mxu0
        %v2563 = vadd.f32 0.0, %v2562
        %2564 = vmatprep.mubr.f32.mxu0 %v2286
        %2565 = vmatmul.mubr.f32.gmra.mrb[0].mxu0 %v2285
        %v2566 = vpop.f32.mrb[0].mxu0
        %v2567 = vadd.f32 0.0, %v2566
        %v2568 = vpop.f32.mrb[0].mxu0
        %v2569 = vadd.f32 0.0, %v2568
        %2570 = vmatprep.mubr.f32.mxu0 %v2288
        %2571 = vmatmul.mubr.f32.gmra.mrb[0].mxu0 %v2287
        %v2572 = vpop.f32.mrb[0].mxu0
        %v2573 = vadd.f32 0.0, %v2572
        %v2574 = vpop.f32.mrb[0].mxu0
        %v2575 = vadd.f32 0.0, %v2574
        %2576 = vmatprep.mubr.f32.mxu0 %v2290
        %2577 = vmatmul.mubr.f32.gmra.mrb[0].mxu0 %v2289
        %v2578 = vpop.f32.mrb[0].mxu0
        %v2579 = vadd.f32 0.0, %v2578
        %v2580 = vpop.f32.mrb[0].mxu0
        %v2581 = vadd.f32 0.0, %v2580
        %2582 = vdwg.mxu0
        %2583 = vmatprep.subr.mxu0 %v2295
        %2584 = vmatpush1.msra.mxu0 %v2294
        %2585 = vmatprep.subr.mxu0 %v2299
        %2586 = vmatpush1.msra.mxu0 %v2298
        %2587 = vmatprep.subr.mxu0 %v2303
        %2588 = vmatpush1.msra.mxu0 %v2302
        %2589 = vmatprep.subr.mxu0 %v2307
        %2590 = vmatpush1.msra.mxu0 %v2306
        %2591 = vmatprep.subr.mxu0 %v2311
        %2592 = vmatpush1.msra.mxu0 %v2310
        %2593 = vmatprep.subr.mxu0 %v2315
        %2594 = vmatpush1.msra.mxu0 %v2314
        %2595 = vmatprep.subr.mxu0 %v2319
        %2596 = vmatpush1.msra.mxu0 %v2318
        %2597 = vmatprep.subr.mxu0 %v2323
        %2598 = vmatpush1.msra.mxu0 %v2322
        %2599 = vmatprep.subr.mxu0 %v2327
        %2600 = vmatpush1.msra.mxu0 %v2326
        %2601 = vmatprep.subr.mxu0 %v2331
        %2602 = vmatpush1.msra.mxu0 %v2330
        %2603 = vmatprep.subr.mxu0 %v2335
        %2604 = vmatpush1.msra.mxu0 %v2334
        %2605 = vmatprep.subr.mxu0 %v2339
        %2606 = vmatpush1.msra.mxu0 %v2338
        %2607 = vmatprep.subr.mxu0 %v2343
        %2608 = vmatpush1.msra.mxu0 %v2342
        %2609 = vmatprep.subr.mxu0 %v2347
        %2610 = vmatpush1.msra.mxu0 %v2346
        %2611 = vmatprep.subr.mxu0 %v2351
        %2612 = vmatpush1.msra.mxu0 %v2350
        %2613 = vmatprep.subr.mxu0 %v2355
        %2614 = vmatpush1.msra.mxu0 %v2354
        %2615 = vmatprep.subr.mxu0 %v2359
        %2616 = vmatpush1.msra.mxu0 %v2358
        %2617 = vmatprep.subr.mxu0 %v2363
        %2618 = vmatpush1.msra.mxu0 %v2362
        %2619 = vmatprep.subr.mxu0 %v2367
        %2620 = vmatpush1.msra.mxu0 %v2366
        %2621 = vmatprep.subr.mxu0 %v2371
        %2622 = vmatpush1.msra.mxu0 %v2370
        %2623 = vmatprep.subr.mxu0 %v2375
        %2624 = vmatpush1.msra.mxu0 %v2374
        %2625 = vmatprep.subr.mxu0 %v2379
        %2626 = vmatpush1.msra.mxu0 %v2378
        %2627 = vmatprep.subr.mxu0 %v2383
        %2628 = vmatpush1.msra.mxu0 %v2382
        %2629 = vmatprep.subr.mxu0 %v2387
        %2630 = vmatpush1.msra.mxu0 %v2386
        %2631 = vmatprep.subr.mxu0 %v2391
        %2632 = vmatpush1.msra.mxu0 %v2390
        %2633 = vmatprep.subr.mxu0 %v2395
        %2634 = vmatpush1.msra.mxu0 %v2394
        %2635 = vmatprep.subr.mxu0 %v2399
        %2636 = vmatpush1.msra.mxu0 %v2398
        %2637 = vmatprep.subr.mxu0 %v2403
        %2638 = vmatpush1.msra.mxu0 %v2402
        %2639 = vmatprep.subr.mxu0 %v2407
        %2640 = vmatpush1.msra.mxu0 %v2406
        %2641 = vmatprep.subr.mxu0 %v2411
        %2642 = vmatpush1.msra.mxu0 %v2410
        %2643 = vmatprep.subr.mxu0 %v2415
        %2644 = vmatpush1.msra.mxu0 %v2414
        %2645 = vmatprep.subr.mxu0 %v2419
        %2646 = vmatpush1.msra.mxu0 %v2418
        %2647 = vmatprep.mubr.f32.mxu0 %v2260
        %2648 = vmatmul.mubr.f32.gmra.mrb[0].mxu0 %v2259
        %v2649 = vpop.f32.mrb[0].mxu0
        %v2650 = vadd.f32 0.0, %v2649
        %v2651 = vpop.f32.mrb[0].mxu0
        %v2652 = vadd.f32 0.0, %v2651
        %2653 = vmatprep.mubr.f32.mxu0 %v2262
        %2654 = vmatmul.mubr.f32.gmra.mrb[0].mxu0 %v2261
        %v2655 = vpop.f32.mrb[0].mxu0
        %v2656 = vadd.f32 0.0, %v2655
        %v2657 = vpop.f32.mrb[0].mxu0
        %v2658 = vadd.f32 0.0, %v2657
        %2659 = vmatprep.mubr.f32.mxu0 %v2264
        %2660 = vmatmul.mubr.f32.gmra.mrb[0].mxu0 %v2263
        %v2661 = vpop.f32.mrb[0].mxu0
        %v2662 = vadd.f32 0.0, %v2661
        %v2663 = vpop.f32.mrb[0].mxu0
        %v2664 = vadd.f32 0.0, %v2663
        %2665 = vmatprep.mubr.f32.mxu0 %v2266
        %2666 = vmatmul.mubr.f32.gmra.mrb[0].mxu0 %v2265
        %v2667 = vpop.f32.mrb[0].mxu0
        %v2668 = vadd.f32 0.0, %v2667
        %v2669 = vpop.f32.mrb[0].mxu0
        %v2670 = vadd.f32 0.0, %v2669
        %2671 = vmatprep.mubr.f32.mxu0 %v2268
        %2672 = vmatmul.mubr.f32.gmra.mrb[0].mxu0 %v2267
        %v2673 = vpop.f32.mrb[0].mxu0
        %v2674 = vadd.f32 0.0, %v2673
        %v2675 = vpop.f32.mrb[0].mxu0
        %v2676 = vadd.f32 0.0, %v2675
        %2677 = vmatprep.mubr.f32.mxu0 %v2270
        %2678 = vmatmul.mubr.f32.gmra.mrb[0].mxu0 %v2269
        %v2679 = vpop.f32.mrb[0].mxu0
        %v2680 = vadd.f32 0.0, %v2679
        %v2681 = vpop.f32.mrb[0].mxu0
        %v2682 = vadd.f32 0.0, %v2681
        %2683 = vmatprep.mubr.f32.mxu0 %v2272
        %2684 = vmatmul.mubr.f32.gmra.mrb[0].mxu0 %v2271
        %v2685 = vpop.f32.mrb[0].mxu0
        %v2686 = vadd.f32 0.0, %v2685
        %v2687 = vpop.f32.mrb[0].mxu0
        %v2688 = vadd.f32 0.0, %v2687
        %2689 = vmatprep.mubr.f32.mxu0 %v2274
        %2690 = vmatmul.mubr.f32.gmra.mrb[0].mxu0 %v2273
        %v2691 = vpop.f32.mrb[0].mxu0
        %v2692 = vadd.f32 0.0, %v2691
        %v2693 = vpop.f32.mrb[0].mxu0
        %v2694 = vadd.f32 0.0, %v2693
        %2695 = vmatprep.mubr.f32.mxu0 %v2276
        %2696 = vmatmul.mubr.f32.gmra.mrb[0].mxu0 %v2275
        %v2697 = vpop.f32.mrb[0].mxu0
        %v2698 = vadd.f32 0.0, %v2697
        %v2699 = vpop.f32.mrb[0].mxu0
        %v2700 = vadd.f32 0.0, %v2699
        %2701 = vmatprep.mubr.f32.mxu0 %v2278
        %2702 = vmatmul.mubr.f32.gmra.mrb[0].mxu0 %v2277
        %v2703 = vpop.f32.mrb[0].mxu0
        %v2704 = vadd.f32 0.0, %v2703
        %v2705 = vpop.f32.mrb[0].mxu0
        %v2706 = vadd.f32 0.0, %v2705
        %2707 = vmatprep.mubr.f32.mxu0 %v2280
        %2708 = vmatmul.mubr.f32.gmra.mrb[0].mxu0 %v2279
        %v2709 = vpop.f32.mrb[0].mxu0
        %v2710 = vadd.f32 0.0, %v2709
        %v2711 = vpop.f32.mrb[0].mxu0
        %v2712 = vadd.f32 0.0, %v2711
        %2713 = vmatprep.mubr.f32.mxu0 %v2282
        %2714 = vmatmul.mubr.f32.gmra.mrb[0].mxu0 %v2281
        %v2715 = vpop.f32.mrb[0].mxu0
        %v2716 = vadd.f32 0.0, %v2715
        %v2717 = vpop.f32.mrb[0].mxu0
        %v2718 = vadd.f32 0.0, %v2717
        %2719 = vmatprep.mubr.f32.mxu0 %v2284
        %2720 = vmatmul.mubr.f32.gmra.mrb[0].mxu0 %v2283
        %v2721 = vpop.f32.mrb[0].mxu0
        %v2722 = vadd.f32 0.0, %v2721
        %v2723 = vpop.f32.mrb[0].mxu0
        %v2724 = vadd.f32 0.0, %v2723
        %2725 = vmatprep.mubr.f32.mxu0 %v2286
        %2726 = vmatmul.mubr.f32.gmra.mrb[0].mxu0 %v2285
        %v2727 = vpop.f32.mrb[0].mxu0
        %v2728 = vadd.f32 0.0, %v2727
        %v2729 = vpop.f32.mrb[0].mxu0
        %v2730 = vadd.f32 0.0, %v2729
        %2731 = vmatprep.mubr.f32.mxu0 %v2288
        %2732 = vmatmul.mubr.f32.gmra.mrb[0].mxu0 %v2287
        %v2733 = vpop.f32.mrb[0].mxu0
        %v2734 = vadd.f32 0.0, %v2733
        %v2735 = vpop.f32.mrb[0].mxu0
        %v2736 = vadd.f32 0.0, %v2735
        %2737 = vmatprep.mubr.f32.mxu0 %v2290
        %2738 = vmatmul.mubr.f32.gmra.mrb[0].mxu0 %v2289
        %v2739 = vpop.f32.mrb[0].mxu0
        %v2740 = vadd.f32 0.0, %v2739
        %v2741 = vpop.f32.mrb[0].mxu0
        %v2742 = vadd.f32 0.0, %v2741
        %2743 = vdwg.mxu0
        %2744 = vmatprep.subr.mxu0 %v2491
        %2745 = vmatpush1.msra.mxu0 %v2489
        %2746 = vmatprep.subr.mxu0 %v2497
        %2747 = vmatpush1.msra.mxu0 %v2495
        %2748 = vmatprep.subr.mxu0 %v2503
        %2749 = vmatpush1.msra.mxu0 %v2501
        %2750 = vmatprep.subr.mxu0 %v2509
        %2751 = vmatpush1.msra.mxu0 %v2507
        %2752 = vmatprep.subr.mxu0 %v2515
        %2753 = vmatpush1.msra.mxu0 %v2513
        %2754 = vmatprep.subr.mxu0 %v2521
        %2755 = vmatpush1.msra.mxu0 %v2519
        %2756 = vmatprep.subr.mxu0 %v2527
        %2757 = vmatpush1.msra.mxu0 %v2525
        %2758 = vmatprep.subr.mxu0 %v2533
        %2759 = vmatpush1.msra.mxu0 %v2531
        %2760 = vmatprep.subr.mxu0 %v2539
        %2761 = vmatpush1.msra.mxu0 %v2537
        %2762 = vmatprep.subr.mxu0 %v2545
        %2763 = vmatpush1.msra.mxu0 %v2543
        %2764 = vmatprep.subr.mxu0 %v2551
        %2765 = vmatpush1.msra.mxu0 %v2549
        %2766 = vmatprep.subr.mxu0 %v2557
        %2767 = vmatpush1.msra.mxu0 %v2555
        %2768 = vmatprep.subr.mxu0 %v2563
        %2769 = vmatpush1.msra.mxu0 %v2561
        %2770 = vmatprep.subr.mxu0 %v2569
        %2771 = vmatpush1.msra.mxu0 %v2567
        %2772 = vmatprep.subr.mxu0 %v2575
        %2773 = vmatpush1.msra.mxu0 %v2573
        %2774 = vmatprep.subr.mxu0 %v2581
        %2775 = vmatpush1.msra.mxu0 %v2579
        %2776 = vmatprep.subr.mxu0 0.0
        %2777 = vmatpush1.msra.mxu0 0.0
        %2778 = vmatprep.subr.mxu0 0.0
        %2779 = vmatpush1.msra.mxu0 0.0
        %2780 = vmatprep.subr.mxu0 0.0
        %2781 = vmatpush1.msra.mxu0 0.0
        %2782 = vmatprep.subr.mxu0 0.0
        %2783 = vmatpush1.msra.mxu0 0.0
        %2784 = vmatprep.subr.mxu0 0.0
        %2785 = vmatpush1.msra.mxu0 0.0
        %2786 = vmatprep.subr.mxu0 0.0
        %2787 = vmatpush1.msra.mxu0 0.0
        %2788 = vmatprep.subr.mxu0 0.0
        %2789 = vmatpush1.msra.mxu0 0.0
        %2790 = vmatprep.subr.mxu0 0.0
        %2791 = vmatpush1.msra.mxu0 0.0
        %2792 = vmatprep.subr.mxu0 0.0
        %2793 = vmatpush1.msra.mxu0 0.0
        %2794 = vmatprep.subr.mxu0 0.0
        %2795 = vmatpush1.msra.mxu0 0.0
        %2796 = vmatprep.subr.mxu0 0.0
        %2797 = vmatpush1.msra.mxu0 0.0
        %2798 = vmatprep.subr.mxu0 0.0
        %2799 = vmatpush1.msra.mxu0 0.0
        %2800 = vmatprep.subr.mxu0 0.0
        %2801 = vmatpush1.msra.mxu0 0.0
        %2802 = vmatprep.subr.mxu0 0.0
        %2803 = vmatpush1.msra.mxu0 0.0
        %2804 = vmatprep.subr.mxu0 0.0
        %2805 = vmatpush1.msra.mxu0 0.0
        %2806 = vmatprep.subr.mxu0 0.0
        %2807 = vmatpush1.msra.mxu0 0.0
        %2808 = vmatprep.mubr.f32.mxu0 0.0
        %2809 = vmatmul.mubr.f32.gmra.mrb[0].mxu0 %v405
        %v2810 = vpop.f32.mrb[0].mxu0
        %v2811 = vadd.f32 %v2650, %v2810
        %v2812 = vpop.f32.mrb[0].mxu0
        %v2813 = vadd.f32 %v2652, %v2812
        %2814 = vmatprep.mubr.f32.mxu0 0.0
        %2815 = vmatmul.mubr.f32.gmra.mrb[0].mxu0 %v406
        %v2816 = vpop.f32.mrb[0].mxu0
        %v2817 = vadd.f32 %v2656, %v2816
        %v2818 = vpop.f32.mrb[0].mxu0
        %v2819 = vadd.f32 %v2658, %v2818
        %2820 = vmatprep.mubr.f32.mxu0 0.0
        %2821 = vmatmul.mubr.f32.gmra.mrb[0].mxu0 %v407
        %v2822 = vpop.f32.mrb[0].mxu0
        %v2823 = vadd.f32 %v2662, %v2822
        %v2824 = vpop.f32.mrb[0].mxu0
        %v2825 = vadd.f32 %v2664, %v2824
        %2826 = vmatprep.mubr.f32.mxu0 0.0
        %2827 = vmatmul.mubr.f32.gmra.mrb[0].mxu0 %v408
        %v2828 = vpop.f32.mrb[0].mxu0
        %v2829 = vadd.f32 %v2668, %v2828
        %v2830 = vpop.f32.mrb[0].mxu0
        %v2831 = vadd.f32 %v2670, %v2830
        %2832 = vmatprep.mubr.f32.mxu0 0.0
        %2833 = vmatmul.mubr.f32.gmra.mrb[0].mxu0 %v409
        %v2834 = vpop.f32.mrb[0].mxu0
        %v2835 = vadd.f32 %v2674, %v2834
        %v2836 = vpop.f32.mrb[0].mxu0
        %v2837 = vadd.f32 %v2676, %v2836
        %2838 = vmatprep.mubr.f32.mxu0 0.0
        %2839 = vmatmul.mubr.f32.gmra.mrb[0].mxu0 %v410
        %v2840 = vpop.f32.mrb[0].mxu0
        %v2841 = vadd.f32 %v2680, %v2840
        %v2842 = vpop.f32.mrb[0].mxu0
        %v2843 = vadd.f32 %v2682, %v2842
        %2844 = vmatprep.mubr.f32.mxu0 0.0
        %2845 = vmatmul.mubr.f32.gmra.mrb[0].mxu0 %v411
        %v2846 = vpop.f32.mrb[0].mxu0
        %v2847 = vadd.f32 %v2686, %v2846
        %v2848 = vpop.f32.mrb[0].mxu0
        %v2849 = vadd.f32 %v2688, %v2848
        %2850 = vmatprep.mubr.f32.mxu0 0.0
        %2851 = vmatmul.mubr.f32.gmra.mrb[0].mxu0 %v412
        %v2852 = vpop.f32.mrb[0].mxu0
        %v2853 = vadd.f32 %v2692, %v2852
        %v2854 = vpop.f32.mrb[0].mxu0
        %v2855 = vadd.f32 %v2694, %v2854
        %2856 = vmatprep.mubr.f32.mxu0 0.0
        %2857 = vmatmul.mubr.f32.gmra.mrb[0].mxu0 %v413
        %v2858 = vpop.f32.mrb[0].mxu0
        %v2859 = vadd.f32 %v2698, %v2858
        %v2860 = vpop.f32.mrb[0].mxu0
        %v2861 = vadd.f32 %v2700, %v2860
        %2862 = vmatprep.mubr.f32.mxu0 0.0
        %2863 = vmatmul.mubr.f32.gmra.mrb[0].mxu0 %v414
        %v2864 = vpop.f32.mrb[0].mxu0
        %v2865 = vadd.f32 %v2704, %v2864
        %v2866 = vpop.f32.mrb[0].mxu0
        %v2867 = vadd.f32 %v2706, %v2866
        %2868 = vmatprep.mubr.f32.mxu0 0.0
        %2869 = vmatmul.mubr.f32.gmra.mrb[0].mxu0 %v415
        %v2870 = vpop.f32.mrb[0].mxu0
        %v2871 = vadd.f32 %v2710, %v2870
        %v2872 = vpop.f32.mrb[0].mxu0
        %v2873 = vadd.f32 %v2712, %v2872
        %2874 = vmatprep.mubr.f32.mxu0 0.0
        %2875 = vmatmul.mubr.f32.gmra.mrb[0].mxu0 %v416
        %v2876 = vpop.f32.mrb[0].mxu0
        %v2877 = vadd.f32 %v2716, %v2876
        %v2878 = vpop.f32.mrb[0].mxu0
        %v2879 = vadd.f32 %v2718, %v2878
        %2880 = vmatprep.mubr.f32.mxu0 0.0
        %2881 = vmatmul.mubr.f32.gmra.mrb[0].mxu0 %v417
        %v2882 = vpop.f32.mrb[0].mxu0
        %v2883 = vadd.f32 %v2722, %v2882
        %v2884 = vpop.f32.mrb[0].mxu0
        %v2885 = vadd.f32 %v2724, %v2884
        %2886 = vmatprep.mubr.f32.mxu0 0.0
        %2887 = vmatmul.mubr.f32.gmra.mrb[0].mxu0 %v418
        %v2888 = vpop.f32.mrb[0].mxu0
        %v2889 = vadd.f32 %v2728, %v2888
        %v2890 = vpop.f32.mrb[0].mxu0
        %v2891 = vadd.f32 %v2730, %v2890
        %2892 = vmatprep.mubr.f32.mxu0 0.0
        %2893 = vmatmul.mubr.f32.gmra.mrb[0].mxu0 %v419
        %v2894 = vpop.f32.mrb[0].mxu0
        %v2895 = vadd.f32 %v2734, %v2894
        %v2896 = vpop.f32.mrb[0].mxu0
        %v2897 = vadd.f32 %v2736, %v2896
        %2898 = vmatprep.mubr.f32.mxu0 0.0
        %2899 = vmatmul.mubr.f32.gmra.mrb[0].mxu0 %v420
        %v2900 = vpop.f32.mrb[0].mxu0
        %v2901 = vadd.f32 %v2740, %v2900
        %v2902 = vpop.f32.mrb[0].mxu0
        %v2903 = vadd.f32 %v2742, %v2902
        %2904 = vdwg.mxu0
        %v2906 = vlaneseq
        %v2907 = vshrl.u32 %v2906, 7
        %v2908 = vsub.s32 0, %v2907
        %v2909 = vrot.slane %v2421, %v2908
        %v2910 = vlaneseq
        %v2911 = vshrl.u32 %v2910, 7
        %v2912 = vsub.s32 1, %v2911
        %v2913 = vrot.slane %v2421, %v2912
        %v2916 = vadd.f32 %v2811, %v2909
        %v2917 = vadd.f32 %v2813, %v2913
        %v2918 = vadd.f32 %v2817, %v2909
        %v2919 = vadd.f32 %v2819, %v2913
        %v2920 = vadd.f32 %v2823, %v2909
        %v2921 = vadd.f32 %v2825, %v2913
        %v2922 = vadd.f32 %v2829, %v2909
        %v2923 = vadd.f32 %v2831, %v2913
        %v2924 = vadd.f32 %v2835, %v2909
        %v2925 = vadd.f32 %v2837, %v2913
        %v2926 = vadd.f32 %v2841, %v2909
        %v2927 = vadd.f32 %v2843, %v2913
        %v2928 = vadd.f32 %v2847, %v2909
        %v2929 = vadd.f32 %v2849, %v2913
        %v2930 = vadd.f32 %v2853, %v2909
        %v2931 = vadd.f32 %v2855, %v2913
        %v2932 = vadd.f32 %v2859, %v2909
        %v2933 = vadd.f32 %v2861, %v2913
        %v2934 = vadd.f32 %v2865, %v2909
        %v2935 = vadd.f32 %v2867, %v2913
        %v2936 = vadd.f32 %v2871, %v2909
        %v2937 = vadd.f32 %v2873, %v2913
        %v2938 = vadd.f32 %v2877, %v2909
        %v2939 = vadd.f32 %v2879, %v2913
        %v2940 = vadd.f32 %v2883, %v2909
        %v2941 = vadd.f32 %v2885, %v2913
        %v2942 = vadd.f32 %v2889, %v2909
        %v2943 = vadd.f32 %v2891, %v2913
        %v2944 = vadd.f32 %v2895, %v2909
        %v2945 = vadd.f32 %v2897, %v2913
        %v2946 = vadd.f32 %v2901, %v2909
        %v2947 = vadd.f32 %v2903, %v2913
        %v2948 = vmax.f32 %v2916, 0.0
        %v2949 = vmax.f32 %v2917, 0.0
        %v2950 = vmax.f32 %v2918, 0.0
        %v2951 = vmax.f32 %v2919, 0.0
        %v2952 = vmax.f32 %v2920, 0.0
        %v2953 = vmax.f32 %v2921, 0.0
        %v2954 = vmax.f32 %v2922, 0.0
        %v2955 = vmax.f32 %v2923, 0.0
        %v2956 = vmax.f32 %v2924, 0.0
        %v2957 = vmax.f32 %v2925, 0.0
        %v2958 = vmax.f32 %v2926, 0.0
        %v2959 = vmax.f32 %v2927, 0.0
        %v2960 = vmax.f32 %v2928, 0.0
        %v2961 = vmax.f32 %v2929, 0.0
        %v2962 = vmax.f32 %v2930, 0.0
        %v2963 = vmax.f32 %v2931, 0.0
        %v2964 = vmax.f32 %v2932, 0.0
        %v2965 = vmax.f32 %v2933, 0.0
        %v2966 = vmax.f32 %v2934, 0.0
        %v2967 = vmax.f32 %v2935, 0.0
        %v2968 = vmax.f32 %v2936, 0.0
        %v2969 = vmax.f32 %v2937, 0.0
        %v2970 = vmax.f32 %v2938, 0.0
        %v2971 = vmax.f32 %v2939, 0.0
        %v2972 = vmax.f32 %v2940, 0.0
        %v2973 = vmax.f32 %v2941, 0.0
        %v2974 = vmax.f32 %v2942, 0.0
        %v2975 = vmax.f32 %v2943, 0.0
        %v2976 = vmax.f32 %v2944, 0.0
        %v2977 = vmax.f32 %v2945, 0.0
        %v2978 = vmax.f32 %v2946, 0.0
        %v2979 = vmax.f32 %v2947, 0.0
        %s2980 = scalar_lea.vmem [#allocation6], 3072
        %v2981 = vld [vmem:[%s2980] sm:$0xff]
        %v2982 = vld [vmem:[%s2980 + $0x8] sm:$0xff]
        %v2983 = vld [vmem:[%s2980 + $0x10] sm:$0xff]
        %v2984 = vld [vmem:[%s2980 + $0x18] sm:$0xff]
        %v2985 = vld [vmem:[%s2980 + $0x20] sm:$0xff]
        %v2986 = vld [vmem:[%s2980 + $0x28] sm:$0xff]
        %v2987 = vld [vmem:[%s2980 + $0x30] sm:$0xff]
        %v2988 = vld [vmem:[%s2980 + $0x38] sm:$0xff]
        %v2989 = vld [vmem:[%s2980 + $0x40] sm:$0xff]
        %v2990 = vld [vmem:[%s2980 + $0x48] sm:$0xff]
        %v2991 = vld [vmem:[%s2980 + $0x50] sm:$0xff]
        %v2992 = vld [vmem:[%s2980 + $0x58] sm:$0xff]
        %v2993 = vld [vmem:[%s2980 + $0x60] sm:$0xff]
        %v2994 = vld [vmem:[%s2980 + $0x68] sm:$0xff]
        %v2995 = vld [vmem:[%s2980 + $0x70] sm:$0xff]
        %v2996 = vld [vmem:[%s2980 + $0x78] sm:$0xff]
        %v2997 = vld [vmem:[%s2980 + $0x80] sm:$0xff]
        %v2998 = vld [vmem:[%s2980 + $0x88] sm:$0xff]
        %v2999 = vld [vmem:[%s2980 + $0x90] sm:$0xff]
        %v3000 = vld [vmem:[%s2980 + $0x98] sm:$0xff]
        %v3001 = vld [vmem:[%s2980 + $0xa0] sm:$0xff]
        %v3002 = vld [vmem:[%s2980 + $0xa8] sm:$0xff]
        %v3003 = vld [vmem:[%s2980 + $0xb0] sm:$0xff]
        %v3004 = vld [vmem:[%s2980 + $0xb8] sm:$0xff]
        %v3005 = vld [vmem:[%s2980 + $0xc0] sm:$0xff]
        %v3006 = vld [vmem:[%s2980 + $0xc8] sm:$0xff]
        %v3007 = vld [vmem:[%s2980 + $0xd0] sm:$0xff]
        %v3008 = vld [vmem:[%s2980 + $0xd8] sm:$0xff]
        %v3009 = vld [vmem:[%s2980 + $0xe0] sm:$0xff]
        %v3010 = vld [vmem:[%s2980 + $0xe8] sm:$0xff]
        %v3011 = vld [vmem:[%s2980 + $0xf0] sm:$0xff]
        %v3012 = vld [vmem:[%s2980 + $0xf8] sm:$0xff]
        %v3013 = vld [vmem:[%s2980 + $0x100] sm:$0xff]
        %v3014 = vld [vmem:[%s2980 + $0x108] sm:$0xff]
        %v3015 = vld [vmem:[%s2980 + $0x110] sm:$0xff]
        %v3016 = vld [vmem:[%s2980 + $0x118] sm:$0xff]
        %v3017 = vld [vmem:[%s2980 + $0x120] sm:$0xff]
        %v3018 = vld [vmem:[%s2980 + $0x128] sm:$0xff]
        %v3019 = vld [vmem:[%s2980 + $0x130] sm:$0xff]
        %v3020 = vld [vmem:[%s2980 + $0x138] sm:$0xff]
        %v3021 = vld [vmem:[%s2980 + $0x140] sm:$0xff]
        %v3022 = vld [vmem:[%s2980 + $0x148] sm:$0xff]
        %v3023 = vld [vmem:[%s2980 + $0x150] sm:$0xff]
        %v3024 = vld [vmem:[%s2980 + $0x158] sm:$0xff]
        %v3025 = vld [vmem:[%s2980 + $0x160] sm:$0xff]
        %v3026 = vld [vmem:[%s2980 + $0x168] sm:$0xff]
        %v3027 = vld [vmem:[%s2980 + $0x170] sm:$0xff]
        %v3028 = vld [vmem:[%s2980 + $0x178] sm:$0xff]
        %v3029 = vld [vmem:[%s2980 + $0x180] sm:$0xff]
        %v3030 = vld [vmem:[%s2980 + $0x188] sm:$0xff]
        %v3031 = vld [vmem:[%s2980 + $0x190] sm:$0xff]
        %v3032 = vld [vmem:[%s2980 + $0x198] sm:$0xff]
        %v3033 = vld [vmem:[%s2980 + $0x1a0] sm:$0xff]
        %v3034 = vld [vmem:[%s2980 + $0x1a8] sm:$0xff]
        %v3035 = vld [vmem:[%s2980 + $0x1b0] sm:$0xff]
        %v3036 = vld [vmem:[%s2980 + $0x1b8] sm:$0xff]
        %v3037 = vld [vmem:[%s2980 + $0x1c0] sm:$0xff]
        %v3038 = vld [vmem:[%s2980 + $0x1c8] sm:$0xff]
        %v3039 = vld [vmem:[%s2980 + $0x1d0] sm:$0xff]
        %v3040 = vld [vmem:[%s2980 + $0x1d8] sm:$0xff]
        %v3041 = vld [vmem:[%s2980 + $0x1e0] sm:$0xff]
        %v3042 = vld [vmem:[%s2980 + $0x1e8] sm:$0xff]
        %v3043 = vld [vmem:[%s2980 + $0x1f0] sm:$0xff]
        %v3044 = vld [vmem:[%s2980 + $0x1f8] sm:$0xff]
        %v3045 = vld [vmem:[%s2980 + $0x200] sm:$0xff]
        %v3046 = vld [vmem:[%s2980 + $0x208] sm:$0xff]
        %v3047 = vld [vmem:[%s2980 + $0x210] sm:$0xff]
        %v3048 = vld [vmem:[%s2980 + $0x218] sm:$0xff]
        %v3049 = vld [vmem:[%s2980 + $0x220] sm:$0xff]
        %v3050 = vld [vmem:[%s2980 + $0x228] sm:$0xff]
        %v3051 = vld [vmem:[%s2980 + $0x230] sm:$0xff]
        %v3052 = vld [vmem:[%s2980 + $0x238] sm:$0xff]
        %v3053 = vld [vmem:[%s2980 + $0x240] sm:$0xff]
        %v3054 = vld [vmem:[%s2980 + $0x248] sm:$0xff]
        %v3055 = vld [vmem:[%s2980 + $0x250] sm:$0xff]
        %v3056 = vld [vmem:[%s2980 + $0x258] sm:$0xff]
        %v3057 = vld [vmem:[%s2980 + $0x260] sm:$0xff]
        %v3058 = vld [vmem:[%s2980 + $0x268] sm:$0xff]
        %v3059 = vld [vmem:[%s2980 + $0x270] sm:$0xff]
        %v3060 = vld [vmem:[%s2980 + $0x278] sm:$0xff]
        %v3061 = vld [vmem:[%s2980 + $0x280] sm:$0xff]
        %v3062 = vld [vmem:[%s2980 + $0x288] sm:$0xff]
        %v3063 = vld [vmem:[%s2980 + $0x290] sm:$0xff]
        %v3064 = vld [vmem:[%s2980 + $0x298] sm:$0xff]
        %v3065 = vld [vmem:[%s2980 + $0x2a0] sm:$0xff]
        %v3066 = vld [vmem:[%s2980 + $0x2a8] sm:$0xff]
        %v3067 = vld [vmem:[%s2980 + $0x2b0] sm:$0xff]
        %v3068 = vld [vmem:[%s2980 + $0x2b8] sm:$0xff]
        %v3069 = vld [vmem:[%s2980 + $0x2c0] sm:$0xff]
        %v3070 = vld [vmem:[%s2980 + $0x2c8] sm:$0xff]
        %v3071 = vld [vmem:[%s2980 + $0x2d0] sm:$0xff]
        %v3072 = vld [vmem:[%s2980 + $0x2d8] sm:$0xff]
        %v3073 = vld [vmem:[%s2980 + $0x2e0] sm:$0xff]
        %v3074 = vld [vmem:[%s2980 + $0x2e8] sm:$0xff]
        %v3075 = vld [vmem:[%s2980 + $0x2f0] sm:$0xff]
        %v3076 = vld [vmem:[%s2980 + $0x2f8] sm:$0xff]
        %v3077 = vld [vmem:[%s2980 + $0x300] sm:$0xff]
        %v3078 = vld [vmem:[%s2980 + $0x308] sm:$0xff]
        %v3079 = vld [vmem:[%s2980 + $0x310] sm:$0xff]
        %v3080 = vld [vmem:[%s2980 + $0x318] sm:$0xff]
        %v3081 = vld [vmem:[%s2980 + $0x320] sm:$0xff]
        %v3082 = vld [vmem:[%s2980 + $0x328] sm:$0xff]
        %v3083 = vld [vmem:[%s2980 + $0x330] sm:$0xff]
        %v3084 = vld [vmem:[%s2980 + $0x338] sm:$0xff]
        %v3085 = vld [vmem:[%s2980 + $0x340] sm:$0xff]
        %v3086 = vld [vmem:[%s2980 + $0x348] sm:$0xff]
        %v3087 = vld [vmem:[%s2980 + $0x350] sm:$0xff]
        %v3088 = vld [vmem:[%s2980 + $0x358] sm:$0xff]
        %v3089 = vld [vmem:[%s2980 + $0x360] sm:$0xff]
        %v3090 = vld [vmem:[%s2980 + $0x368] sm:$0xff]
        %v3091 = vld [vmem:[%s2980 + $0x370] sm:$0xff]
        %v3092 = vld [vmem:[%s2980 + $0x378] sm:$0xff]
        %v3093 = vld [vmem:[%s2980 + $0x380] sm:$0xff]
        %v3094 = vld [vmem:[%s2980 + $0x388] sm:$0xff]
        %v3095 = vld [vmem:[%s2980 + $0x390] sm:$0xff]
        %v3096 = vld [vmem:[%s2980 + $0x398] sm:$0xff]
        %v3097 = vld [vmem:[%s2980 + $0x3a0] sm:$0xff]
        %v3098 = vld [vmem:[%s2980 + $0x3a8] sm:$0xff]
        %v3099 = vld [vmem:[%s2980 + $0x3b0] sm:$0xff]
        %v3100 = vld [vmem:[%s2980 + $0x3b8] sm:$0xff]
        %v3101 = vld [vmem:[%s2980 + $0x3c0] sm:$0xff]
        %v3102 = vld [vmem:[%s2980 + $0x3c8] sm:$0xff]
        %v3103 = vld [vmem:[%s2980 + $0x3d0] sm:$0xff]
        %v3104 = vld [vmem:[%s2980 + $0x3d8] sm:$0xff]
        %v3105 = vld [vmem:[%s2980 + $0x3e0] sm:$0xff]
        %v3106 = vld [vmem:[%s2980 + $0x3e8] sm:$0xff]
        %v3107 = vld [vmem:[%s2980 + $0x3f0] sm:$0xff]
        %v3108 = vld [vmem:[%s2980 + $0x3f8] sm:$0xff]
        %s3109 = scalar_lea.vmem %s5, 6
        %v3110 = vld [vmem:[%s3109] sm:$0x3]
        %3111 = vmatprep.subr.mxu0 %v2982
        %3112 = vmatpush1.msra.mxu0 %v2981
        %3113 = vmatprep.subr.mxu0 %v2986
        %3114 = vmatpush1.msra.mxu0 %v2985
        %3115 = vmatprep.subr.mxu0 %v2990
        %3116 = vmatpush1.msra.mxu0 %v2989
        %3117 = vmatprep.subr.mxu0 %v2994
        %3118 = vmatpush1.msra.mxu0 %v2993
        %3119 = vmatprep.subr.mxu0 %v2998
        %3120 = vmatpush1.msra.mxu0 %v2997
        %3121 = vmatprep.subr.mxu0 %v3002
        %3122 = vmatpush1.msra.mxu0 %v3001
        %3123 = vmatprep.subr.mxu0 %v3006
        %3124 = vmatpush1.msra.mxu0 %v3005
        %3125 = vmatprep.subr.mxu0 %v3010
        %3126 = vmatpush1.msra.mxu0 %v3009
        %3127 = vmatprep.subr.mxu0 %v3014
        %3128 = vmatpush1.msra.mxu0 %v3013
        %3129 = vmatprep.subr.mxu0 %v3018
        %3130 = vmatpush1.msra.mxu0 %v3017
        %3131 = vmatprep.subr.mxu0 %v3022
        %3132 = vmatpush1.msra.mxu0 %v3021
        %3133 = vmatprep.subr.mxu0 %v3026
        %3134 = vmatpush1.msra.mxu0 %v3025
        %3135 = vmatprep.subr.mxu0 %v3030
        %3136 = vmatpush1.msra.mxu0 %v3029
        %3137 = vmatprep.subr.mxu0 %v3034
        %3138 = vmatpush1.msra.mxu0 %v3033
        %3139 = vmatprep.subr.mxu0 %v3038
        %3140 = vmatpush1.msra.mxu0 %v3037
        %3141 = vmatprep.subr.mxu0 %v3042
        %3142 = vmatpush1.msra.mxu0 %v3041
        %3143 = vmatprep.subr.mxu0 %v3046
        %3144 = vmatpush1.msra.mxu0 %v3045
        %3145 = vmatprep.subr.mxu0 %v3050
        %3146 = vmatpush1.msra.mxu0 %v3049
        %3147 = vmatprep.subr.mxu0 %v3054
        %3148 = vmatpush1.msra.mxu0 %v3053
        %3149 = vmatprep.subr.mxu0 %v3058
        %3150 = vmatpush1.msra.mxu0 %v3057
        %3151 = vmatprep.subr.mxu0 %v3062
        %3152 = vmatpush1.msra.mxu0 %v3061
        %3153 = vmatprep.subr.mxu0 %v3066
        %3154 = vmatpush1.msra.mxu0 %v3065
        %3155 = vmatprep.subr.mxu0 %v3070
        %3156 = vmatpush1.msra.mxu0 %v3069
        %3157 = vmatprep.subr.mxu0 %v3074
        %3158 = vmatpush1.msra.mxu0 %v3073
        %3159 = vmatprep.subr.mxu0 %v3078
        %3160 = vmatpush1.msra.mxu0 %v3077
        %3161 = vmatprep.subr.mxu0 %v3082
        %3162 = vmatpush1.msra.mxu0 %v3081
        %3163 = vmatprep.subr.mxu0 %v3086
        %3164 = vmatpush1.msra.mxu0 %v3085
        %3165 = vmatprep.subr.mxu0 %v3090
        %3166 = vmatpush1.msra.mxu0 %v3089
        %3167 = vmatprep.subr.mxu0 %v3094
        %3168 = vmatpush1.msra.mxu0 %v3093
        %3169 = vmatprep.subr.mxu0 %v3098
        %3170 = vmatpush1.msra.mxu0 %v3097
        %3171 = vmatprep.subr.mxu0 %v3102
        %3172 = vmatpush1.msra.mxu0 %v3101
        %3173 = vmatprep.subr.mxu0 %v3106
        %3174 = vmatpush1.msra.mxu0 %v3105
        %3175 = vmatprep.mubr.f32.mxu0 %v2949
        %3176 = vmatmul.mubr.f32.gmra.mrb[0].mxu0 %v2948
        %v3177 = vpop.f32.mrb[0].mxu0
        %v3178 = vadd.f32 0.0, %v3177
        %v3179 = vpop.f32.mrb[0].mxu0
        %v3180 = vadd.f32 0.0, %v3179
        %3181 = vmatprep.mubr.f32.mxu0 %v2951
        %3182 = vmatmul.mubr.f32.gmra.mrb[0].mxu0 %v2950
        %v3183 = vpop.f32.mrb[0].mxu0
        %v3184 = vadd.f32 0.0, %v3183
        %v3185 = vpop.f32.mrb[0].mxu0
        %v3186 = vadd.f32 0.0, %v3185
        %3187 = vmatprep.mubr.f32.mxu0 %v2953
        %3188 = vmatmul.mubr.f32.gmra.mrb[0].mxu0 %v2952
        %v3189 = vpop.f32.mrb[0].mxu0
        %v3190 = vadd.f32 0.0, %v3189
        %v3191 = vpop.f32.mrb[0].mxu0
        %v3192 = vadd.f32 0.0, %v3191
        %3193 = vmatprep.mubr.f32.mxu0 %v2955
        %3194 = vmatmul.mubr.f32.gmra.mrb[0].mxu0 %v2954
        %v3195 = vpop.f32.mrb[0].mxu0
        %v3196 = vadd.f32 0.0, %v3195
        %v3197 = vpop.f32.mrb[0].mxu0
        %v3198 = vadd.f32 0.0, %v3197
        %3199 = vmatprep.mubr.f32.mxu0 %v2957
        %3200 = vmatmul.mubr.f32.gmra.mrb[0].mxu0 %v2956
        %v3201 = vpop.f32.mrb[0].mxu0
        %v3202 = vadd.f32 0.0, %v3201
        %v3203 = vpop.f32.mrb[0].mxu0
        %v3204 = vadd.f32 0.0, %v3203
        %3205 = vmatprep.mubr.f32.mxu0 %v2959
        %3206 = vmatmul.mubr.f32.gmra.mrb[0].mxu0 %v2958
        %v3207 = vpop.f32.mrb[0].mxu0
        %v3208 = vadd.f32 0.0, %v3207
        %v3209 = vpop.f32.mrb[0].mxu0
        %v3210 = vadd.f32 0.0, %v3209
        %3211 = vmatprep.mubr.f32.mxu0 %v2961
        %3212 = vmatmul.mubr.f32.gmra.mrb[0].mxu0 %v2960
        %v3213 = vpop.f32.mrb[0].mxu0
        %v3214 = vadd.f32 0.0, %v3213
        %v3215 = vpop.f32.mrb[0].mxu0
        %v3216 = vadd.f32 0.0, %v3215
        %3217 = vmatprep.mubr.f32.mxu0 %v2963
        %3218 = vmatmul.mubr.f32.gmra.mrb[0].mxu0 %v2962
        %v3219 = vpop.f32.mrb[0].mxu0
        %v3220 = vadd.f32 0.0, %v3219
        %v3221 = vpop.f32.mrb[0].mxu0
        %v3222 = vadd.f32 0.0, %v3221
        %3223 = vmatprep.mubr.f32.mxu0 %v2965
        %3224 = vmatmul.mubr.f32.gmra.mrb[0].mxu0 %v2964
        %v3225 = vpop.f32.mrb[0].mxu0
        %v3226 = vadd.f32 0.0, %v3225
        %v3227 = vpop.f32.mrb[0].mxu0
        %v3228 = vadd.f32 0.0, %v3227
        %3229 = vmatprep.mubr.f32.mxu0 %v2967
        %3230 = vmatmul.mubr.f32.gmra.mrb[0].mxu0 %v2966
        %v3231 = vpop.f32.mrb[0].mxu0
        %v3232 = vadd.f32 0.0, %v3231
        %v3233 = vpop.f32.mrb[0].mxu0
        %v3234 = vadd.f32 0.0, %v3233
        %3235 = vmatprep.mubr.f32.mxu0 %v2969
        %3236 = vmatmul.mubr.f32.gmra.mrb[0].mxu0 %v2968
        %v3237 = vpop.f32.mrb[0].mxu0
        %v3238 = vadd.f32 0.0, %v3237
        %v3239 = vpop.f32.mrb[0].mxu0
        %v3240 = vadd.f32 0.0, %v3239
        %3241 = vmatprep.mubr.f32.mxu0 %v2971
        %3242 = vmatmul.mubr.f32.gmra.mrb[0].mxu0 %v2970
        %v3243 = vpop.f32.mrb[0].mxu0
        %v3244 = vadd.f32 0.0, %v3243
        %v3245 = vpop.f32.mrb[0].mxu0
        %v3246 = vadd.f32 0.0, %v3245
        %3247 = vmatprep.mubr.f32.mxu0 %v2973
        %3248 = vmatmul.mubr.f32.gmra.mrb[0].mxu0 %v2972
        %v3249 = vpop.f32.mrb[0].mxu0
        %v3250 = vadd.f32 0.0, %v3249
        %v3251 = vpop.f32.mrb[0].mxu0
        %v3252 = vadd.f32 0.0, %v3251
        %3253 = vmatprep.mubr.f32.mxu0 %v2975
        %3254 = vmatmul.mubr.f32.gmra.mrb[0].mxu0 %v2974
        %v3255 = vpop.f32.mrb[0].mxu0
        %v3256 = vadd.f32 0.0, %v3255
        %v3257 = vpop.f32.mrb[0].mxu0
        %v3258 = vadd.f32 0.0, %v3257
        %3259 = vmatprep.mubr.f32.mxu0 %v2977
        %3260 = vmatmul.mubr.f32.gmra.mrb[0].mxu0 %v2976
        %v3261 = vpop.f32.mrb[0].mxu0
        %v3262 = vadd.f32 0.0, %v3261
        %v3263 = vpop.f32.mrb[0].mxu0
        %v3264 = vadd.f32 0.0, %v3263
        %3265 = vmatprep.mubr.f32.mxu0 %v2979
        %3266 = vmatmul.mubr.f32.gmra.mrb[0].mxu0 %v2978
        %v3267 = vpop.f32.mrb[0].mxu0
        %v3268 = vadd.f32 0.0, %v3267
        %v3269 = vpop.f32.mrb[0].mxu0
        %v3270 = vadd.f32 0.0, %v3269
        %3271 = vdwg.mxu0
        %3272 = vmatprep.subr.mxu0 %v2984
        %3273 = vmatpush1.msra.mxu0 %v2983
        %3274 = vmatprep.subr.mxu0 %v2988
        %3275 = vmatpush1.msra.mxu0 %v2987
        %3276 = vmatprep.subr.mxu0 %v2992
        %3277 = vmatpush1.msra.mxu0 %v2991
        %3278 = vmatprep.subr.mxu0 %v2996
        %3279 = vmatpush1.msra.mxu0 %v2995
        %3280 = vmatprep.subr.mxu0 %v3000
        %3281 = vmatpush1.msra.mxu0 %v2999
        %3282 = vmatprep.subr.mxu0 %v3004
        %3283 = vmatpush1.msra.mxu0 %v3003
        %3284 = vmatprep.subr.mxu0 %v3008
        %3285 = vmatpush1.msra.mxu0 %v3007
        %3286 = vmatprep.subr.mxu0 %v3012
        %3287 = vmatpush1.msra.mxu0 %v3011
        %3288 = vmatprep.subr.mxu0 %v3016
        %3289 = vmatpush1.msra.mxu0 %v3015
        %3290 = vmatprep.subr.mxu0 %v3020
        %3291 = vmatpush1.msra.mxu0 %v3019
        %3292 = vmatprep.subr.mxu0 %v3024
        %3293 = vmatpush1.msra.mxu0 %v3023
        %3294 = vmatprep.subr.mxu0 %v3028
        %3295 = vmatpush1.msra.mxu0 %v3027
        %3296 = vmatprep.subr.mxu0 %v3032
        %3297 = vmatpush1.msra.mxu0 %v3031
        %3298 = vmatprep.subr.mxu0 %v3036
        %3299 = vmatpush1.msra.mxu0 %v3035
        %3300 = vmatprep.subr.mxu0 %v3040
        %3301 = vmatpush1.msra.mxu0 %v3039
        %3302 = vmatprep.subr.mxu0 %v3044
        %3303 = vmatpush1.msra.mxu0 %v3043
        %3304 = vmatprep.subr.mxu0 %v3048
        %3305 = vmatpush1.msra.mxu0 %v3047
        %3306 = vmatprep.subr.mxu0 %v3052
        %3307 = vmatpush1.msra.mxu0 %v3051
        %3308 = vmatprep.subr.mxu0 %v3056
        %3309 = vmatpush1.msra.mxu0 %v3055
        %3310 = vmatprep.subr.mxu0 %v3060
        %3311 = vmatpush1.msra.mxu0 %v3059
        %3312 = vmatprep.subr.mxu0 %v3064
        %3313 = vmatpush1.msra.mxu0 %v3063
        %3314 = vmatprep.subr.mxu0 %v3068
        %3315 = vmatpush1.msra.mxu0 %v3067
        %3316 = vmatprep.subr.mxu0 %v3072
        %3317 = vmatpush1.msra.mxu0 %v3071
        %3318 = vmatprep.subr.mxu0 %v3076
        %3319 = vmatpush1.msra.mxu0 %v3075
        %3320 = vmatprep.subr.mxu0 %v3080
        %3321 = vmatpush1.msra.mxu0 %v3079
        %3322 = vmatprep.subr.mxu0 %v3084
        %3323 = vmatpush1.msra.mxu0 %v3083
        %3324 = vmatprep.subr.mxu0 %v3088
        %3325 = vmatpush1.msra.mxu0 %v3087
        %3326 = vmatprep.subr.mxu0 %v3092
        %3327 = vmatpush1.msra.mxu0 %v3091
        %3328 = vmatprep.subr.mxu0 %v3096
        %3329 = vmatpush1.msra.mxu0 %v3095
        %3330 = vmatprep.subr.mxu0 %v3100
        %3331 = vmatpush1.msra.mxu0 %v3099
        %3332 = vmatprep.subr.mxu0 %v3104
        %3333 = vmatpush1.msra.mxu0 %v3103
        %3334 = vmatprep.subr.mxu0 %v3108
        %3335 = vmatpush1.msra.mxu0 %v3107
        %3336 = vmatprep.mubr.f32.mxu0 %v2949
        %3337 = vmatmul.mubr.f32.gmra.mrb[0].mxu0 %v2948
        %v3338 = vpop.f32.mrb[0].mxu0
        %v3339 = vadd.f32 0.0, %v3338
        %v3340 = vpop.f32.mrb[0].mxu0
        %v3341 = vadd.f32 0.0, %v3340
        %3342 = vmatprep.mubr.f32.mxu0 %v2951
        %3343 = vmatmul.mubr.f32.gmra.mrb[0].mxu0 %v2950
        %v3344 = vpop.f32.mrb[0].mxu0
        %v3345 = vadd.f32 0.0, %v3344
        %v3346 = vpop.f32.mrb[0].mxu0
        %v3347 = vadd.f32 0.0, %v3346
        %3348 = vmatprep.mubr.f32.mxu0 %v2953
        %3349 = vmatmul.mubr.f32.gmra.mrb[0].mxu0 %v2952
        %v3350 = vpop.f32.mrb[0].mxu0
        %v3351 = vadd.f32 0.0, %v3350
        %v3352 = vpop.f32.mrb[0].mxu0
        %v3353 = vadd.f32 0.0, %v3352
        %3354 = vmatprep.mubr.f32.mxu0 %v2955
        %3355 = vmatmul.mubr.f32.gmra.mrb[0].mxu0 %v2954
        %v3356 = vpop.f32.mrb[0].mxu0
        %v3357 = vadd.f32 0.0, %v3356
        %v3358 = vpop.f32.mrb[0].mxu0
        %v3359 = vadd.f32 0.0, %v3358
        %3360 = vmatprep.mubr.f32.mxu0 %v2957
        %3361 = vmatmul.mubr.f32.gmra.mrb[0].mxu0 %v2956
        %v3362 = vpop.f32.mrb[0].mxu0
        %v3363 = vadd.f32 0.0, %v3362
        %v3364 = vpop.f32.mrb[0].mxu0
        %v3365 = vadd.f32 0.0, %v3364
        %3366 = vmatprep.mubr.f32.mxu0 %v2959
        %3367 = vmatmul.mubr.f32.gmra.mrb[0].mxu0 %v2958
        %v3368 = vpop.f32.mrb[0].mxu0
        %v3369 = vadd.f32 0.0, %v3368
        %v3370 = vpop.f32.mrb[0].mxu0
        %v3371 = vadd.f32 0.0, %v3370
        %3372 = vmatprep.mubr.f32.mxu0 %v2961
        %3373 = vmatmul.mubr.f32.gmra.mrb[0].mxu0 %v2960
        %v3374 = vpop.f32.mrb[0].mxu0
        %v3375 = vadd.f32 0.0, %v3374
        %v3376 = vpop.f32.mrb[0].mxu0
        %v3377 = vadd.f32 0.0, %v3376
        %3378 = vmatprep.mubr.f32.mxu0 %v2963
        %3379 = vmatmul.mubr.f32.gmra.mrb[0].mxu0 %v2962
        %v3380 = vpop.f32.mrb[0].mxu0
        %v3381 = vadd.f32 0.0, %v3380
        %v3382 = vpop.f32.mrb[0].mxu0
        %v3383 = vadd.f32 0.0, %v3382
        %3384 = vmatprep.mubr.f32.mxu0 %v2965
        %3385 = vmatmul.mubr.f32.gmra.mrb[0].mxu0 %v2964
        %v3386 = vpop.f32.mrb[0].mxu0
        %v3387 = vadd.f32 0.0, %v3386
        %v3388 = vpop.f32.mrb[0].mxu0
        %v3389 = vadd.f32 0.0, %v3388
        %3390 = vmatprep.mubr.f32.mxu0 %v2967
        %3391 = vmatmul.mubr.f32.gmra.mrb[0].mxu0 %v2966
        %v3392 = vpop.f32.mrb[0].mxu0
        %v3393 = vadd.f32 0.0, %v3392
        %v3394 = vpop.f32.mrb[0].mxu0
        %v3395 = vadd.f32 0.0, %v3394
        %3396 = vmatprep.mubr.f32.mxu0 %v2969
        %3397 = vmatmul.mubr.f32.gmra.mrb[0].mxu0 %v2968
        %v3398 = vpop.f32.mrb[0].mxu0
        %v3399 = vadd.f32 0.0, %v3398
        %v3400 = vpop.f32.mrb[0].mxu0
        %v3401 = vadd.f32 0.0, %v3400
        %3402 = vmatprep.mubr.f32.mxu0 %v2971
        %3403 = vmatmul.mubr.f32.gmra.mrb[0].mxu0 %v2970
        %v3404 = vpop.f32.mrb[0].mxu0
        %v3405 = vadd.f32 0.0, %v3404
        %v3406 = vpop.f32.mrb[0].mxu0
        %v3407 = vadd.f32 0.0, %v3406
        %3408 = vmatprep.mubr.f32.mxu0 %v2973
        %3409 = vmatmul.mubr.f32.gmra.mrb[0].mxu0 %v2972
        %v3410 = vpop.f32.mrb[0].mxu0
        %v3411 = vadd.f32 0.0, %v3410
        %v3412 = vpop.f32.mrb[0].mxu0
        %v3413 = vadd.f32 0.0, %v3412
        %3414 = vmatprep.mubr.f32.mxu0 %v2975
        %3415 = vmatmul.mubr.f32.gmra.mrb[0].mxu0 %v2974
        %v3416 = vpop.f32.mrb[0].mxu0
        %v3417 = vadd.f32 0.0, %v3416
        %v3418 = vpop.f32.mrb[0].mxu0
        %v3419 = vadd.f32 0.0, %v3418
        %3420 = vmatprep.mubr.f32.mxu0 %v2977
        %3421 = vmatmul.mubr.f32.gmra.mrb[0].mxu0 %v2976
        %v3422 = vpop.f32.mrb[0].mxu0
        %v3423 = vadd.f32 0.0, %v3422
        %v3424 = vpop.f32.mrb[0].mxu0
        %v3425 = vadd.f32 0.0, %v3424
        %3426 = vmatprep.mubr.f32.mxu0 %v2979
        %3427 = vmatmul.mubr.f32.gmra.mrb[0].mxu0 %v2978
        %v3428 = vpop.f32.mrb[0].mxu0
        %v3429 = vadd.f32 0.0, %v3428
        %v3430 = vpop.f32.mrb[0].mxu0
        %v3431 = vadd.f32 0.0, %v3430
        %3432 = vdwg.mxu0
        %3433 = vmatprep.subr.mxu0 %v3180
        %3434 = vmatpush1.msra.mxu0 %v3178
        %3435 = vmatprep.subr.mxu0 %v3186
        %3436 = vmatpush1.msra.mxu0 %v3184
        %3437 = vmatprep.subr.mxu0 %v3192
        %3438 = vmatpush1.msra.mxu0 %v3190
        %3439 = vmatprep.subr.mxu0 %v3198
        %3440 = vmatpush1.msra.mxu0 %v3196
        %3441 = vmatprep.subr.mxu0 %v3204
        %3442 = vmatpush1.msra.mxu0 %v3202
        %3443 = vmatprep.subr.mxu0 %v3210
        %3444 = vmatpush1.msra.mxu0 %v3208
        %3445 = vmatprep.subr.mxu0 %v3216
        %3446 = vmatpush1.msra.mxu0 %v3214
        %3447 = vmatprep.subr.mxu0 %v3222
        %3448 = vmatpush1.msra.mxu0 %v3220
        %3449 = vmatprep.subr.mxu0 %v3228
        %3450 = vmatpush1.msra.mxu0 %v3226
        %3451 = vmatprep.subr.mxu0 %v3234
        %3452 = vmatpush1.msra.mxu0 %v3232
        %3453 = vmatprep.subr.mxu0 %v3240
        %3454 = vmatpush1.msra.mxu0 %v3238
        %3455 = vmatprep.subr.mxu0 %v3246
        %3456 = vmatpush1.msra.mxu0 %v3244
        %3457 = vmatprep.subr.mxu0 %v3252
        %3458 = vmatpush1.msra.mxu0 %v3250
        %3459 = vmatprep.subr.mxu0 %v3258
        %3460 = vmatpush1.msra.mxu0 %v3256
        %3461 = vmatprep.subr.mxu0 %v3264
        %3462 = vmatpush1.msra.mxu0 %v3262
        %3463 = vmatprep.subr.mxu0 %v3270
        %3464 = vmatpush1.msra.mxu0 %v3268
        %3465 = vmatprep.subr.mxu0 0.0
        %3466 = vmatpush1.msra.mxu0 0.0
        %3467 = vmatprep.subr.mxu0 0.0
        %3468 = vmatpush1.msra.mxu0 0.0
        %3469 = vmatprep.subr.mxu0 0.0
        %3470 = vmatpush1.msra.mxu0 0.0
        %3471 = vmatprep.subr.mxu0 0.0
        %3472 = vmatpush1.msra.mxu0 0.0
        %3473 = vmatprep.subr.mxu0 0.0
        %3474 = vmatpush1.msra.mxu0 0.0
        %3475 = vmatprep.subr.mxu0 0.0
        %3476 = vmatpush1.msra.mxu0 0.0
        %3477 = vmatprep.subr.mxu0 0.0
        %3478 = vmatpush1.msra.mxu0 0.0
        %3479 = vmatprep.subr.mxu0 0.0
        %3480 = vmatpush1.msra.mxu0 0.0
        %3481 = vmatprep.subr.mxu0 0.0
        %3482 = vmatpush1.msra.mxu0 0.0
        %3483 = vmatprep.subr.mxu0 0.0
        %3484 = vmatpush1.msra.mxu0 0.0
        %3485 = vmatprep.subr.mxu0 0.0
        %3486 = vmatpush1.msra.mxu0 0.0
        %3487 = vmatprep.subr.mxu0 0.0
        %3488 = vmatpush1.msra.mxu0 0.0
        %3489 = vmatprep.subr.mxu0 0.0
        %3490 = vmatpush1.msra.mxu0 0.0
        %3491 = vmatprep.subr.mxu0 0.0
        %3492 = vmatpush1.msra.mxu0 0.0
        %3493 = vmatprep.subr.mxu0 0.0
        %3494 = vmatpush1.msra.mxu0 0.0
        %3495 = vmatprep.subr.mxu0 0.0
        %3496 = vmatpush1.msra.mxu0 0.0
        %3497 = vmatprep.mubr.f32.mxu0 0.0
        %3498 = vmatmul.mubr.f32.gmra.mrb[0].mxu0 %v405
        %v3499 = vpop.f32.mrb[0].mxu0
        %v3500 = vadd.f32 %v3339, %v3499
        %v3501 = vpop.f32.mrb[0].mxu0
        %v3502 = vadd.f32 %v3341, %v3501
        %3503 = vmatprep.mubr.f32.mxu0 0.0
        %3504 = vmatmul.mubr.f32.gmra.mrb[0].mxu0 %v406
        %v3505 = vpop.f32.mrb[0].mxu0
        %v3506 = vadd.f32 %v3345, %v3505
        %v3507 = vpop.f32.mrb[0].mxu0
        %v3508 = vadd.f32 %v3347, %v3507
        %3509 = vmatprep.mubr.f32.mxu0 0.0
        %3510 = vmatmul.mubr.f32.gmra.mrb[0].mxu0 %v407
        %v3511 = vpop.f32.mrb[0].mxu0
        %v3512 = vadd.f32 %v3351, %v3511
        %v3513 = vpop.f32.mrb[0].mxu0
        %v3514 = vadd.f32 %v3353, %v3513
        %3515 = vmatprep.mubr.f32.mxu0 0.0
        %3516 = vmatmul.mubr.f32.gmra.mrb[0].mxu0 %v408
        %v3517 = vpop.f32.mrb[0].mxu0
        %v3518 = vadd.f32 %v3357, %v3517
        %v3519 = vpop.f32.mrb[0].mxu0
        %v3520 = vadd.f32 %v3359, %v3519
        %3521 = vmatprep.mubr.f32.mxu0 0.0
        %3522 = vmatmul.mubr.f32.gmra.mrb[0].mxu0 %v409
        %v3523 = vpop.f32.mrb[0].mxu0
        %v3524 = vadd.f32 %v3363, %v3523
        %v3525 = vpop.f32.mrb[0].mxu0
        %v3526 = vadd.f32 %v3365, %v3525
        %3527 = vmatprep.mubr.f32.mxu0 0.0
        %3528 = vmatmul.mubr.f32.gmra.mrb[0].mxu0 %v410
        %v3529 = vpop.f32.mrb[0].mxu0
        %v3530 = vadd.f32 %v3369, %v3529
        %v3531 = vpop.f32.mrb[0].mxu0
        %v3532 = vadd.f32 %v3371, %v3531
        %3533 = vmatprep.mubr.f32.mxu0 0.0
        %3534 = vmatmul.mubr.f32.gmra.mrb[0].mxu0 %v411
        %v3535 = vpop.f32.mrb[0].mxu0
        %v3536 = vadd.f32 %v3375, %v3535
        %v3537 = vpop.f32.mrb[0].mxu0
        %v3538 = vadd.f32 %v3377, %v3537
        %3539 = vmatprep.mubr.f32.mxu0 0.0
        %3540 = vmatmul.mubr.f32.gmra.mrb[0].mxu0 %v412
        %v3541 = vpop.f32.mrb[0].mxu0
        %v3542 = vadd.f32 %v3381, %v3541
        %v3543 = vpop.f32.mrb[0].mxu0
        %v3544 = vadd.f32 %v3383, %v3543
        %3545 = vmatprep.mubr.f32.mxu0 0.0
        %3546 = vmatmul.mubr.f32.gmra.mrb[0].mxu0 %v413
        %v3547 = vpop.f32.mrb[0].mxu0
        %v3548 = vadd.f32 %v3387, %v3547
        %v3549 = vpop.f32.mrb[0].mxu0
        %v3550 = vadd.f32 %v3389, %v3549
        %3551 = vmatprep.mubr.f32.mxu0 0.0
        %3552 = vmatmul.mubr.f32.gmra.mrb[0].mxu0 %v414
        %v3553 = vpop.f32.mrb[0].mxu0
        %v3554 = vadd.f32 %v3393, %v3553
        %v3555 = vpop.f32.mrb[0].mxu0
        %v3556 = vadd.f32 %v3395, %v3555
        %3557 = vmatprep.mubr.f32.mxu0 0.0
        %3558 = vmatmul.mubr.f32.gmra.mrb[0].mxu0 %v415
        %v3559 = vpop.f32.mrb[0].mxu0
        %v3560 = vadd.f32 %v3399, %v3559
        %v3561 = vpop.f32.mrb[0].mxu0
        %v3562 = vadd.f32 %v3401, %v3561
        %3563 = vmatprep.mubr.f32.mxu0 0.0
        %3564 = vmatmul.mubr.f32.gmra.mrb[0].mxu0 %v416
        %v3565 = vpop.f32.mrb[0].mxu0
        %v3566 = vadd.f32 %v3405, %v3565
        %v3567 = vpop.f32.mrb[0].mxu0
        %v3568 = vadd.f32 %v3407, %v3567
        %3569 = vmatprep.mubr.f32.mxu0 0.0
        %3570 = vmatmul.mubr.f32.gmra.mrb[0].mxu0 %v417
        %v3571 = vpop.f32.mrb[0].mxu0
        %v3572 = vadd.f32 %v3411, %v3571
        %v3573 = vpop.f32.mrb[0].mxu0
        %v3574 = vadd.f32 %v3413, %v3573
        %3575 = vmatprep.mubr.f32.mxu0 0.0
        %3576 = vmatmul.mubr.f32.gmra.mrb[0].mxu0 %v418
        %v3577 = vpop.f32.mrb[0].mxu0
        %v3578 = vadd.f32 %v3417, %v3577
        %v3579 = vpop.f32.mrb[0].mxu0
        %v3580 = vadd.f32 %v3419, %v3579
        %3581 = vmatprep.mubr.f32.mxu0 0.0
        %3582 = vmatmul.mubr.f32.gmra.mrb[0].mxu0 %v419
        %v3583 = vpop.f32.mrb[0].mxu0
        %v3584 = vadd.f32 %v3423, %v3583
        %v3585 = vpop.f32.mrb[0].mxu0
        %v3586 = vadd.f32 %v3425, %v3585
        %3587 = vmatprep.mubr.f32.mxu0 0.0
        %3588 = vmatmul.mubr.f32.gmra.mrb[0].mxu0 %v420
        %v3589 = vpop.f32.mrb[0].mxu0
        %v3590 = vadd.f32 %v3429, %v3589
        %v3591 = vpop.f32.mrb[0].mxu0
        %v3592 = vadd.f32 %v3431, %v3591
        %3593 = vdwg.mxu0
        %v3595 = vlaneseq
        %v3596 = vshrl.u32 %v3595, 7
        %v3597 = vsub.s32 0, %v3596
        %v3598 = vrot.slane %v3110, %v3597
        %v3599 = vlaneseq
        %v3600 = vshrl.u32 %v3599, 7
        %v3601 = vsub.s32 1, %v3600
        %v3602 = vrot.slane %v3110, %v3601
        %v3605 = vadd.f32 %v3500, %v3598
        %v3606 = vadd.f32 %v3502, %v3602
        %v3607 = vadd.f32 %v3506, %v3598
        %v3608 = vadd.f32 %v3508, %v3602
        %v3609 = vadd.f32 %v3512, %v3598
        %v3610 = vadd.f32 %v3514, %v3602
        %v3611 = vadd.f32 %v3518, %v3598
        %v3612 = vadd.f32 %v3520, %v3602
        %v3613 = vadd.f32 %v3524, %v3598
        %v3614 = vadd.f32 %v3526, %v3602
        %v3615 = vadd.f32 %v3530, %v3598
        %v3616 = vadd.f32 %v3532, %v3602
        %v3617 = vadd.f32 %v3536, %v3598
        %v3618 = vadd.f32 %v3538, %v3602
        %v3619 = vadd.f32 %v3542, %v3598
        %v3620 = vadd.f32 %v3544, %v3602
        %v3621 = vadd.f32 %v3548, %v3598
        %v3622 = vadd.f32 %v3550, %v3602
        %v3623 = vadd.f32 %v3554, %v3598
        %v3624 = vadd.f32 %v3556, %v3602
        %v3625 = vadd.f32 %v3560, %v3598
        %v3626 = vadd.f32 %v3562, %v3602
        %v3627 = vadd.f32 %v3566, %v3598
        %v3628 = vadd.f32 %v3568, %v3602
        %v3629 = vadd.f32 %v3572, %v3598
        %v3630 = vadd.f32 %v3574, %v3602
        %v3631 = vadd.f32 %v3578, %v3598
        %v3632 = vadd.f32 %v3580, %v3602
        %v3633 = vadd.f32 %v3584, %v3598
        %v3634 = vadd.f32 %v3586, %v3602
        %v3635 = vadd.f32 %v3590, %v3598
        %v3636 = vadd.f32 %v3592, %v3602
        %v3637 = vmax.f32 %v3605, 0.0
        %v3638 = vmax.f32 %v3606, 0.0
        %v3639 = vmax.f32 %v3607, 0.0
        %v3640 = vmax.f32 %v3608, 0.0
        %v3641 = vmax.f32 %v3609, 0.0
        %v3642 = vmax.f32 %v3610, 0.0
        %v3643 = vmax.f32 %v3611, 0.0
        %v3644 = vmax.f32 %v3612, 0.0
        %v3645 = vmax.f32 %v3613, 0.0
        %v3646 = vmax.f32 %v3614, 0.0
        %v3647 = vmax.f32 %v3615, 0.0
        %v3648 = vmax.f32 %v3616, 0.0
        %v3649 = vmax.f32 %v3617, 0.0
        %v3650 = vmax.f32 %v3618, 0.0
        %v3651 = vmax.f32 %v3619, 0.0
        %v3652 = vmax.f32 %v3620, 0.0
        %v3653 = vmax.f32 %v3621, 0.0
        %v3654 = vmax.f32 %v3622, 0.0
        %v3655 = vmax.f32 %v3623, 0.0
        %v3656 = vmax.f32 %v3624, 0.0
        %v3657 = vmax.f32 %v3625, 0.0
        %v3658 = vmax.f32 %v3626, 0.0
        %v3659 = vmax.f32 %v3627, 0.0
        %v3660 = vmax.f32 %v3628, 0.0
        %v3661 = vmax.f32 %v3629, 0.0
        %v3662 = vmax.f32 %v3630, 0.0
        %v3663 = vmax.f32 %v3631, 0.0
        %v3664 = vmax.f32 %v3632, 0.0
        %v3665 = vmax.f32 %v3633, 0.0
        %v3666 = vmax.f32 %v3634, 0.0
        %v3667 = vmax.f32 %v3635, 0.0
        %v3668 = vmax.f32 %v3636, 0.0
        %v3669 = vadd.f32 %v2259, %v3637
        %v3670 = vadd.f32 %v2260, %v3638
        %v3671 = vadd.f32 %v2261, %v3639
        %v3672 = vadd.f32 %v2262, %v3640
        %v3673 = vadd.f32 %v2263, %v3641
        %v3674 = vadd.f32 %v2264, %v3642
        %v3675 = vadd.f32 %v2265, %v3643
        %v3676 = vadd.f32 %v2266, %v3644
        %v3677 = vadd.f32 %v2267, %v3645
        %v3678 = vadd.f32 %v2268, %v3646
        %v3679 = vadd.f32 %v2269, %v3647
        %v3680 = vadd.f32 %v2270, %v3648
        %v3681 = vadd.f32 %v2271, %v3649
        %v3682 = vadd.f32 %v2272, %v3650
        %v3683 = vadd.f32 %v2273, %v3651
        %v3684 = vadd.f32 %v2274, %v3652
        %v3685 = vadd.f32 %v2275, %v3653
        %v3686 = vadd.f32 %v2276, %v3654
        %v3687 = vadd.f32 %v2277, %v3655
        %v3688 = vadd.f32 %v2278, %v3656
        %v3689 = vadd.f32 %v2279, %v3657
        %v3690 = vadd.f32 %v2280, %v3658
        %v3691 = vadd.f32 %v2281, %v3659
        %v3692 = vadd.f32 %v2282, %v3660
        %v3693 = vadd.f32 %v2283, %v3661
        %v3694 = vadd.f32 %v2284, %v3662
        %v3695 = vadd.f32 %v2285, %v3663
        %v3696 = vadd.f32 %v2286, %v3664
        %v3697 = vadd.f32 %v2287, %v3665
        %v3698 = vadd.f32 %v2288, %v3666
        %v3699 = vadd.f32 %v2289, %v3667
        %v3700 = vadd.f32 %v2290, %v3668
        %v3701 = vmul.f32 %v3669, 0.5
        %v3702 = vmul.f32 %v3670, 0.5
        %v3703 = vmul.f32 %v3671, 0.5
        %v3704 = vmul.f32 %v3672, 0.5
        %v3705 = vmul.f32 %v3673, 0.5
        %v3706 = vmul.f32 %v3674, 0.5
        %v3707 = vmul.f32 %v3675, 0.5
        %v3708 = vmul.f32 %v3676, 0.5
        %v3709 = vmul.f32 %v3677, 0.5
        %v3710 = vmul.f32 %v3678, 0.5
        %v3711 = vmul.f32 %v3679, 0.5
        %v3712 = vmul.f32 %v3680, 0.5
        %v3713 = vmul.f32 %v3681, 0.5
        %v3714 = vmul.f32 %v3682, 0.5
        %v3715 = vmul.f32 %v3683, 0.5
        %v3716 = vmul.f32 %v3684, 0.5
        %v3717 = vmul.f32 %v3685, 0.5
        %v3718 = vmul.f32 %v3686, 0.5
        %v3719 = vmul.f32 %v3687, 0.5
        %v3720 = vmul.f32 %v3688, 0.5
        %v3721 = vmul.f32 %v3689, 0.5
        %v3722 = vmul.f32 %v3690, 0.5
        %v3723 = vmul.f32 %v3691, 0.5
        %v3724 = vmul.f32 %v3692, 0.5
        %v3725 = vmul.f32 %v3693, 0.5
        %v3726 = vmul.f32 %v3694, 0.5
        %v3727 = vmul.f32 %v3695, 0.5
        %v3728 = vmul.f32 %v3696, 0.5
        %v3729 = vmul.f32 %v3697, 0.5
        %v3730 = vmul.f32 %v3698, 0.5
        %v3731 = vmul.f32 %v3699, 0.5
        %v3732 = vmul.f32 %v3700, 0.5
        %3733 = vst [vmem:[%s404] sm:$0xff] %v3701
        %3734 = vst [vmem:[%s404 + $0x8] sm:$0xff] %v3702
        %3735 = vst [vmem:[%s404 + $0x10] sm:$0xff] %v3703
        %3736 = vst [vmem:[%s404 + $0x18] sm:$0xff] %v3704
        %3737 = vst [vmem:[%s404 + $0x20] sm:$0xff] %v3705
        %3738 = vst [vmem:[%s404 + $0x28] sm:$0xff] %v3706
        %3739 = vst [vmem:[%s404 + $0x30] sm:$0xff] %v3707
        %3740 = vst [vmem:[%s404 + $0x38] sm:$0xff] %v3708
        %3741 = vst [vmem:[%s404 + $0x40] sm:$0xff] %v3709
        %3742 = vst [vmem:[%s404 + $0x48] sm:$0xff] %v3710
        %3743 = vst [vmem:[%s404 + $0x50] sm:$0xff] %v3711
        %3744 = vst [vmem:[%s404 + $0x58] sm:$0xff] %v3712
        %3745 = vst [vmem:[%s404 + $0x60] sm:$0xff] %v3713
        %3746 = vst [vmem:[%s404 + $0x68] sm:$0xff] %v3714
        %3747 = vst [vmem:[%s404 + $0x70] sm:$0xff] %v3715
        %3748 = vst [vmem:[%s404 + $0x78] sm:$0xff] %v3716
        %3749 = vst [vmem:[%s404 + $0x80] sm:$0xff] %v3717
        %3750 = vst [vmem:[%s404 + $0x88] sm:$0xff] %v3718
        %3751 = vst [vmem:[%s404 + $0x90] sm:$0xff] %v3719
        %3752 = vst [vmem:[%s404 + $0x98] sm:$0xff] %v3720
        %3753 = vst [vmem:[%s404 + $0xa0] sm:$0xff] %v3721
        %3754 = vst [vmem:[%s404 + $0xa8] sm:$0xff] %v3722
        %3755 = vst [vmem:[%s404 + $0xb0] sm:$0xff] %v3723
        %3756 = vst [vmem:[%s404 + $0xb8] sm:$0xff] %v3724
        %3757 = vst [vmem:[%s404 + $0xc0] sm:$0xff] %v3725
        %3758 = vst [vmem:[%s404 + $0xc8] sm:$0xff] %v3726
        %3759 = vst [vmem:[%s404 + $0xd0] sm:$0xff] %v3727
        %3760 = vst [vmem:[%s404 + $0xd8] sm:$0xff] %v3728
        %3761 = vst [vmem:[%s404 + $0xe0] sm:$0xff] %v3729
        %3762 = vst [vmem:[%s404 + $0xe8] sm:$0xff] %v3730
        %3763 = vst [vmem:[%s404 + $0xf0] sm:$0xff] %v3731
        %3764 = vst [vmem:[%s404 + $0xf8] sm:$0xff] %v3732
        %v3765 = vld [vmem:[#allocation7] sm:$0xff]
        %v3766 = vld [vmem:[#allocation7 + $0x8] sm:$0xff]
        %v3767 = vld [vmem:[#allocation7 + $0x10] sm:$0xff]
        %v3768 = vld [vmem:[#allocation7 + $0x18] sm:$0xff]
        %v3769 = vld [vmem:[#allocation7 + $0x20] sm:$0xff]
        %v3770 = vld [vmem:[#allocation7 + $0x28] sm:$0xff]
        %v3771 = vld [vmem:[#allocation7 + $0x30] sm:$0xff]
        %v3772 = vld [vmem:[#allocation7 + $0x38] sm:$0xff]
        %v3773 = vld [vmem:[#allocation7 + $0x40] sm:$0xff]
        %v3774 = vld [vmem:[#allocation7 + $0x48] sm:$0xff]
        %v3775 = vld [vmem:[#allocation7 + $0x50] sm:$0xff]
        %v3776 = vld [vmem:[#allocation7 + $0x58] sm:$0xff]
        %v3777 = vld [vmem:[#allocation7 + $0x60] sm:$0xff]
        %v3778 = vld [vmem:[#allocation7 + $0x68] sm:$0xff]
        %v3779 = vld [vmem:[#allocation7 + $0x70] sm:$0xff]
        %v3780 = vld [vmem:[#allocation7 + $0x78] sm:$0xff]
        %v3781 = vld [vmem:[#allocation7 + $0x80] sm:$0xff]
        %v3782 = vld [vmem:[#allocation7 + $0x88] sm:$0xff]
        %v3783 = vld [vmem:[#allocation7 + $0x90] sm:$0xff]
        %v3784 = vld [vmem:[#allocation7 + $0x98] sm:$0xff]
        %v3785 = vld [vmem:[#allocation7 + $0xa0] sm:$0xff]
        %v3786 = vld [vmem:[#allocation7 + $0xa8] sm:$0xff]
        %v3787 = vld [vmem:[#allocation7 + $0xb0] sm:$0xff]
        %v3788 = vld [vmem:[#allocation7 + $0xb8] sm:$0xff]
        %v3789 = vld [vmem:[#allocation7 + $0xc0] sm:$0xff]
        %v3790 = vld [vmem:[#allocation7 + $0xc8] sm:$0xff]
        %v3791 = vld [vmem:[#allocation7 + $0xd0] sm:$0xff]
        %v3792 = vld [vmem:[#allocation7 + $0xd8] sm:$0xff]
        %v3793 = vld [vmem:[#allocation7 + $0xe0] sm:$0xff]
        %v3794 = vld [vmem:[#allocation7 + $0xe8] sm:$0xff]
        %v3795 = vld [vmem:[#allocation7 + $0xf0] sm:$0xff]
        %v3796 = vld [vmem:[#allocation7 + $0xf8] sm:$0xff]
        %v3797 = vld [vmem:[#allocation7 + $0x100] sm:$0xff]
        %v3798 = vld [vmem:[#allocation7 + $0x108] sm:$0xff]
        %v3799 = vld [vmem:[#allocation7 + $0x110] sm:$0xff]
        %v3800 = vld [vmem:[#allocation7 + $0x118] sm:$0xff]
        %v3801 = vld [vmem:[#allocation7 + $0x120] sm:$0xff]
        %v3802 = vld [vmem:[#allocation7 + $0x128] sm:$0xff]
        %v3803 = vld [vmem:[#allocation7 + $0x130] sm:$0xff]
        %v3804 = vld [vmem:[#allocation7 + $0x138] sm:$0xff]
        %v3805 = vld [vmem:[#allocation7 + $0x140] sm:$0xff]
        %v3806 = vld [vmem:[#allocation7 + $0x148] sm:$0xff]
        %v3807 = vld [vmem:[#allocation7 + $0x150] sm:$0xff]
        %v3808 = vld [vmem:[#allocation7 + $0x158] sm:$0xff]
        %v3809 = vld [vmem:[#allocation7 + $0x160] sm:$0xff]
        %v3810 = vld [vmem:[#allocation7 + $0x168] sm:$0xff]
        %v3811 = vld [vmem:[#allocation7 + $0x170] sm:$0xff]
        %v3812 = vld [vmem:[#allocation7 + $0x178] sm:$0xff]
        %v3813 = vld [vmem:[#allocation7 + $0x180] sm:$0xff]
        %v3814 = vld [vmem:[#allocation7 + $0x188] sm:$0xff]
        %v3815 = vld [vmem:[#allocation7 + $0x190] sm:$0xff]
        %v3816 = vld [vmem:[#allocation7 + $0x198] sm:$0xff]
        %v3817 = vld [vmem:[#allocation7 + $0x1a0] sm:$0xff]
        %v3818 = vld [vmem:[#allocation7 + $0x1a8] sm:$0xff]
        %v3819 = vld [vmem:[#allocation7 + $0x1b0] sm:$0xff]
        %v3820 = vld [vmem:[#allocation7 + $0x1b8] sm:$0xff]
        %v3821 = vld [vmem:[#allocation7 + $0x1c0] sm:$0xff]
        %v3822 = vld [vmem:[#allocation7 + $0x1c8] sm:$0xff]
        %v3823 = vld [vmem:[#allocation7 + $0x1d0] sm:$0xff]
        %v3824 = vld [vmem:[#allocation7 + $0x1d8] sm:$0xff]
        %v3825 = vld [vmem:[#allocation7 + $0x1e0] sm:$0xff]
        %v3826 = vld [vmem:[#allocation7 + $0x1e8] sm:$0xff]
        %v3827 = vld [vmem:[#allocation7 + $0x1f0] sm:$0xff]
        %v3828 = vld [vmem:[#allocation7 + $0x1f8] sm:$0xff]
        %v3829 = vld [vmem:[%s7] sm:$0x1]
        %3830 = vmatprep.subr.mxu0 %v3766
        %3831 = vmatpush1.msra.mxu0 %v3765
        %3832 = vmatprep.subr.mxu0 %v3768
        %3833 = vmatpush1.msra.mxu0 %v3767
        %3834 = vmatprep.subr.mxu0 %v3770
        %3835 = vmatpush1.msra.mxu0 %v3769
        %3836 = vmatprep.subr.mxu0 %v3772
        %3837 = vmatpush1.msra.mxu0 %v3771
        %3838 = vmatprep.subr.mxu0 %v3774
        %3839 = vmatpush1.msra.mxu0 %v3773
        %3840 = vmatprep.subr.mxu0 %v3776
        %3841 = vmatpush1.msra.mxu0 %v3775
        %3842 = vmatprep.subr.mxu0 %v3778
        %3843 = vmatpush1.msra.mxu0 %v3777
        %3844 = vmatprep.subr.mxu0 %v3780
        %3845 = vmatpush1.msra.mxu0 %v3779
        %3846 = vmatprep.subr.mxu0 %v3782
        %3847 = vmatpush1.msra.mxu0 %v3781
        %3848 = vmatprep.subr.mxu0 %v3784
        %3849 = vmatpush1.msra.mxu0 %v3783
        %3850 = vmatprep.subr.mxu0 %v3786
        %3851 = vmatpush1.msra.mxu0 %v3785
        %3852 = vmatprep.subr.mxu0 %v3788
        %3853 = vmatpush1.msra.mxu0 %v3787
        %3854 = vmatprep.subr.mxu0 %v3790
        %3855 = vmatpush1.msra.mxu0 %v3789
        %3856 = vmatprep.subr.mxu0 %v3792
        %3857 = vmatpush1.msra.mxu0 %v3791
        %3858 = vmatprep.subr.mxu0 %v3794
        %3859 = vmatpush1.msra.mxu0 %v3793
        %3860 = vmatprep.subr.mxu0 %v3796
        %3861 = vmatpush1.msra.mxu0 %v3795
        %3862 = vmatprep.subr.mxu0 %v3798
        %3863 = vmatpush1.msra.mxu0 %v3797
        %3864 = vmatprep.subr.mxu0 %v3800
        %3865 = vmatpush1.msra.mxu0 %v3799
        %3866 = vmatprep.subr.mxu0 %v3802
        %3867 = vmatpush1.msra.mxu0 %v3801
        %3868 = vmatprep.subr.mxu0 %v3804
        %3869 = vmatpush1.msra.mxu0 %v3803
        %3870 = vmatprep.subr.mxu0 %v3806
        %3871 = vmatpush1.msra.mxu0 %v3805
        %3872 = vmatprep.subr.mxu0 %v3808
        %3873 = vmatpush1.msra.mxu0 %v3807
        %3874 = vmatprep.subr.mxu0 %v3810
        %3875 = vmatpush1.msra.mxu0 %v3809
        %3876 = vmatprep.subr.mxu0 %v3812
        %3877 = vmatpush1.msra.mxu0 %v3811
        %3878 = vmatprep.subr.mxu0 %v3814
        %3879 = vmatpush1.msra.mxu0 %v3813
        %3880 = vmatprep.subr.mxu0 %v3816
        %3881 = vmatpush1.msra.mxu0 %v3815
        %3882 = vmatprep.subr.mxu0 %v3818
        %3883 = vmatpush1.msra.mxu0 %v3817
        %3884 = vmatprep.subr.mxu0 %v3820
        %3885 = vmatpush1.msra.mxu0 %v3819
        %3886 = vmatprep.subr.mxu0 %v3822
        %3887 = vmatpush1.msra.mxu0 %v3821
        %3888 = vmatprep.subr.mxu0 %v3824
        %3889 = vmatpush1.msra.mxu0 %v3823
        %3890 = vmatprep.subr.mxu0 %v3826
        %3891 = vmatpush1.msra.mxu0 %v3825
        %3892 = vmatprep.subr.mxu0 %v3828
        %3893 = vmatpush1.msra.mxu0 %v3827
        %3894 = vmatprep.mubr.f32.mxu0 %v3702
        %3895 = vmatmul.mubr.f32.gmra.mrb[0].mxu0 %v3701
        %v3896 = vpop.f32.mrb[0].mxu0
        %v3897 = vadd.f32 0.0, %v3896
        %v3898 = vpop.f32.mrb[0].mxu0
        %v3899 = vadd.f32 0.0, %v3898
        %3900 = vmatprep.mubr.f32.mxu0 %v3704
        %3901 = vmatmul.mubr.f32.gmra.mrb[0].mxu0 %v3703
        %v3902 = vpop.f32.mrb[0].mxu0
        %v3903 = vadd.f32 0.0, %v3902
        %v3904 = vpop.f32.mrb[0].mxu0
        %v3905 = vadd.f32 0.0, %v3904
        %3906 = vmatprep.mubr.f32.mxu0 %v3706
        %3907 = vmatmul.mubr.f32.gmra.mrb[0].mxu0 %v3705
        %v3908 = vpop.f32.mrb[0].mxu0
        %v3909 = vadd.f32 0.0, %v3908
        %v3910 = vpop.f32.mrb[0].mxu0
        %v3911 = vadd.f32 0.0, %v3910
        %3912 = vmatprep.mubr.f32.mxu0 %v3708
        %3913 = vmatmul.mubr.f32.gmra.mrb[0].mxu0 %v3707
        %v3914 = vpop.f32.mrb[0].mxu0
        %v3915 = vadd.f32 0.0, %v3914
        %v3916 = vpop.f32.mrb[0].mxu0
        %v3917 = vadd.f32 0.0, %v3916
        %3918 = vmatprep.mubr.f32.mxu0 %v3710
        %3919 = vmatmul.mubr.f32.gmra.mrb[0].mxu0 %v3709
        %v3920 = vpop.f32.mrb[0].mxu0
        %v3921 = vadd.f32 0.0, %v3920
        %v3922 = vpop.f32.mrb[0].mxu0
        %v3923 = vadd.f32 0.0, %v3922
        %3924 = vmatprep.mubr.f32.mxu0 %v3712
        %3925 = vmatmul.mubr.f32.gmra.mrb[0].mxu0 %v3711
        %v3926 = vpop.f32.mrb[0].mxu0
        %v3927 = vadd.f32 0.0, %v3926
        %v3928 = vpop.f32.mrb[0].mxu0
        %v3929 = vadd.f32 0.0, %v3928
        %3930 = vmatprep.mubr.f32.mxu0 %v3714
        %3931 = vmatmul.mubr.f32.gmra.mrb[0].mxu0 %v3713
        %v3932 = vpop.f32.mrb[0].mxu0
        %v3933 = vadd.f32 0.0, %v3932
        %v3934 = vpop.f32.mrb[0].mxu0
        %v3935 = vadd.f32 0.0, %v3934
        %3936 = vmatprep.mubr.f32.mxu0 %v3716
        %3937 = vmatmul.mubr.f32.gmra.mrb[0].mxu0 %v3715
        %v3938 = vpop.f32.mrb[0].mxu0
        %v3939 = vadd.f32 0.0, %v3938
        %v3940 = vpop.f32.mrb[0].mxu0
        %v3941 = vadd.f32 0.0, %v3940
        %3942 = vmatprep.mubr.f32.mxu0 %v3718
        %3943 = vmatmul.mubr.f32.gmra.mrb[0].mxu0 %v3717
        %v3944 = vpop.f32.mrb[0].mxu0
        %v3945 = vadd.f32 0.0, %v3944
        %v3946 = vpop.f32.mrb[0].mxu0
        %v3947 = vadd.f32 0.0, %v3946
        %3948 = vmatprep.mubr.f32.mxu0 %v3720
        %3949 = vmatmul.mubr.f32.gmra.mrb[0].mxu0 %v3719
        %v3950 = vpop.f32.mrb[0].mxu0
        %v3951 = vadd.f32 0.0, %v3950
        %v3952 = vpop.f32.mrb[0].mxu0
        %v3953 = vadd.f32 0.0, %v3952
        %3954 = vmatprep.mubr.f32.mxu0 %v3722
        %3955 = vmatmul.mubr.f32.gmra.mrb[0].mxu0 %v3721
        %v3956 = vpop.f32.mrb[0].mxu0
        %v3957 = vadd.f32 0.0, %v3956
        %v3958 = vpop.f32.mrb[0].mxu0
        %v3959 = vadd.f32 0.0, %v3958
        %3960 = vmatprep.mubr.f32.mxu0 %v3724
        %3961 = vmatmul.mubr.f32.gmra.mrb[0].mxu0 %v3723
        %v3962 = vpop.f32.mrb[0].mxu0
        %v3963 = vadd.f32 0.0, %v3962
        %v3964 = vpop.f32.mrb[0].mxu0
        %v3965 = vadd.f32 0.0, %v3964
        %3966 = vmatprep.mubr.f32.mxu0 %v3726
        %3967 = vmatmul.mubr.f32.gmra.mrb[0].mxu0 %v3725
        %v3968 = vpop.f32.mrb[0].mxu0
        %v3969 = vadd.f32 0.0, %v3968
        %v3970 = vpop.f32.mrb[0].mxu0
        %v3971 = vadd.f32 0.0, %v3970
        %3972 = vmatprep.mubr.f32.mxu0 %v3728
        %3973 = vmatmul.mubr.f32.gmra.mrb[0].mxu0 %v3727
        %v3974 = vpop.f32.mrb[0].mxu0
        %v3975 = vadd.f32 0.0, %v3974
        %v3976 = vpop.f32.mrb[0].mxu0
        %v3977 = vadd.f32 0.0, %v3976
        %3978 = vmatprep.mubr.f32.mxu0 %v3730
        %3979 = vmatmul.mubr.f32.gmra.mrb[0].mxu0 %v3729
        %v3980 = vpop.f32.mrb[0].mxu0
        %v3981 = vadd.f32 0.0, %v3980
        %v3982 = vpop.f32.mrb[0].mxu0
        %v3983 = vadd.f32 0.0, %v3982
        %3984 = vmatprep.mubr.f32.mxu0 %v3732
        %3985 = vmatmul.mubr.f32.gmra.mrb[0].mxu0 %v3731
        %v3986 = vpop.f32.mrb[0].mxu0
        %v3987 = vadd.f32 0.0, %v3986
        %v3988 = vpop.f32.mrb[0].mxu0
        %v3989 = vadd.f32 0.0, %v3988
        %3990 = vdwg.mxu0
        %3991 = vmatprep.subr.mxu0 0.0
        %3992 = vmatpush1.msra.mxu0 %v3897
        %3993 = vmatprep.subr.mxu0 0.0
        %3994 = vmatpush1.msra.mxu0 %v3903
        %3995 = vmatprep.subr.mxu0 0.0
        %3996 = vmatpush1.msra.mxu0 %v3909
        %3997 = vmatprep.subr.mxu0 0.0
        %3998 = vmatpush1.msra.mxu0 %v3915
        %3999 = vmatprep.subr.mxu0 0.0
        %4000 = vmatpush1.msra.mxu0 %v3921
        %4001 = vmatprep.subr.mxu0 0.0
        %4002 = vmatpush1.msra.mxu0 %v3927
        %4003 = vmatprep.subr.mxu0 0.0
        %4004 = vmatpush1.msra.mxu0 %v3933
        %4005 = vmatprep.subr.mxu0 0.0
        %4006 = vmatpush1.msra.mxu0 %v3939
        %4007 = vmatprep.subr.mxu0 0.0
        %4008 = vmatpush1.msra.mxu0 %v3945
        %4009 = vmatprep.subr.mxu0 0.0
        %4010 = vmatpush1.msra.mxu0 %v3951
        %4011 = vmatprep.subr.mxu0 0.0
        %4012 = vmatpush1.msra.mxu0 %v3957
        %4013 = vmatprep.subr.mxu0 0.0
        %4014 = vmatpush1.msra.mxu0 %v3963
        %4015 = vmatprep.subr.mxu0 0.0
        %4016 = vmatpush1.msra.mxu0 %v3969
        %4017 = vmatprep.subr.mxu0 0.0
        %4018 = vmatpush1.msra.mxu0 %v3975
        %4019 = vmatprep.subr.mxu0 0.0
        %4020 = vmatpush1.msra.mxu0 %v3981
        %4021 = vmatprep.subr.mxu0 0.0
        %4022 = vmatpush1.msra.mxu0 %v3987
        %4023 = vmatprep.subr.mxu0 0.0
        %4024 = vmatpush1.msra.mxu0 0.0
        %4025 = vmatprep.subr.mxu0 0.0
        %4026 = vmatpush1.msra.mxu0 0.0
        %4027 = vmatprep.subr.mxu0 0.0
        %4028 = vmatpush1.msra.mxu0 0.0
        %4029 = vmatprep.subr.mxu0 0.0
        %4030 = vmatpush1.msra.mxu0 0.0
        %4031 = vmatprep.subr.mxu0 0.0
        %4032 = vmatpush1.msra.mxu0 0.0
        %4033 = vmatprep.subr.mxu0 0.0
        %4034 = vmatpush1.msra.mxu0 0.0
        %4035 = vmatprep.subr.mxu0 0.0
        %4036 = vmatpush1.msra.mxu0 0.0
        %4037 = vmatprep.subr.mxu0 0.0
        %4038 = vmatpush1.msra.mxu0 0.0
        %4039 = vmatprep.subr.mxu0 0.0
        %4040 = vmatpush1.msra.mxu0 0.0
        %4041 = vmatprep.subr.mxu0 0.0
        %4042 = vmatpush1.msra.mxu0 0.0
        %4043 = vmatprep.subr.mxu0 0.0
        %4044 = vmatpush1.msra.mxu0 0.0
        %4045 = vmatprep.subr.mxu0 0.0
        %4046 = vmatpush1.msra.mxu0 0.0
        %4047 = vmatprep.subr.mxu0 0.0
        %4048 = vmatpush1.msra.mxu0 0.0
        %4049 = vmatprep.subr.mxu0 0.0
        %4050 = vmatpush1.msra.mxu0 0.0
        %4051 = vmatprep.subr.mxu0 0.0
        %4052 = vmatpush1.msra.mxu0 0.0
        %4053 = vmatprep.subr.mxu0 0.0
        %4054 = vmatpush1.msra.mxu0 0.0
        %4055 = vmatprep.mubr.f32.mxu0 0.0
        %4056 = vmatmul.mubr.f32.gmra.mrb[0].mxu0 %v405
        %v4057 = vpop.f32.mrb[0].mxu0
        %v4058 = vadd.f32 %v3899, %v4057
        %v4059 = vpop.f32.mrb[0].mxu0
        %4060 = vmatprep.mubr.f32.mxu0 0.0
        %4061 = vmatmul.mubr.f32.gmra.mrb[0].mxu0 %v406
        %v4062 = vpop.f32.mrb[0].mxu0
        %v4063 = vadd.f32 %v3905, %v4062
        %v4064 = vpop.f32.mrb[0].mxu0
        %4065 = vmatprep.mubr.f32.mxu0 0.0
        %4066 = vmatmul.mubr.f32.gmra.mrb[0].mxu0 %v407
        %v4067 = vpop.f32.mrb[0].mxu0
        %v4068 = vadd.f32 %v3911, %v4067
        %v4069 = vpop.f32.mrb[0].mxu0
        %4070 = vmatprep.mubr.f32.mxu0 0.0
        %4071 = vmatmul.mubr.f32.gmra.mrb[0].mxu0 %v408
        %v4072 = vpop.f32.mrb[0].mxu0
        %v4073 = vadd.f32 %v3917, %v4072
        %v4074 = vpop.f32.mrb[0].mxu0
        %4075 = vmatprep.mubr.f32.mxu0 0.0
        %4076 = vmatmul.mubr.f32.gmra.mrb[0].mxu0 %v409
        %v4077 = vpop.f32.mrb[0].mxu0
        %v4078 = vadd.f32 %v3923, %v4077
        %v4079 = vpop.f32.mrb[0].mxu0
        %4080 = vmatprep.mubr.f32.mxu0 0.0
        %4081 = vmatmul.mubr.f32.gmra.mrb[0].mxu0 %v410
        %v4082 = vpop.f32.mrb[0].mxu0
        %v4083 = vadd.f32 %v3929, %v4082
        %v4084 = vpop.f32.mrb[0].mxu0
        %4085 = vmatprep.mubr.f32.mxu0 0.0
        %4086 = vmatmul.mubr.f32.gmra.mrb[0].mxu0 %v411
        %v4087 = vpop.f32.mrb[0].mxu0
        %v4088 = vadd.f32 %v3935, %v4087
        %v4089 = vpop.f32.mrb[0].mxu0
        %4090 = vmatprep.mubr.f32.mxu0 0.0
        %4091 = vmatmul.mubr.f32.gmra.mrb[0].mxu0 %v412
        %v4092 = vpop.f32.mrb[0].mxu0
        %v4093 = vadd.f32 %v3941, %v4092
        %v4094 = vpop.f32.mrb[0].mxu0
        %4095 = vmatprep.mubr.f32.mxu0 0.0
        %4096 = vmatmul.mubr.f32.gmra.mrb[0].mxu0 %v413
        %v4097 = vpop.f32.mrb[0].mxu0
        %v4098 = vadd.f32 %v3947, %v4097
        %v4099 = vpop.f32.mrb[0].mxu0
        %4100 = vmatprep.mubr.f32.mxu0 0.0
        %4101 = vmatmul.mubr.f32.gmra.mrb[0].mxu0 %v414
        %v4102 = vpop.f32.mrb[0].mxu0
        %v4103 = vadd.f32 %v3953, %v4102
        %v4104 = vpop.f32.mrb[0].mxu0
        %4105 = vmatprep.mubr.f32.mxu0 0.0
        %4106 = vmatmul.mubr.f32.gmra.mrb[0].mxu0 %v415
        %v4107 = vpop.f32.mrb[0].mxu0
        %v4108 = vadd.f32 %v3959, %v4107
        %v4109 = vpop.f32.mrb[0].mxu0
        %4110 = vmatprep.mubr.f32.mxu0 0.0
        %4111 = vmatmul.mubr.f32.gmra.mrb[0].mxu0 %v416
        %v4112 = vpop.f32.mrb[0].mxu0
        %v4113 = vadd.f32 %v3965, %v4112
        %v4114 = vpop.f32.mrb[0].mxu0
        %4115 = vmatprep.mubr.f32.mxu0 0.0
        %4116 = vmatmul.mubr.f32.gmra.mrb[0].mxu0 %v417
        %v4117 = vpop.f32.mrb[0].mxu0
        %v4118 = vadd.f32 %v3971, %v4117
        %v4119 = vpop.f32.mrb[0].mxu0
        %4120 = vmatprep.mubr.f32.mxu0 0.0
        %4121 = vmatmul.mubr.f32.gmra.mrb[0].mxu0 %v418
        %v4122 = vpop.f32.mrb[0].mxu0
        %v4123 = vadd.f32 %v3977, %v4122
        %v4124 = vpop.f32.mrb[0].mxu0
        %4125 = vmatprep.mubr.f32.mxu0 0.0
        %4126 = vmatmul.mubr.f32.gmra.mrb[0].mxu0 %v419
        %v4127 = vpop.f32.mrb[0].mxu0
        %v4128 = vadd.f32 %v3983, %v4127
        %v4129 = vpop.f32.mrb[0].mxu0
        %4130 = vmatprep.mubr.f32.mxu0 0.0
        %4131 = vmatmul.mubr.f32.gmra.mrb[0].mxu0 %v420
        %v4132 = vpop.f32.mrb[0].mxu0
        %v4133 = vadd.f32 %v3989, %v4132
        %v4134 = vpop.f32.mrb[0].mxu0
        %4135 = vdwg.mxu0
        %v4137 = vlaneseq
        %v4138 = vshrl.u32 %v4137, 7
        %v4139 = vsub.s32 0, %v4138
        %v4140 = vrot.slane %v3829, %v4139
        %v4142 = vadd.f32 %v4058, %v4140
        %v4143 = vadd.f32 %v4063, %v4140
        %v4144 = vadd.f32 %v4068, %v4140
        %v4145 = vadd.f32 %v4073, %v4140
        %v4146 = vadd.f32 %v4078, %v4140
        %v4147 = vadd.f32 %v4083, %v4140
        %v4148 = vadd.f32 %v4088, %v4140
        %v4149 = vadd.f32 %v4093, %v4140
        %v4150 = vadd.f32 %v4098, %v4140
        %v4151 = vadd.f32 %v4103, %v4140
        %v4152 = vadd.f32 %v4108, %v4140
        %v4153 = vadd.f32 %v4113, %v4140
        %v4154 = vadd.f32 %v4118, %v4140
        %v4155 = vadd.f32 %v4123, %v4140
        %v4156 = vadd.f32 %v4128, %v4140
        %v4157 = vadd.f32 %v4133, %v4140
        %4158 = vst [vmem:[%s399] sm:$0xff] %v4142
        %4159 = vst [vmem:[%s399 + $0x8] sm:$0xff] %v4143
        %4160 = vst [vmem:[%s399 + $0x10] sm:$0xff] %v4144
        %4161 = vst [vmem:[%s399 + $0x18] sm:$0xff] %v4145
        %4162 = vst [vmem:[%s399 + $0x20] sm:$0xff] %v4146
        %4163 = vst [vmem:[%s399 + $0x28] sm:$0xff] %v4147
        %4164 = vst [vmem:[%s399 + $0x30] sm:$0xff] %v4148
        %4165 = vst [vmem:[%s399 + $0x38] sm:$0xff] %v4149
        %4166 = vst [vmem:[%s399 + $0x40] sm:$0xff] %v4150
        %4167 = vst [vmem:[%s399 + $0x48] sm:$0xff] %v4151
        %4168 = vst [vmem:[%s399 + $0x50] sm:$0xff] %v4152
        %4169 = vst [vmem:[%s399 + $0x58] sm:$0xff] %v4153
        %4170 = vst [vmem:[%s399 + $0x60] sm:$0xff] %v4154
        %4171 = vst [vmem:[%s399 + $0x68] sm:$0xff] %v4155
        %4172 = vst [vmem:[%s399 + $0x70] sm:$0xff] %v4156
        %4173 = vst [vmem:[%s399 + $0x78] sm:$0xff] %v4157
        %p4174 = scmp.lt.s32.totalorder %s24, 1
        %s4175 = scalar_select %p4174, %s24, 1
        %s4176 = smul.addr %s4175, 16
        %s4177 = smul.addr %s4176, 8
        %s4178 = scalar_lea.vmem %s8, %s4177
        %p4179 = scmp.lt.s32.totalorder %s24, 1
        %s4180 = scalar_select %p4179, %s24, 1
        %s4181 = smul.addr %s4180, 32
        %s4182 = smul.addr %s4181, 8
        %s4183 = scalar_lea.vmem %s9, %s4182
        // Predicated region
        $region69: #{forward.1} parent=51 // pred_check
          %p4184 = pneg %p215
        $region70: #{forward.1} parent=51 // pred_check_branch
          %4186 = sbr.rel (%p4184) target = $region72
        $region71: #{forward.1} parent=51 // pred_region
          _
        $region72: #{forward.1} parent=51 // pred_fallthru
          _
        // Predicated region
        $region73: #{forward.1} parent=51 // pred_check
          %p4187 = pneg %p241
        $region74: #{forward.1} parent=51 // pred_check_branch
          %4189 = sbr.rel (%p4187) target = $region76
        $region75: #{forward.1} parent=51 // pred_region
          _
        $region76: #{forward.1} parent=51 // pred_fallthru
          _
      $region52: #{forward.1} parent=5 // pred_fallthru
        _
      %p4190 = scmp.le.s32.totalorder 2, %s19
      // Predicated region
      $region77: #{forward.1} parent=5 // pred_check
        %p4191 = pneg %p4190
      $region78: #{forward.1} parent=5 // pred_check_branch
        %4193 = sbr.rel (%p4191) target = $region80
      $region79: #{forward.1} parent=5 // pred_region
        %s4194 = ssub.s32 %s19, 2
        // Predicated region
        $region81: #{forward.1} parent=79 // pred_check
          %p4195 = pneg %p221
        $region82: #{forward.1} parent=79 // pred_check_branch
          %4197 = sbr.rel (%p4195) target = $region84
        $region83: #{forward.1} parent=79 // pred_region
          %p4198 = scmp.lt.s32.totalorder %s25, 1
          %s4199 = scalar_select %p4198, %s25, 1
          %s4200 = smul.addr %s4199, 16
          %s4201 = smul.addr %s4200, 8
          %s4202 = scalar_lea.vmem %s8, %s4201
        $region84: #{forward.1} parent=79 // pred_fallthru
          _
        // Predicated region
        $region85: #{forward.1} parent=79 // pred_check
          %p4203 = pneg %p247
        $region86: #{forward.1} parent=79 // pred_check_branch
          %4205 = sbr.rel (%p4203) target = $region88
        $region87: #{forward.1} parent=79 // pred_region
          %p4206 = scmp.lt.s32.totalorder %s25, 1
          %s4207 = scalar_select %p4206, %s25, 1
          %s4208 = smul.addr %s4207, 32
          %s4209 = smul.addr %s4208, 8
          %s4210 = scalar_lea.vmem %s9, %s4209
        $region88: #{forward.1} parent=79 // pred_fallthru
          _
      $region80: #{forward.1} parent=5 // pred_fallthru
        _
    $region6: #{forward.1} parent=1 // loop_footer
      %s23 = sadd.s32 1, %s19
    $region7: #{forward.1} parent=1 // loop_footer_branch
      %18 = sbr.rel target = $region3
    $region8: #{forward.1} parent=1 // loop_exit
      _
    %4211 = vsyncpa [#allocation3], 1
    %s4212 = scalar_lea.sflag [#allocation3], 1
    %4213 = vsyncpa %s4212, 1
    %4214 = vsyncpa [#allocation5], 1
    %4215 = vsyncpa [#allocation8], 1

</llo_original>
